<compile_context>
chip_gen: v7x
topology: tpu7x:2x2x1
jax: 0.10.0
libtpu: 0.0.40
codegen_flags: <defaults>
</compile_context>

<pallas_src>
from functools import partial

import jax
import jax.numpy as jnp
from jax.experimental import pallas as pl
from jax.experimental.pallas import tpu as pltpu

CP = 128      # lane-dense width for HBM-stored outputs (multiple of 128)
B_PAD = 8     # batch rows padded to a full f32 sublane group


def _round_up(x, m):
    return (x + m - 1) // m * m


_VMEM_LIMIT = None


def _vmem_limit_bytes():
    """Per-generation scoped-VMEM request, leaving headroom for the compiler's
    double buffers: <=48 MiB on v7x (64 MiB VMEM), up to 96 MiB on v5e/v6e."""
    global _VMEM_LIMIT
    if _VMEM_LIMIT is None:
        try:
            cap = int(getattr(pltpu.get_tpu_info(), "vmem_capacity_bytes",
                              64 * 1024 * 1024))
        except Exception:
            cap = 64 * 1024 * 1024
        _VMEM_LIMIT = int(min(cap * 3 // 4, 96 * 1024 * 1024))
    return _VMEM_LIMIT


# ----------------------------------------------------------------------------
# Pallas kernels
# ----------------------------------------------------------------------------
def _conv_pool_kernel(x_ref, w_ref, b_ref, o_ref):
    """Fused 3x3-conv (one merged matmul) + 2x2 max-pool + bias + ReLU.

    x_ref: (4*M, K) bf16 im2col patches; the 4 pooling-quadrant groups are
           contiguous M-row blocks (rows within a group ordered (b, i2, j2)).
    w_ref: (K, Cout) bf16, b_ref: (1, Cout) f32, o_ref: (M, Cout) bf16.
    relu(max_g(x_g @ W) + b) == maxpool(relu(conv + b)): bias shared, relu
    monotone.
    """
    y = jnp.dot(x_ref[...], w_ref[...], preferred_element_type=jnp.float32)
    m = y.shape[0] // 4
    y = jnp.maximum(jnp.maximum(y[0 * m:1 * m], y[1 * m:2 * m]),
                    jnp.maximum(y[2 * m:3 * m], y[3 * m:4 * m]))
    y = jnp.maximum(y + b_ref[...], 0.0)
    o_ref[...] = y.astype(o_ref.dtype)


def _conv_pool_tail_kernel(x_ref, w2_ref, b2_ref, w1_ref, b1_ref,
                           w3_ref, b3_ref, wf_ref, bf_ref, o_ref,
                           *, no_imgnorm, use_abs):
    """Fused stage-2 conv+pool and the whole EncoderImageFull head:
    conv3x3+bias+ReLU+maxpool2x2 -> fc1+ReLU -> fc2+ReLU -> l2norm -> fc
    -> l2norm -> (abs).  MXU operands bf16, epilogue math fp32.

    x_ref : (4*S*Bp, K2) bf16 im2col patches; quadrant-major row blocks, rows
            within a block ordered (spatial s, batch b) so fc1 can consume
            aligned Bp-row blocks per spatial position (no in-kernel flatten).
    w1_ref: (S, C2, HID) bf16 -- cls1 weight packed per spatial position with
            the torch NCHW-flatten ordering folded in.
    """
    eps = 1e-12
    S, C2, HID = w1_ref.shape

    # stage-2 conv: ONE merged matmul over the 4 pooling quadrants
    y = jnp.dot(x_ref[...], w2_ref[...], preferred_element_type=jnp.float32)
    m = y.shape[0] // 4                                   # = S * Bp
    y = jnp.maximum(jnp.maximum(y[0 * m:1 * m], y[1 * m:2 * m]),
                    jnp.maximum(y[2 * m:3 * m], y[3 * m:4 * m]))
    y = jnp.maximum(y + b2_ref[...], 0.0)                 # (S*Bp, C2), rows (s, b)
    bp = m // S

    # fc1: contract over spatial (aligned Bp-row blocks) and channels (lanes).
    h = jnp.zeros((bp, HID), jnp.float32)
    for s in range(S):
        h = h + jnp.dot(y[s * bp:(s + 1) * bp, :].astype(jnp.bfloat16),
                        w1_ref[s], preferred_element_type=jnp.float32)
    h = jnp.maximum(h + b1_ref[...], 0.0)
    # fc2 + ReLU
    h = jnp.dot(h.astype(jnp.bfloat16), w3_ref[...],
                preferred_element_type=jnp.float32)
    h = jnp.maximum(h + b3_ref[...], 0.0)
    # l2norm (rsqrt -> EUP; eps guards the all-zero padded batch rows)
    h = h * jax.lax.rsqrt(jnp.sum(h * h, axis=1, keepdims=True) + eps)
    # final fc: N padded to 128 lanes only for the lane-dense output store
    z = jnp.dot(h.astype(jnp.bfloat16), wf_ref[...],
                preferred_element_type=jnp.float32) + bf_ref[...]
    if not no_imgnorm:
        z = z * jax.lax.rsqrt(jnp.sum(z * z, axis=1, keepdims=True) + eps)
    if use_abs:
        z = jnp.abs(z)
    o_ref[...] = z


# ----------------------------------------------------------------------------
# pallas_call wrappers (single block, no grid: at these sizes an M split only
# adds per-step overhead on 1-TC chips and underfills the MXU)
# ----------------------------------------------------------------------------
def conv_pool(lhs, w_mat, b_row):
    m4, k = lhs.shape
    cout = w_mat.shape[1]
    m = m4 // 4
    return pl.pallas_call(
        _conv_pool_kernel,
        out_shape=jax.ShapeDtypeStruct((m, cout), jnp.bfloat16),
        in_specs=[pl.BlockSpec((m4, k), lambda: (0, 0)),
                  pl.BlockSpec((k, cout), lambda: (0, 0)),
                  pl.BlockSpec((1, cout), lambda: (0, 0))],
        out_specs=pl.BlockSpec((m, cout), lambda: (0, 0)),
        compiler_params=pltpu.CompilerParams(
            vmem_limit_bytes=_vmem_limit_bytes()),
    )(lhs, w_mat, b_row)


def conv_pool_tail(lhs2, p, *, no_imgnorm, use_abs):
    m4, k2 = lhs2.shape
    s, c2, hid = p["cls1_w"].shape
    bp = m4 // 4 // s
    e = p["fc_w"].shape[1]
    return pl.pallas_call(
        partial(_conv_pool_tail_kernel, no_imgnorm=no_imgnorm, use_abs=use_abs),
        out_shape=jax.ShapeDtypeStruct((bp, e), jnp.float32),
        in_specs=[pl.BlockSpec((m4, k2), lambda: (0, 0)),
                  pl.BlockSpec((k2, c2), lambda: (0, 0)),
                  pl.BlockSpec((1, c2), lambda: (0, 0)),
                  pl.BlockSpec((s, c2, hid), lambda: (0, 0, 0)),
                  pl.BlockSpec((1, hid), lambda: (0, 0)),
                  pl.BlockSpec((hid, hid), lambda: (0, 0)),
                  pl.BlockSpec((1, hid), lambda: (0, 0)),
                  pl.BlockSpec((hid, e), lambda: (0, 0)),
                  pl.BlockSpec((1, e), lambda: (0, 0))],
        out_specs=pl.BlockSpec((bp, e), lambda: (0, 0)),
        compiler_params=pltpu.CompilerParams(
            vmem_limit_bytes=_vmem_limit_bytes()),
    )(lhs2, p["conv2_w"], p["conv2_b"], p["cls1_w"], p["cls1_b"],
      p["cls2_w"], p["cls2_b"], p["fc_w"], p["fc_b"])


# ----------------------------------------------------------------------------
# XLA-side glue (tiny arrays): quadrant-grouped im2col for one conv+pool stage
# ----------------------------------------------------------------------------
def _im2col_pool(x_nhwc, k_pad, row_order):
    """Returns (4*B*(H//2)*(W//2), k_pad) bf16; the 4 pooling-quadrant groups
    are contiguous row blocks; rows within a group ordered (b, i2, j2) for
    row_order='bij' or (i2, j2, b) for row_order='ijb'.  K carries only the
    real 9*C taps (plus a small packing round-up), never zero-padded channels.
    """
    B, H, W, C = x_nhwc.shape
    xp = jnp.pad(x_nhwc.astype(jnp.bfloat16), ((0, 0), (1, 1), (1, 1), (0, 0)))
    cols = [xp[:, di:di + H, dj:dj + W, :] for di in range(3) for dj in range(3)]
    patches = jnp.concatenate(cols, axis=-1)                  # (B,H,W,9C)
    k = 9 * C
    if k_pad > k:
        patches = jnp.pad(patches, ((0, 0), (0, 0), (0, 0), (0, k_pad - k)))
    p = patches.reshape(B, H // 2, 2, W // 2, 2, k_pad)       # (b,i2,pi,j2,pj,k)
    perm = (2, 4, 0, 1, 3, 5) if row_order == "bij" else (2, 4, 1, 3, 0, 5)
    return jnp.transpose(p, perm).reshape(4 * B * (H // 2) * (W // 2), k_pad)


# ----------------------------------------------------------------------------
# Parameters (deterministic, synthetic) -- pre-packed for the kernels
# ----------------------------------------------------------------------------
def _conv_w_to_mat(w_oihw, k_pad, cout_pad):
    """(Cout,Cin,3,3) -> (k_pad, cout_pad) bf16 matmul weight in the im2col
    (tap-major, channel-minor) K ordering."""
    cout, cin, kh, kw = w_oihw.shape
    m = jnp.transpose(w_oihw, (2, 3, 1, 0)).reshape(kh * kw * cin, cout)
    m = jnp.pad(m, ((0, k_pad - kh * kw * cin), (0, cout_pad - cout)))
    return m.astype(jnp.bfloat16)


def init_params(key, in_ch=4, spatial=16, embed_size=32):
    ks = jax.random.split(key, 5)
    c1, c2, hid = 8, 16, 64                  # mini VGG-style stand-ins
    s4 = spatial // 4                        # spatial size after two pools

    conv1_w = 0.1 * jax.random.normal(ks[0], (c1, in_ch, 3, 3), jnp.float32)
    conv2_w = 0.1 * jax.random.normal(ks[1], (c2, c1, 3, 3), jnp.float32)
    cls1_w = 0.1 * jax.random.normal(ks[2], (c2 * s4 * s4, hid), jnp.float32)
    cls2_w = 0.1 * jax.random.normal(ks[3], (hid, hid), jnp.float32)
    # EncoderImageFull.init_weights(): Xavier-uniform fc, zero bias
    r = (6.0 / (hid + embed_size)) ** 0.5
    fc_w = jax.random.uniform(ks[4], (hid, embed_size), jnp.float32, -r, r)

    p = {}
    # conv1: K = 9*in_ch (real); N padded to 128 only because this output is
    # stored to HBM (lane-dense store).
    p["conv1_w"] = _conv_w_to_mat(conv1_w, _round_up(9 * in_ch, 16), CP)
    p["conv1_b"] = jnp.zeros((1, CP), jnp.float32)
    # conv2: K = 9*c1 (real, NOT 9*128); N stays at the real c2 because the
    # activation never leaves VMEM.
    p["conv2_w"] = _conv_w_to_mat(conv2_w, _round_up(9 * c1, 16), c2)
    p["conv2_b"] = jnp.zeros((1, c2), jnp.float32)
    # cls1 packed as (S, C2, hid): the torch NCHW-flatten ordering is folded
    # into the packing so fc1 contracts per spatial position in-kernel.
    w1 = cls1_w.reshape(c2, s4, s4, hid)                 # rows were (c, i, j)
    w1 = jnp.transpose(w1, (1, 2, 0, 3)).reshape(s4 * s4, c2, hid)
    p["cls1_w"] = w1.astype(jnp.bfloat16)
    p["cls1_b"] = jnp.zeros((1, hid), jnp.float32)
    p["cls2_w"] = cls2_w.astype(jnp.bfloat16)
    p["cls2_b"] = jnp.zeros((1, hid), jnp.float32)
    # final fc: N padded to 128 for the lane-dense output store only.
    p["fc_w"] = jnp.pad(fc_w, ((0, 0), (0, CP - embed_size))).astype(jnp.bfloat16)
    p["fc_b"] = jnp.zeros((1, CP), jnp.float32)
    return p


# ----------------------------------------------------------------------------
# Forward pass == EncoderImageFull.forward
# ----------------------------------------------------------------------------
def encoder_image_full_forward(params, images_nchw, *, embed_size, c1=8,
                               use_abs=False, no_imgnorm=False):
    B, _, H, W = images_nchw.shape
    bp = _round_up(B, B_PAD)
    x = jnp.transpose(images_nchw, (0, 2, 3, 1))              # NCHW -> NHWC
    x = jnp.pad(x, ((0, bp - B), (0, 0), (0, 0), (0, 0)))     # full sublanes
    # NOTE: activations are cast to bf16 MXU operands (incl. the input image).

    # stage 1: conv3x3 + ReLU + maxpool2x2  (fused, lane-dense bf16 store)
    lhs1 = _im2col_pool(x, params["conv1_w"].shape[0], row_order="bij")
    y1 = conv_pool(lhs1, params["conv1_w"], params["conv1_b"])
    # feed only the REAL c1 channels into stage 2's reduction dim
    y1 = y1.reshape(bp, H // 2, W // 2, CP)[..., :c1]

    # stage 2 conv+pool fused with classifier + l2norm + fc + l2norm (+abs)
    lhs2 = _im2col_pool(y1, params["conv2_w"].shape[0], row_order="ijb")
    out = conv_pool_tail(lhs2, params, no_imgnorm=no_imgnorm, use_abs=use_abs)
    return out[:B, :embed_size]


# ----------------------------------------------------------------------------
# Pure-JAX fp32 reference (same synthetic weights) for correctness checking
# ----------------------------------------------------------------------------
def _reference_forward(params, images_nchw, *, embed_size, c1=8,
                       use_abs=False, no_imgnorm=False):
    x = jnp.transpose(images_nchw, (0, 2, 3, 1)).astype(jnp.float32)

    def stage(a, w_mat, b_row, cin, cout):
        B, H, W, _ = a.shape
        ap = jnp.pad(a, ((0, 0), (1, 1), (1, 1), (0, 0)))
        cols = [ap[:, di:di + H, dj:dj + W, :]
                for di in range(3) for dj in range(3)]
        patches = jnp.concatenate(cols, axis=-1).reshape(-1, 9 * cin)
        w = w_mat[:9 * cin, :cout].astype(jnp.float32)
        y = jnp.maximum(patches @ w + b_row[:, :cout], 0.0)
        y = y.reshape(B, H, W, cout)
        return y.reshape(B, H // 2, 2, W // 2, 2, cout).max(axis=(2, 4))

    in_ch = x.shape[-1]
    y = stage(x, params["conv1_w"], params["conv1_b"], in_ch, c1)
    _, c2, hid = params["cls1_w"].shape
    y = stage(y, params["conv2_w"], params["conv2_b"], c1, c2)
    s4 = y.shape[1]
    feat = jnp.transpose(y, (0, 3, 1, 2)).reshape(y.shape[0], -1)  # NCHW flatten
    w1 = params["cls1_w"].astype(jnp.float32).reshape(s4, s4, c2, hid)
    w1 = jnp.transpose(w1, (2, 0, 1, 3)).reshape(c2 * s4 * s4, hid)
    h = jnp.maximum(feat @ w1 + params["cls1_b"], 0.0)
    h = jnp.maximum(h @ params["cls2_w"].astype(jnp.float32) + params["cls2_b"], 0.0)
    h = h / jnp.sqrt(jnp.sum(h * h, axis=1, keepdims=True))
    z = (h @ params["fc_w"].astype(jnp.float32)[:, :embed_size]
         + params["fc_b"][:, :embed_size])
    if not no_imgnorm:
        z = z / jnp.sqrt(jnp.sum(z * z, axis=1, keepdims=True))
    if use_abs:
        z = jnp.abs(z)
    return z


# ----------------------------------------------------------------------------
if __name__ == "__main__":
    key = jax.random.PRNGKey(0)
    pkey, xkey = jax.random.split(key)

    B, C, HW, EMBED = 2, 4, 16, 32
    params = init_params(pkey, in_ch=C, spatial=HW, embed_size=EMBED)
    images = jax.random.normal(xkey, (B, C, HW, HW), jnp.float32)   # NCHW

    fwd = jax.jit(partial(encoder_image_full_forward, embed_size=EMBED,
                          use_abs=False, no_imgnorm=False))
    out = fwd(params, images)
    jax.block_until_ready(out)

    assert out.shape == (B, EMBED)
    assert bool(jnp.all(jnp.isfinite(out)))
    # each row ~unit L2 norm (final l2norm applied)
    norms = jnp.sqrt(jnp.sum(out * out, axis=1))
    assert bool(jnp.all(jnp.abs(norms - 1.0) < 1e-3))
    # matches the pure-JAX fp32 reference within bf16-operand tolerance
    ref = _reference_forward(params, images, embed_size=EMBED,
                             use_abs=False, no_imgnorm=False)
    assert bool(jnp.max(jnp.abs(out - ref)) < 5e-2)
    print("KERNEL_OK")
</pallas_src>

<mosaic_0001>
module attributes {stable_mosaic.version = 11 : i64} {
  func.func @_conv_pool_kernel(%arg0: memref<2048x48xbf16, #tpu.memory_space<vmem>>, %arg1: memref<48x128xbf16, #tpu.memory_space<vmem>>, %arg2: memref<1x128xf32, #tpu.memory_space<vmem>>, %arg3: memref<512x128xbf16, #tpu.memory_space<vmem>>) attributes {dimension_semantics = [], scalar_prefetch = 0 : i64, scratch_operands = 0 : i64, tpu.core_type = #tpu.core_type<tc>} {
    %c0 = arith.constant 0 : index
    %c0_0 = arith.constant 0 : index
    %0 = vector.load %arg0[%c0, %c0_0] : memref<2048x48xbf16, #tpu.memory_space<vmem>>, vector<2048x48xbf16>
    %c0_1 = arith.constant 0 : index
    %c0_2 = arith.constant 0 : index
    %1 = vector.load %arg1[%c0_1, %c0_2] : memref<48x128xbf16, #tpu.memory_space<vmem>>, vector<48x128xbf16>
    %cst = arith.constant dense<0.000000e+00> : vector<2048x128xf32>
    %2 = tpu.matmul %0, %1, %cst {dimension_numbers = #tpu.dot_dimension_numbers<[1], [0], [0], [1], [0, 0, 1, 1], [], []>} : vector<2048x48xbf16>, vector<48x128xbf16>, vector<2048x128xf32> -> vector<2048x128xf32>
    %3 = vector.extract_strided_slice %2 {offsets = [0, 0], sizes = [512, 128], strides = [1, 1]} : vector<2048x128xf32> to vector<512x128xf32>
    %4 = vector.extract_strided_slice %2 {offsets = [512, 0], sizes = [512, 128], strides = [1, 1]} : vector<2048x128xf32> to vector<512x128xf32>
    %5 = arith.maximumf %3, %4 : vector<512x128xf32>
    %6 = vector.extract_strided_slice %2 {offsets = [1024, 0], sizes = [512, 128], strides = [1, 1]} : vector<2048x128xf32> to vector<512x128xf32>
    %7 = vector.extract_strided_slice %2 {offsets = [1536, 0], sizes = [512, 128], strides = [1, 1]} : vector<2048x128xf32> to vector<512x128xf32>
    %8 = arith.maximumf %6, %7 : vector<512x128xf32>
    %9 = arith.maximumf %5, %8 : vector<512x128xf32>
    %c0_3 = arith.constant 0 : index
    %c0_4 = arith.constant 0 : index
    %10 = vector.load %arg2[%c0_3, %c0_4] : memref<1x128xf32, #tpu.memory_space<vmem>>, vector<1x128xf32>
    %11 = vector.broadcast %10 : vector<1x128xf32> to vector<512x128xf32>
    %12 = arith.addf %9, %11 : vector<512x128xf32>
    %cst_5 = arith.constant 0.000000e+00 : f32
    %13 = vector.broadcast %cst_5 : f32 to vector<512x128xf32>
    %14 = arith.maximumf %12, %13 : vector<512x128xf32>
    %15 = arith.truncf %14 : vector<512x128xf32> to vector<512x128xbf16>
    %c0_6 = arith.constant 0 : index
    %c0_7 = arith.constant 0 : index
    %16 = vector.load %arg3[%c0_6, %c0_7] : memref<512x128xbf16, #tpu.memory_space<vmem>>, vector<512x128xbf16>
    tpu.vector_store %arg3[%c0_6, %c0_7], %15 {strides = array<i32>} : memref<512x128xbf16, #tpu.memory_space<vmem>>, vector<512x128xbf16>,
    return
  }
}

module attributes {stable_mosaic.version = 11 : i64} {
  func.func @_conv_pool_tail_kernel(%arg0: memref<512x80xbf16, #tpu.memory_space<vmem>>, %arg1: memref<80x16xbf16, #tpu.memory_space<vmem>>, %arg2: memref<1x16xf32, #tpu.memory_space<vmem>>, %arg3: memref<16x16x64xbf16, #tpu.memory_space<vmem>>, %arg4: memref<1x64xf32, #tpu.memory_space<vmem>>, %arg5: memref<64x64xbf16, #tpu.memory_space<vmem>>, %arg6: memref<1x64xf32, #tpu.memory_space<vmem>>, %arg7: memref<64x128xbf16, #tpu.memory_space<vmem>>, %arg8: memref<1x128xf32, #tpu.memory_space<vmem>>, %arg9: memref<8x128xf32, #tpu.memory_space<vmem>>) attributes {dimension_semantics = [], scalar_prefetch = 0 : i64, scratch_operands = 0 : i64, tpu.core_type = #tpu.core_type<tc>} {
    %c0 = arith.constant 0 : index
    %c0_0 = arith.constant 0 : index
    %0 = vector.load %arg0[%c0, %c0_0] : memref<512x80xbf16, #tpu.memory_space<vmem>>, vector<512x80xbf16>
    %c0_1 = arith.constant 0 : index
    %c0_2 = arith.constant 0 : index
    %1 = vector.load %arg1[%c0_1, %c0_2] : memref<80x16xbf16, #tpu.memory_space<vmem>>, vector<80x16xbf16>
    %cst = arith.constant dense<0.000000e+00> : vector<512x16xf32>
    %2 = tpu.matmul %0, %1, %cst {dimension_numbers = #tpu.dot_dimension_numbers<[1], [0], [0], [1], [0, 0, 1, 1], [], []>} : vector<512x80xbf16>, vector<80x16xbf16>, vector<512x16xf32> -> vector<512x16xf32>
    %3 = vector.extract_strided_slice %2 {offsets = [0, 0], sizes = [128, 16], strides = [1, 1]} : vector<512x16xf32> to vector<128x16xf32>
    %4 = vector.extract_strided_slice %2 {offsets = [128, 0], sizes = [128, 16], strides = [1, 1]} : vector<512x16xf32> to vector<128x16xf32>
    %5 = arith.maximumf %3, %4 : vector<128x16xf32>
    %6 = vector.extract_strided_slice %2 {offsets = [256, 0], sizes = [128, 16], strides = [1, 1]} : vector<512x16xf32> to vector<128x16xf32>
    %7 = vector.extract_strided_slice %2 {offsets = [384, 0], sizes = [128, 16], strides = [1, 1]} : vector<512x16xf32> to vector<128x16xf32>
    %8 = arith.maximumf %6, %7 : vector<128x16xf32>
    %9 = arith.maximumf %5, %8 : vector<128x16xf32>
    %c0_3 = arith.constant 0 : index
    %c0_4 = arith.constant 0 : index
    %10 = vector.load %arg2[%c0_3, %c0_4] : memref<1x16xf32, #tpu.memory_space<vmem>>, vector<1x16xf32>
    %11 = vector.broadcast %10 : vector<1x16xf32> to vector<128x16xf32>
    %12 = arith.addf %9, %11 : vector<128x16xf32>
    %cst_5 = arith.constant 0.000000e+00 : f32
    %13 = vector.broadcast %cst_5 : f32 to vector<128x16xf32>
    %14 = arith.maximumf %12, %13 : vector<128x16xf32>
    %cst_6 = arith.constant 0.000000e+00 : f32
    %15 = vector.broadcast %cst_6 : f32 to vector<8x64xf32>
    %16 = vector.extract_strided_slice %14 {offsets = [0, 0], sizes = [8, 16], strides = [1, 1]} : vector<128x16xf32> to vector<8x16xf32>
    %17 = arith.truncf %16 : vector<8x16xf32> to vector<8x16xbf16>
    %c0_7 = arith.constant 0 : index
    %c0_8 = arith.constant 0 : index
    %c0_9 = arith.constant 0 : index
    %18 = vector.load %arg3[%c0_7, %c0_8, %c0_9] : memref<16x16x64xbf16, #tpu.memory_space<vmem>>, vector<1x16x64xbf16>
    %19 = vector.shape_cast %18 : vector<1x16x64xbf16> to vector<16x64xbf16>
    %cst_10 = arith.constant dense<0.000000e+00> : vector<8x64xf32>
    %20 = tpu.matmul %17, %19, %cst_10 {dimension_numbers = #tpu.dot_dimension_numbers<[1], [0], [0], [1], [0, 0, 1, 1], [], []>} : vector<8x16xbf16>, vector<16x64xbf16>, vector<8x64xf32> -> vector<8x64xf32>
    %21 = arith.addf %15, %20 : vector<8x64xf32>
    %22 = vector.extract_strided_slice %14 {offsets = [8, 0], sizes = [8, 16], strides = [1, 1]} : vector<128x16xf32> to vector<8x16xf32>
    %23 = arith.truncf %22 : vector<8x16xf32> to vector<8x16xbf16>
    %c1 = arith.constant 1 : index
    %c0_11 = arith.constant 0 : index
    %c0_12 = arith.constant 0 : index
    %24 = vector.load %arg3[%c1, %c0_11, %c0_12] : memref<16x16x64xbf16, #tpu.memory_space<vmem>>, vector<1x16x64xbf16>
    %25 = vector.shape_cast %24 : vector<1x16x64xbf16> to vector<16x64xbf16>
    %cst_13 = arith.constant dense<0.000000e+00> : vector<8x64xf32>
    %26 = tpu.matmul %23, %25, %cst_13 {dimension_numbers = #tpu.dot_dimension_numbers<[1], [0], [0], [1], [0, 0, 1, 1], [], []>} : vector<8x16xbf16>, vector<16x64xbf16>, vector<8x64xf32> -> vector<8x64xf32>
    %27 = arith.addf %21, %26 : vector<8x64xf32>
    %28 = vector.extract_strided_slice %14 {offsets = [16, 0], sizes = [8, 16], strides = [1, 1]} : vector<128x16xf32> to vector<8x16xf32>
    %29 = arith.truncf %28 : vector<8x16xf32> to vector<8x16xbf16>
    %c2 = arith.constant 2 : index
    %c0_14 = arith.constant 0 : index
    %c0_15 = arith.constant 0 : index
    %30 = vector.load %arg3[%c2, %c0_14, %c0_15] : memref<16x16x64xbf16, #tpu.memory_space<vmem>>, vector<1x16x64xbf16>
    %31 = vector.shape_cast %30 : vector<1x16x64xbf16> to vector<16x64xbf16>
    %cst_16 = arith.constant dense<0.000000e+00> : vector<8x64xf32>
    %32 = tpu.matmul %29, %31, %cst_16 {dimension_numbers = #tpu.dot_dimension_numbers<[1], [0], [0], [1], [0, 0, 1, 1], [], []>} : vector<8x16xbf16>, vector<16x64xbf16>, vector<8x64xf32> -> vector<8x64xf32>
    %33 = arith.addf %27, %32 : vector<8x64xf32>
    %34 = vector.extract_strided_slice %14 {offsets = [24, 0], sizes = [8, 16], strides = [1, 1]} : vector<128x16xf32> to vector<8x16xf32>
    %35 = arith.truncf %34 : vector<8x16xf32> to vector<8x16xbf16>
    %c3 = arith.constant 3 : index
    %c0_17 = arith.constant 0 : index
    %c0_18 = arith.constant 0 : index
    %36 = vector.load %arg3[%c3, %c0_17, %c0_18] : memref<16x16x64xbf16, #tpu.memory_space<vmem>>, vector<1x16x64xbf16>
    %37 = vector.shape_cast %36 : vector<1x16x64xbf16> to vector<16x64xbf16>
    %cst_19 = arith.constant dense<0.000000e+00> : vector<8x64xf32>
    %38 = tpu.matmul %35, %37, %cst_19 {dimension_numbers = #tpu.dot_dimension_numbers<[1], [0], [0], [1], [0, 0, 1, 1], [], []>} : vector<8x16xbf16>, vector<16x64xbf16>, vector<8x64xf32> -> vector<8x64xf32>
    %39 = arith.addf %33, %38 : vector<8x64xf32>
    %40 = vector.extract_strided_slice %14 {offsets = [32, 0], sizes = [8, 16], strides = [1, 1]} : vector<128x16xf32> to vector<8x16xf32>
    %41 = arith.truncf %40 : vector<8x16xf32> to vector<8x16xbf16>
    %c4 = arith.constant 4 : index
    %c0_20 = arith.constant 0 : index
    %c0_21 = arith.constant 0 : index
    %42 = vector.load %arg3[%c4, %c0_20, %c0_21] : memref<16x16x64xbf16, #tpu.memory_space<vmem>>, vector<1x16x64xbf16>
    %43 = vector.shape_cast %42 : vector<1x16x64xbf16> to vector<16x64xbf16>
    %cst_22 = arith.constant dense<0.000000e+00> : vector<8x64xf32>
    %44 = tpu.matmul %41, %43, %cst_22 {dimension_numbers = #tpu.dot_dimension_numbers<[1], [0], [0], [1], [0, 0, 1, 1], [], []>} : vector<8x16xbf16>, vector<16x64xbf16>, vector<8x64xf32> -> vector<8x64xf32>
    %45 = arith.addf %39, %44 : vector<8x64xf32>
    %46 = vector.extract_strided_slice %14 {offsets = [40, 0], sizes = [8, 16], strides = [1, 1]} : vector<128x16xf32> to vector<8x16xf32>
    %47 = arith.truncf %46 : vector<8x16xf32> to vector<8x16xbf16>
    %c5 = arith.constant 5 : index
    %c0_23 = arith.constant 0 : index
    %c0_24 = arith.constant 0 : index
    %48 = vector.load %arg3[%c5, %c0_23, %c0_24] : memref<16x16x64xbf16, #tpu.memory_space<vmem>>, vector<1x16x64xbf16>
    %49 = vector.shape_cast %48 : vector<1x16x64xbf16> to vector<16x64xbf16>
    %cst_25 = arith.constant dense<0.000000e+00> : vector<8x64xf32>
    %50 = tpu.matmul %47, %49, %cst_25 {dimension_numbers = #tpu.dot_dimension_numbers<[1], [0], [0], [1], [0, 0, 1, 1], [], []>} : vector<8x16xbf16>, vector<16x64xbf16>, vector<8x64xf32> -> vector<8x64xf32>
    %51 = arith.addf %45, %50 : vector<8x64xf32>
    %52 = vector.extract_strided_slice %14 {offsets = [48, 0], sizes = [8, 16], strides = [1, 1]} : vector<128x16xf32> to vector<8x16xf32>
    %53 = arith.truncf %52 : vector<8x16xf32> to vector<8x16xbf16>
    %c6 = arith.constant 6 : index
    %c0_26 = arith.constant 0 : index
    %c0_27 = arith.constant 0 : index
    %54 = vector.load %arg3[%c6, %c0_26, %c0_27] : memref<16x16x64xbf16, #tpu.memory_space<vmem>>, vector<1x16x64xbf16>
    %55 = vector.shape_cast %54 : vector<1x16x64xbf16> to vector<16x64xbf16>
    %cst_28 = arith.constant dense<0.000000e+00> : vector<8x64xf32>
    %56 = tpu.matmul %53, %55, %cst_28 {dimension_numbers = #tpu.dot_dimension_numbers<[1], [0], [0], [1], [0, 0, 1, 1], [], []>} : vector<8x16xbf16>, vector<16x64xbf16>, vector<8x64xf32> -> vector<8x64xf32>
    %57 = arith.addf %51, %56 : vector<8x64xf32>
    %58 = vector.extract_strided_slice %14 {offsets = [56, 0], sizes = [8, 16], strides = [1, 1]} : vector<128x16xf32> to vector<8x16xf32>
    %59 = arith.truncf %58 : vector<8x16xf32> to vector<8x16xbf16>
    %c7 = arith.constant 7 : index
    %c0_29 = arith.constant 0 : index
    %c0_30 = arith.constant 0 : index
    %60 = vector.load %arg3[%c7, %c0_29, %c0_30] : memref<16x16x64xbf16, #tpu.memory_space<vmem>>, vector<1x16x64xbf16>
    %61 = vector.shape_cast %60 : vector<1x16x64xbf16> to vector<16x64xbf16>
    %cst_31 = arith.constant dense<0.000000e+00> : vector<8x64xf32>
    %62 = tpu.matmul %59, %61, %cst_31 {dimension_numbers = #tpu.dot_dimension_numbers<[1], [0], [0], [1], [0, 0, 1, 1], [], []>} : vector<8x16xbf16>, vector<16x64xbf16>, vector<8x64xf32> -> vector<8x64xf32>
    %63 = arith.addf %57, %62 : vector<8x64xf32>
    %64 = vector.extract_strided_slice %14 {offsets = [64, 0], sizes = [8, 16], strides = [1, 1]} : vector<128x16xf32> to vector<8x16xf32>
    %65 = arith.truncf %64 : vector<8x16xf32> to vector<8x16xbf16>
    %c8 = arith.constant 8 : index
    %c0_32 = arith.constant 0 : index
    %c0_33 = arith.constant 0 : index
    %66 = vector.load %arg3[%c8, %c0_32, %c0_33] : memref<16x16x64xbf16, #tpu.memory_space<vmem>>, vector<1x16x64xbf16>
    %67 = vector.shape_cast %66 : vector<1x16x64xbf16> to vector<16x64xbf16>
    %cst_34 = arith.constant dense<0.000000e+00> : vector<8x64xf32>
    %68 = tpu.matmul %65, %67, %cst_34 {dimension_numbers = #tpu.dot_dimension_numbers<[1], [0], [0], [1], [0, 0, 1, 1], [], []>} : vector<8x16xbf16>, vector<16x64xbf16>, vector<8x64xf32> -> vector<8x64xf32>
    %69 = arith.addf %63, %68 : vector<8x64xf32>
    %70 = vector.extract_strided_slice %14 {offsets = [72, 0], sizes = [8, 16], strides = [1, 1]} : vector<128x16xf32> to vector<8x16xf32>
    %71 = arith.truncf %70 : vector<8x16xf32> to vector<8x16xbf16>
    %c9 = arith.constant 9 : index
    %c0_35 = arith.constant 0 : index
    %c0_36 = arith.constant 0 : index
    %72 = vector.load %arg3[%c9, %c0_35, %c0_36] : memref<16x16x64xbf16, #tpu.memory_space<vmem>>, vector<1x16x64xbf16>
    %73 = vector.shape_cast %72 : vector<1x16x64xbf16> to vector<16x64xbf16>
    %cst_37 = arith.constant dense<0.000000e+00> : vector<8x64xf32>
    %74 = tpu.matmul %71, %73, %cst_37 {dimension_numbers = #tpu.dot_dimension_numbers<[1], [0], [0], [1], [0, 0, 1, 1], [], []>} : vector<8x16xbf16>, vector<16x64xbf16>, vector<8x64xf32> -> vector<8x64xf32>
    %75 = arith.addf %69, %74 : vector<8x64xf32>
    %76 = vector.extract_strided_slice %14 {offsets = [80, 0], sizes = [8, 16], strides = [1, 1]} : vector<128x16xf32> to vector<8x16xf32>
    %77 = arith.truncf %76 : vector<8x16xf32> to vector<8x16xbf16>
    %c10 = arith.constant 10 : index
    %c0_38 = arith.constant 0 : index
    %c0_39 = arith.constant 0 : index
    %78 = vector.load %arg3[%c10, %c0_38, %c0_39] : memref<16x16x64xbf16, #tpu.memory_space<vmem>>, vector<1x16x64xbf16>
    %79 = vector.shape_cast %78 : vector<1x16x64xbf16> to vector<16x64xbf16>
    %cst_40 = arith.constant dense<0.000000e+00> : vector<8x64xf32>
    %80 = tpu.matmul %77, %79, %cst_40 {dimension_numbers = #tpu.dot_dimension_numbers<[1], [0], [0], [1], [0, 0, 1, 1], [], []>} : vector<8x16xbf16>, vector<16x64xbf16>, vector<8x64xf32> -> vector<8x64xf32>
    %81 = arith.addf %75, %80 : vector<8x64xf32>
    %82 = vector.extract_strided_slice %14 {offsets = [88, 0], sizes = [8, 16], strides = [1, 1]} : vector<128x16xf32> to vector<8x16xf32>
    %83 = arith.truncf %82 : vector<8x16xf32> to vector<8x16xbf16>
    %c11 = arith.constant 11 : index
    %c0_41 = arith.constant 0 : index
    %c0_42 = arith.constant 0 : index
    %84 = vector.load %arg3[%c11, %c0_41, %c0_42] : memref<16x16x64xbf16, #tpu.memory_space<vmem>>, vector<1x16x64xbf16>
    %85 = vector.shape_cast %84 : vector<1x16x64xbf16> to vector<16x64xbf16>
    %cst_43 = arith.constant dense<0.000000e+00> : vector<8x64xf32>
    %86 = tpu.matmul %83, %85, %cst_43 {dimension_numbers = #tpu.dot_dimension_numbers<[1], [0], [0], [1], [0, 0, 1, 1], [], []>} : vector<8x16xbf16>, vector<16x64xbf16>, vector<8x64xf32> -> vector<8x64xf32>
    %87 = arith.addf %81, %86 : vector<8x64xf32>
    %88 = vector.extract_strided_slice %14 {offsets = [96, 0], sizes = [8, 16], strides = [1, 1]} : vector<128x16xf32> to vector<8x16xf32>
    %89 = arith.truncf %88 : vector<8x16xf32> to vector<8x16xbf16>
    %c12 = arith.constant 12 : index
    %c0_44 = arith.constant 0 : index
    %c0_45 = arith.constant 0 : index
    %90 = vector.load %arg3[%c12, %c0_44, %c0_45] : memref<16x16x64xbf16, #tpu.memory_space<vmem>>, vector<1x16x64xbf16>
    %91 = vector.shape_cast %90 : vector<1x16x64xbf16> to vector<16x64xbf16>
    %cst_46 = arith.constant dense<0.000000e+00> : vector<8x64xf32>
    %92 = tpu.matmul %89, %91, %cst_46 {dimension_numbers = #tpu.dot_dimension_numbers<[1], [0], [0], [1], [0, 0, 1, 1], [], []>} : vector<8x16xbf16>, vector<16x64xbf16>, vector<8x64xf32> -> vector<8x64xf32>
    %93 = arith.addf %87, %92 : vector<8x64xf32>
    %94 = vector.extract_strided_slice %14 {offsets = [104, 0], sizes = [8, 16], strides = [1, 1]} : vector<128x16xf32> to vector<8x16xf32>
    %95 = arith.truncf %94 : vector<8x16xf32> to vector<8x16xbf16>
    %c13 = arith.constant 13 : index
    %c0_47 = arith.constant 0 : index
    %c0_48 = arith.constant 0 : index
    %96 = vector.load %arg3[%c13, %c0_47, %c0_48] : memref<16x16x64xbf16, #tpu.memory_space<vmem>>, vector<1x16x64xbf16>
    %97 = vector.shape_cast %96 : vector<1x16x64xbf16> to vector<16x64xbf16>
    %cst_49 = arith.constant dense<0.000000e+00> : vector<8x64xf32>
    %98 = tpu.matmul %95, %97, %cst_49 {dimension_numbers = #tpu.dot_dimension_numbers<[1], [0], [0], [1], [0, 0, 1, 1], [], []>} : vector<8x16xbf16>, vector<16x64xbf16>, vector<8x64xf32> -> vector<8x64xf32>
    %99 = arith.addf %93, %98 : vector<8x64xf32>
    %100 = vector.extract_strided_slice %14 {offsets = [112, 0], sizes = [8, 16], strides = [1, 1]} : vector<128x16xf32> to vector<8x16xf32>
    %101 = arith.truncf %100 : vector<8x16xf32> to vector<8x16xbf16>
    %c14 = arith.constant 14 : index
    %c0_50 = arith.constant 0 : index
    %c0_51 = arith.constant 0 : index
    %102 = vector.load %arg3[%c14, %c0_50, %c0_51] : memref<16x16x64xbf16, #tpu.memory_space<vmem>>, vector<1x16x64xbf16>
    %103 = vector.shape_cast %102 : vector<1x16x64xbf16> to vector<16x64xbf16>
    %cst_52 = arith.constant dense<0.000000e+00> : vector<8x64xf32>
    %104 = tpu.matmul %101, %103, %cst_52 {dimension_numbers = #tpu.dot_dimension_numbers<[1], [0], [0], [1], [0, 0, 1, 1], [], []>} : vector<8x16xbf16>, vector<16x64xbf16>, vector<8x64xf32> -> vector<8x64xf32>
    %105 = arith.addf %99, %104 : vector<8x64xf32>
    %106 = vector.extract_strided_slice %14 {offsets = [120, 0], sizes = [8, 16], strides = [1, 1]} : vector<128x16xf32> to vector<8x16xf32>
    %107 = arith.truncf %106 : vector<8x16xf32> to vector<8x16xbf16>
    %c15 = arith.constant 15 : index
    %c0_53 = arith.constant 0 : index
    %c0_54 = arith.constant 0 : index
    %108 = vector.load %arg3[%c15, %c0_53, %c0_54] : memref<16x16x64xbf16, #tpu.memory_space<vmem>>, vector<1x16x64xbf16>
    %109 = vector.shape_cast %108 : vector<1x16x64xbf16> to vector<16x64xbf16>
    %cst_55 = arith.constant dense<0.000000e+00> : vector<8x64xf32>
    %110 = tpu.matmul %107, %109, %cst_55 {dimension_numbers = #tpu.dot_dimension_numbers<[1], [0], [0], [1], [0, 0, 1, 1], [], []>} : vector<8x16xbf16>, vector<16x64xbf16>, vector<8x64xf32> -> vector<8x64xf32>
    %111 = arith.addf %105, %110 : vector<8x64xf32>
    %c0_56 = arith.constant 0 : index
    %c0_57 = arith.constant 0 : index
    %112 = vector.load %arg4[%c0_56, %c0_57] : memref<1x64xf32, #tpu.memory_space<vmem>>, vector<1x64xf32>
    %113 = vector.broadcast %112 : vector<1x64xf32> to vector<8x64xf32>
    %114 = arith.addf %111, %113 : vector<8x64xf32>
    %cst_58 = arith.constant 0.000000e+00 : f32
    %115 = vector.broadcast %cst_58 : f32 to vector<8x64xf32>
    %116 = arith.maximumf %114, %115 : vector<8x64xf32>
    %117 = arith.truncf %116 : vector<8x64xf32> to vector<8x64xbf16>
    %c0_59 = arith.constant 0 : index
    %c0_60 = arith.constant 0 : index
    %118 = vector.load %arg5[%c0_59, %c0_60] : memref<64x64xbf16, #tpu.memory_space<vmem>>, vector<64x64xbf16>
    %cst_61 = arith.constant dense<0.000000e+00> : vector<8x64xf32>
    %119 = tpu.matmul %117, %118, %cst_61 {dimension_numbers = #tpu.dot_dimension_numbers<[1], [0], [0], [1], [0, 0, 1, 1], [], []>} : vector<8x64xbf16>, vector<64x64xbf16>, vector<8x64xf32> -> vector<8x64xf32>
    %c0_62 = arith.constant 0 : index
    %c0_63 = arith.constant 0 : index
    %120 = vector.load %arg6[%c0_62, %c0_63] : memref<1x64xf32, #tpu.memory_space<vmem>>, vector<1x64xf32>
    %121 = vector.broadcast %120 : vector<1x64xf32> to vector<8x64xf32>
    %122 = arith.addf %119, %121 : vector<8x64xf32>
    %cst_64 = arith.constant 0.000000e+00 : f32
    %123 = vector.broadcast %cst_64 : f32 to vector<8x64xf32>
    %124 = arith.maximumf %122, %123 : vector<8x64xf32>
    %125 = arith.mulf %124, %124 : vector<8x64xf32>
    %cst_65 = arith.constant dense<0.000000e+00> : vector<8xf32>
    %126 = vector.multi_reduction <add>, %125, %cst_65 [1] : vector<8x64xf32> to vector<8xf32>
    %127 = vector.shape_cast %126 : vector<8xf32> to vector<8x1xf32>
    %cst_66 = arith.constant 9.99999996E-13 : f32
    %128 = vector.broadcast %cst_66 : f32 to vector<8x1xf32>
    %129 = arith.addf %127, %128 : vector<8x1xf32>
    %130 = math.rsqrt %129 : vector<8x1xf32>
    %131 = vector.broadcast %130 : vector<8x1xf32> to vector<8x64xf32>
    %132 = arith.mulf %124, %131 : vector<8x64xf32>
    %133 = arith.truncf %132 : vector<8x64xf32> to vector<8x64xbf16>
    %c0_67 = arith.constant 0 : index
    %c0_68 = arith.constant 0 : index
    %134 = vector.load %arg7[%c0_67, %c0_68] : memref<64x128xbf16, #tpu.memory_space<vmem>>, vector<64x128xbf16>
    %cst_69 = arith.constant dense<0.000000e+00> : vector<8x128xf32>
    %135 = tpu.matmul %133, %134, %cst_69 {dimension_numbers = #tpu.dot_dimension_numbers<[1], [0], [0], [1], [0, 0, 1, 1], [], []>} : vector<8x64xbf16>, vector<64x128xbf16>, vector<8x128xf32> -> vector<8x128xf32>
    %c0_70 = arith.constant 0 : index
    %c0_71 = arith.constant 0 : index
    %136 = vector.load %arg8[%c0_70, %c0_71] : memref<1x128xf32, #tpu.memory_space<vmem>>, vector<1x128xf32>
    %137 = vector.broadcast %136 : vector<1x128xf32> to vector<8x128xf32>
    %138 = arith.addf %135, %137 : vector<8x128xf32>
    %139 = arith.mulf %138, %138 : vector<8x128xf32>
    %cst_72 = arith.constant dense<0.000000e+00> : vector<8xf32>
    %140 = vector.multi_reduction <add>, %139, %cst_72 [1] : vector<8x128xf32> to vector<8xf32>
    %141 = vector.shape_cast %140 : vector<8xf32> to vector<8x1xf32>
    %cst_73 = arith.constant 9.99999996E-13 : f32
    %142 = vector.broadcast %cst_73 : f32 to vector<8x1xf32>
    %143 = arith.addf %141, %142 : vector<8x1xf32>
    %144 = math.rsqrt %143 : vector<8x1xf32>
    %145 = vector.broadcast %144 : vector<8x1xf32> to vector<8x128xf32>
    %146 = arith.mulf %138, %145 : vector<8x128xf32>
    %c0_74 = arith.constant 0 : index
    %c0_75 = arith.constant 0 : index
    %147 = vector.load %arg9[%c0_74, %c0_75] : memref<8x128xf32, #tpu.memory_space<vmem>>, vector<8x128xf32>
    tpu.vector_store %arg9[%c0_74, %c0_75], %146 {strides = array<i32>} : memref<8x128xf32, #tpu.memory_space<vmem>>, vector<8x128xf32>,
    return
  }
}

</mosaic_0001>

<llo_original>
// kernel: encoder_image_full_forward.2
$region0: #{encoder_image_full_forward.2}
  #allocation0 [shape = 'u32[]', space=smem, size = 0x4, offset = 0x4, fixed_abs, tag = 'smem constant byte address 0x4 - core index']
  #allocation1 [shape = 'u32[144,128]{1,0:T(1,128)}', space=vmem, size = 0x12000, scoped, tag = 'internal scratch']
  %s0 = inlined_call_operand.vmem [shape: bf16[2048,48], index: 0, kind: input, shape index: {}]
  %s1 = inlined_call_operand.vmem [shape: bf16[48,128], index: 1, kind: input, shape index: {}]
  %s2 = inlined_call_operand.vmem [shape: f32[1,128], index: 2, kind: input, shape index: {}]
  %s3 = inlined_call_operand.vmem [shape: bf16[512,128], index: 3, kind: output, shape index: {}]
  %s4 = sld [smem:[#allocation0]]
  $region22: #{encoder_image_full_forward.2} parent=0
    _
  %s6 = ssub.s32 1, %s4
  %s7 = scalar_select 0, %s6, %s4
  // Predicated region
  $region2: #{encoder_image_full_forward.2} parent=0 // pred_check
    _
  $region3: #{encoder_image_full_forward.2} parent=0 // pred_check_branch
    %9 = sbr.rel (0) target = $region5
  $region4: #{encoder_image_full_forward.2} parent=0 // pred_region
    _
  $region5: #{encoder_image_full_forward.2} parent=0 // pred_fallthru
    _
  // Predicated region
  $region6: #{encoder_image_full_forward.2} parent=0 // pred_check
    _
  $region7: #{encoder_image_full_forward.2} parent=0 // pred_check_branch
    %11 = sbr.rel (0) target = $region9
  $region8: #{encoder_image_full_forward.2} parent=0 // pred_region
    _
  $region9: #{encoder_image_full_forward.2} parent=0 // pred_fallthru
    _
  // Predicated region
  $region10: #{encoder_image_full_forward.2} parent=0 // pred_check
    _
  $region11: #{encoder_image_full_forward.2} parent=0 // pred_check_branch
    %13 = sbr.rel (0) target = $region13
  $region12: #{encoder_image_full_forward.2} parent=0 // pred_region
    _
  $region13: #{encoder_image_full_forward.2} parent=0 // pred_fallthru
    _
  %v15 = vld [vmem:[%s0] sm:$0xf]
  %v16 = vld [vmem:[%s0 + $0x4] sm:$0xf]
  %v17 = vld [vmem:[%s0 + $0x8] sm:$0xf]
  %v18 = vld [vmem:[%s0 + $0xc] sm:$0xf]
  %v19 = vld [vmem:[%s0 + $0x10] sm:$0xf]
  %v20 = vld [vmem:[%s0 + $0x14] sm:$0xf]
  %v21 = vld [vmem:[%s0 + $0x18] sm:$0xf]
  %v22 = vld [vmem:[%s0 + $0x1c] sm:$0xf]
  %v23 = vld [vmem:[%s0 + $0x20] sm:$0xf]
  %v24 = vld [vmem:[%s0 + $0x24] sm:$0xf]
  %v25 = vld [vmem:[%s0 + $0x28] sm:$0xf]
  %v26 = vld [vmem:[%s0 + $0x2c] sm:$0xf]
  %v27 = vld [vmem:[%s0 + $0x30] sm:$0xf]
  %v28 = vld [vmem:[%s0 + $0x34] sm:$0xf]
  %v29 = vld [vmem:[%s0 + $0x38] sm:$0xf]
  %v30 = vld [vmem:[%s0 + $0x3c] sm:$0xf]
  %v31 = vld [vmem:[%s0 + $0x40] sm:$0xf]
  %v32 = vld [vmem:[%s0 + $0x44] sm:$0xf]
  %v33 = vld [vmem:[%s0 + $0x48] sm:$0xf]
  %v34 = vld [vmem:[%s0 + $0x4c] sm:$0xf]
  %v35 = vld [vmem:[%s0 + $0x50] sm:$0xf]
  %v36 = vld [vmem:[%s0 + $0x54] sm:$0xf]
  %v37 = vld [vmem:[%s0 + $0x58] sm:$0xf]
  %v38 = vld [vmem:[%s0 + $0x5c] sm:$0xf]
  %v39 = vld [vmem:[%s0 + $0x60] sm:$0xf]
  %v40 = vld [vmem:[%s0 + $0x64] sm:$0xf]
  %v41 = vld [vmem:[%s0 + $0x68] sm:$0xf]
  %v42 = vld [vmem:[%s0 + $0x6c] sm:$0xf]
  %v43 = vld [vmem:[%s0 + $0x70] sm:$0xf]
  %v44 = vld [vmem:[%s0 + $0x74] sm:$0xf]
  %v45 = vld [vmem:[%s0 + $0x78] sm:$0xf]
  %v46 = vld [vmem:[%s0 + $0x7c] sm:$0xf]
  %v47 = vld [vmem:[%s0 + $0x80] sm:$0xf]
  %v48 = vld [vmem:[%s0 + $0x84] sm:$0xf]
  %v49 = vld [vmem:[%s0 + $0x88] sm:$0xf]
  %v50 = vld [vmem:[%s0 + $0x8c] sm:$0xf]
  %v51 = vld [vmem:[%s0 + $0x90] sm:$0xf]
  %v52 = vld [vmem:[%s0 + $0x94] sm:$0xf]
  %v53 = vld [vmem:[%s0 + $0x98] sm:$0xf]
  %v54 = vld [vmem:[%s0 + $0x9c] sm:$0xf]
  %v55 = vld [vmem:[%s0 + $0xa0] sm:$0xf]
  %v56 = vld [vmem:[%s0 + $0xa4] sm:$0xf]
  %v57 = vld [vmem:[%s0 + $0xa8] sm:$0xf]
  %v58 = vld [vmem:[%s0 + $0xac] sm:$0xf]
  %v59 = vld [vmem:[%s0 + $0xb0] sm:$0xf]
  %v60 = vld [vmem:[%s0 + $0xb4] sm:$0xf]
  %v61 = vld [vmem:[%s0 + $0xb8] sm:$0xf]
  %v62 = vld [vmem:[%s0 + $0xbc] sm:$0xf]
  %v63 = vld [vmem:[%s0 + $0xc0] sm:$0xf]
  %v64 = vld [vmem:[%s0 + $0xc4] sm:$0xf]
  %v65 = vld [vmem:[%s0 + $0xc8] sm:$0xf]
  %v66 = vld [vmem:[%s0 + $0xcc] sm:$0xf]
  %v67 = vld [vmem:[%s0 + $0xd0] sm:$0xf]
  %v68 = vld [vmem:[%s0 + $0xd4] sm:$0xf]
  %v69 = vld [vmem:[%s0 + $0xd8] sm:$0xf]
  %v70 = vld [vmem:[%s0 + $0xdc] sm:$0xf]
  %v71 = vld [vmem:[%s0 + $0xe0] sm:$0xf]
  %v72 = vld [vmem:[%s0 + $0xe4] sm:$0xf]
  %v73 = vld [vmem:[%s0 + $0xe8] sm:$0xf]
  %v74 = vld [vmem:[%s0 + $0xec] sm:$0xf]
  %v75 = vld [vmem:[%s0 + $0xf0] sm:$0xf]
  %v76 = vld [vmem:[%s0 + $0xf4] sm:$0xf]
  %v77 = vld [vmem:[%s0 + $0xf8] sm:$0xf]
  %v78 = vld [vmem:[%s0 + $0xfc] sm:$0xf]
  %v79 = vld [vmem:[%s0 + $0x100] sm:$0xf]
  %v80 = vld [vmem:[%s0 + $0x104] sm:$0xf]
  %v81 = vld [vmem:[%s0 + $0x108] sm:$0xf]
  %v82 = vld [vmem:[%s0 + $0x10c] sm:$0xf]
  %v83 = vld [vmem:[%s0 + $0x110] sm:$0xf]
  %v84 = vld [vmem:[%s0 + $0x114] sm:$0xf]
  %v85 = vld [vmem:[%s0 + $0x118] sm:$0xf]
  %v86 = vld [vmem:[%s0 + $0x11c] sm:$0xf]
  %v87 = vld [vmem:[%s0 + $0x120] sm:$0xf]
  %v88 = vld [vmem:[%s0 + $0x124] sm:$0xf]
  %v89 = vld [vmem:[%s0 + $0x128] sm:$0xf]
  %v90 = vld [vmem:[%s0 + $0x12c] sm:$0xf]
  %v91 = vld [vmem:[%s0 + $0x130] sm:$0xf]
  %v92 = vld [vmem:[%s0 + $0x134] sm:$0xf]
  %v93 = vld [vmem:[%s0 + $0x138] sm:$0xf]
  %v94 = vld [vmem:[%s0 + $0x13c] sm:$0xf]
  %v95 = vld [vmem:[%s0 + $0x140] sm:$0xf]
  %v96 = vld [vmem:[%s0 + $0x144] sm:$0xf]
  %v97 = vld [vmem:[%s0 + $0x148] sm:$0xf]
  %v98 = vld [vmem:[%s0 + $0x14c] sm:$0xf]
  %v99 = vld [vmem:[%s0 + $0x150] sm:$0xf]
  %v100 = vld [vmem:[%s0 + $0x154] sm:$0xf]
  %v101 = vld [vmem:[%s0 + $0x158] sm:$0xf]
  %v102 = vld [vmem:[%s0 + $0x15c] sm:$0xf]
  %v103 = vld [vmem:[%s0 + $0x160] sm:$0xf]
  %v104 = vld [vmem:[%s0 + $0x164] sm:$0xf]
  %v105 = vld [vmem:[%s0 + $0x168] sm:$0xf]
  %v106 = vld [vmem:[%s0 + $0x16c] sm:$0xf]
  %v107 = vld [vmem:[%s0 + $0x170] sm:$0xf]
  %v108 = vld [vmem:[%s0 + $0x174] sm:$0xf]
  %v109 = vld [vmem:[%s0 + $0x178] sm:$0xf]
  %v110 = vld [vmem:[%s0 + $0x17c] sm:$0xf]
  %v111 = vld [vmem:[%s0 + $0x180] sm:$0xf]
  %v112 = vld [vmem:[%s0 + $0x184] sm:$0xf]
  %v113 = vld [vmem:[%s0 + $0x188] sm:$0xf]
  %v114 = vld [vmem:[%s0 + $0x18c] sm:$0xf]
  %v115 = vld [vmem:[%s0 + $0x190] sm:$0xf]
  %v116 = vld [vmem:[%s0 + $0x194] sm:$0xf]
  %v117 = vld [vmem:[%s0 + $0x198] sm:$0xf]
  %v118 = vld [vmem:[%s0 + $0x19c] sm:$0xf]
  %v119 = vld [vmem:[%s0 + $0x1a0] sm:$0xf]
  %v120 = vld [vmem:[%s0 + $0x1a4] sm:$0xf]
  %v121 = vld [vmem:[%s0 + $0x1a8] sm:$0xf]
  %v122 = vld [vmem:[%s0 + $0x1ac] sm:$0xf]
  %v123 = vld [vmem:[%s0 + $0x1b0] sm:$0xf]
  %v124 = vld [vmem:[%s0 + $0x1b4] sm:$0xf]
  %v125 = vld [vmem:[%s0 + $0x1b8] sm:$0xf]
  %v126 = vld [vmem:[%s0 + $0x1bc] sm:$0xf]
  %v127 = vld [vmem:[%s0 + $0x1c0] sm:$0xf]
  %v128 = vld [vmem:[%s0 + $0x1c4] sm:$0xf]
  %v129 = vld [vmem:[%s0 + $0x1c8] sm:$0xf]
  %v130 = vld [vmem:[%s0 + $0x1cc] sm:$0xf]
  %v131 = vld [vmem:[%s0 + $0x1d0] sm:$0xf]
  %v132 = vld [vmem:[%s0 + $0x1d4] sm:$0xf]
  %v133 = vld [vmem:[%s0 + $0x1d8] sm:$0xf]
  %v134 = vld [vmem:[%s0 + $0x1dc] sm:$0xf]
  %v135 = vld [vmem:[%s0 + $0x1e0] sm:$0xf]
  %v136 = vld [vmem:[%s0 + $0x1e4] sm:$0xf]
  %v137 = vld [vmem:[%s0 + $0x1e8] sm:$0xf]
  %v138 = vld [vmem:[%s0 + $0x1ec] sm:$0xf]
  %v139 = vld [vmem:[%s0 + $0x1f0] sm:$0xf]
  %v140 = vld [vmem:[%s0 + $0x1f4] sm:$0xf]
  %v141 = vld [vmem:[%s0 + $0x1f8] sm:$0xf]
  %v142 = vld [vmem:[%s0 + $0x1fc] sm:$0xf]
  %v143 = vld [vmem:[%s0 + $0x200] sm:$0xf]
  %v144 = vld [vmem:[%s0 + $0x204] sm:$0xf]
  %v145 = vld [vmem:[%s0 + $0x208] sm:$0xf]
  %v146 = vld [vmem:[%s0 + $0x20c] sm:$0xf]
  %v147 = vld [vmem:[%s0 + $0x210] sm:$0xf]
  %v148 = vld [vmem:[%s0 + $0x214] sm:$0xf]
  %v149 = vld [vmem:[%s0 + $0x218] sm:$0xf]
  %v150 = vld [vmem:[%s0 + $0x21c] sm:$0xf]
  %v151 = vld [vmem:[%s0 + $0x220] sm:$0xf]
  %v152 = vld [vmem:[%s0 + $0x224] sm:$0xf]
  %v153 = vld [vmem:[%s0 + $0x228] sm:$0xf]
  %v154 = vld [vmem:[%s0 + $0x22c] sm:$0xf]
  %v155 = vld [vmem:[%s0 + $0x230] sm:$0xf]
  %v156 = vld [vmem:[%s0 + $0x234] sm:$0xf]
  %v157 = vld [vmem:[%s0 + $0x238] sm:$0xf]
  %v158 = vld [vmem:[%s0 + $0x23c] sm:$0xf]
  %v159 = vld [vmem:[%s0 + $0x240] sm:$0xf]
  %v160 = vld [vmem:[%s0 + $0x244] sm:$0xf]
  %v161 = vld [vmem:[%s0 + $0x248] sm:$0xf]
  %v162 = vld [vmem:[%s0 + $0x24c] sm:$0xf]
  %v163 = vld [vmem:[%s0 + $0x250] sm:$0xf]
  %v164 = vld [vmem:[%s0 + $0x254] sm:$0xf]
  %v165 = vld [vmem:[%s0 + $0x258] sm:$0xf]
  %v166 = vld [vmem:[%s0 + $0x25c] sm:$0xf]
  %v167 = vld [vmem:[%s0 + $0x260] sm:$0xf]
  %v168 = vld [vmem:[%s0 + $0x264] sm:$0xf]
  %v169 = vld [vmem:[%s0 + $0x268] sm:$0xf]
  %v170 = vld [vmem:[%s0 + $0x26c] sm:$0xf]
  %v171 = vld [vmem:[%s0 + $0x270] sm:$0xf]
  %v172 = vld [vmem:[%s0 + $0x274] sm:$0xf]
  %v173 = vld [vmem:[%s0 + $0x278] sm:$0xf]
  %v174 = vld [vmem:[%s0 + $0x27c] sm:$0xf]
  %v175 = vld [vmem:[%s0 + $0x280] sm:$0xf]
  %v176 = vld [vmem:[%s0 + $0x284] sm:$0xf]
  %v177 = vld [vmem:[%s0 + $0x288] sm:$0xf]
  %v178 = vld [vmem:[%s0 + $0x28c] sm:$0xf]
  %v179 = vld [vmem:[%s0 + $0x290] sm:$0xf]
  %v180 = vld [vmem:[%s0 + $0x294] sm:$0xf]
  %v181 = vld [vmem:[%s0 + $0x298] sm:$0xf]
  %v182 = vld [vmem:[%s0 + $0x29c] sm:$0xf]
  %v183 = vld [vmem:[%s0 + $0x2a0] sm:$0xf]
  %v184 = vld [vmem:[%s0 + $0x2a4] sm:$0xf]
  %v185 = vld [vmem:[%s0 + $0x2a8] sm:$0xf]
  %v186 = vld [vmem:[%s0 + $0x2ac] sm:$0xf]
  %v187 = vld [vmem:[%s0 + $0x2b0] sm:$0xf]
  %v188 = vld [vmem:[%s0 + $0x2b4] sm:$0xf]
  %v189 = vld [vmem:[%s0 + $0x2b8] sm:$0xf]
  %v190 = vld [vmem:[%s0 + $0x2bc] sm:$0xf]
  %v191 = vld [vmem:[%s0 + $0x2c0] sm:$0xf]
  %v192 = vld [vmem:[%s0 + $0x2c4] sm:$0xf]
  %v193 = vld [vmem:[%s0 + $0x2c8] sm:$0xf]
  %v194 = vld [vmem:[%s0 + $0x2cc] sm:$0xf]
  %v195 = vld [vmem:[%s0 + $0x2d0] sm:$0xf]
  %v196 = vld [vmem:[%s0 + $0x2d4] sm:$0xf]
  %v197 = vld [vmem:[%s0 + $0x2d8] sm:$0xf]
  %v198 = vld [vmem:[%s0 + $0x2dc] sm:$0xf]
  %v199 = vld [vmem:[%s0 + $0x2e0] sm:$0xf]
  %v200 = vld [vmem:[%s0 + $0x2e4] sm:$0xf]
  %v201 = vld [vmem:[%s0 + $0x2e8] sm:$0xf]
  %v202 = vld [vmem:[%s0 + $0x2ec] sm:$0xf]
  %v203 = vld [vmem:[%s0 + $0x2f0] sm:$0xf]
  %v204 = vld [vmem:[%s0 + $0x2f4] sm:$0xf]
  %v205 = vld [vmem:[%s0 + $0x2f8] sm:$0xf]
  %v206 = vld [vmem:[%s0 + $0x2fc] sm:$0xf]
  %v207 = vld [vmem:[%s0 + $0x300] sm:$0xf]
  %v208 = vld [vmem:[%s0 + $0x304] sm:$0xf]
  %v209 = vld [vmem:[%s0 + $0x308] sm:$0xf]
  %v210 = vld [vmem:[%s0 + $0x30c] sm:$0xf]
  %v211 = vld [vmem:[%s0 + $0x310] sm:$0xf]
  %v212 = vld [vmem:[%s0 + $0x314] sm:$0xf]
  %v213 = vld [vmem:[%s0 + $0x318] sm:$0xf]
  %v214 = vld [vmem:[%s0 + $0x31c] sm:$0xf]
  %v215 = vld [vmem:[%s0 + $0x320] sm:$0xf]
  %v216 = vld [vmem:[%s0 + $0x324] sm:$0xf]
  %v217 = vld [vmem:[%s0 + $0x328] sm:$0xf]
  %v218 = vld [vmem:[%s0 + $0x32c] sm:$0xf]
  %v219 = vld [vmem:[%s0 + $0x330] sm:$0xf]
  %v220 = vld [vmem:[%s0 + $0x334] sm:$0xf]
  %v221 = vld [vmem:[%s0 + $0x338] sm:$0xf]
  %v222 = vld [vmem:[%s0 + $0x33c] sm:$0xf]
  %v223 = vld [vmem:[%s0 + $0x340] sm:$0xf]
  %v224 = vld [vmem:[%s0 + $0x344] sm:$0xf]
  %v225 = vld [vmem:[%s0 + $0x348] sm:$0xf]
  %v226 = vld [vmem:[%s0 + $0x34c] sm:$0xf]
  %v227 = vld [vmem:[%s0 + $0x350] sm:$0xf]
  %v228 = vld [vmem:[%s0 + $0x354] sm:$0xf]
  %v229 = vld [vmem:[%s0 + $0x358] sm:$0xf]
  %v230 = vld [vmem:[%s0 + $0x35c] sm:$0xf]
  %v231 = vld [vmem:[%s0 + $0x360] sm:$0xf]
  %v232 = vld [vmem:[%s0 + $0x364] sm:$0xf]
  %v233 = vld [vmem:[%s0 + $0x368] sm:$0xf]
  %v234 = vld [vmem:[%s0 + $0x36c] sm:$0xf]
  %v235 = vld [vmem:[%s0 + $0x370] sm:$0xf]
  %v236 = vld [vmem:[%s0 + $0x374] sm:$0xf]
  %v237 = vld [vmem:[%s0 + $0x378] sm:$0xf]
  %v238 = vld [vmem:[%s0 + $0x37c] sm:$0xf]
  %v239 = vld [vmem:[%s0 + $0x380] sm:$0xf]
  %v240 = vld [vmem:[%s0 + $0x384] sm:$0xf]
  %v241 = vld [vmem:[%s0 + $0x388] sm:$0xf]
  %v242 = vld [vmem:[%s0 + $0x38c] sm:$0xf]
  %v243 = vld [vmem:[%s0 + $0x390] sm:$0xf]
  %v244 = vld [vmem:[%s0 + $0x394] sm:$0xf]
  %v245 = vld [vmem:[%s0 + $0x398] sm:$0xf]
  %v246 = vld [vmem:[%s0 + $0x39c] sm:$0xf]
  %v247 = vld [vmem:[%s0 + $0x3a0] sm:$0xf]
  %v248 = vld [vmem:[%s0 + $0x3a4] sm:$0xf]
  %v249 = vld [vmem:[%s0 + $0x3a8] sm:$0xf]
  %v250 = vld [vmem:[%s0 + $0x3ac] sm:$0xf]
  %v251 = vld [vmem:[%s0 + $0x3b0] sm:$0xf]
  %v252 = vld [vmem:[%s0 + $0x3b4] sm:$0xf]
  %v253 = vld [vmem:[%s0 + $0x3b8] sm:$0xf]
  %v254 = vld [vmem:[%s0 + $0x3bc] sm:$0xf]
  %v255 = vld [vmem:[%s0 + $0x3c0] sm:$0xf]
  %v256 = vld [vmem:[%s0 + $0x3c4] sm:$0xf]
  %v257 = vld [vmem:[%s0 + $0x3c8] sm:$0xf]
  %v258 = vld [vmem:[%s0 + $0x3cc] sm:$0xf]
  %v259 = vld [vmem:[%s0 + $0x3d0] sm:$0xf]
  %v260 = vld [vmem:[%s0 + $0x3d4] sm:$0xf]
  %v261 = vld [vmem:[%s0 + $0x3d8] sm:$0xf]
  %v262 = vld [vmem:[%s0 + $0x3dc] sm:$0xf]
  %v263 = vld [vmem:[%s0 + $0x3e0] sm:$0xf]
  %v264 = vld [vmem:[%s0 + $0x3e4] sm:$0xf]
  %v265 = vld [vmem:[%s0 + $0x3e8] sm:$0xf]
  %v266 = vld [vmem:[%s0 + $0x3ec] sm:$0xf]
  %v267 = vld [vmem:[%s0 + $0x3f0] sm:$0xf]
  %v268 = vld [vmem:[%s0 + $0x3f4] sm:$0xf]
  %v269 = vld [vmem:[%s0 + $0x3f8] sm:$0xf]
  %v270 = vld [vmem:[%s0 + $0x3fc] sm:$0xf]
  %v271 = vld [vmem:[%s1] sm:$0xf]
  %v272 = vld [vmem:[%s1 + $0x4] sm:$0xf]
  %v273 = vld [vmem:[%s1 + $0x8] sm:$0xf]
  %v274 = vld [vmem:[%s1 + $0xc] sm:$0xf]
  %v275 = vld [vmem:[%s1 + $0x10] sm:$0xf]
  %v276 = vld [vmem:[%s1 + $0x14] sm:$0xf]
  %v533 = vunpack.c.l.b16 %v15
  %v534 = vunpack.c.l.b16 %v16
  %v535 = vunpack.c.l.b16 %v17
  %v536 = vunpack.c.l.b16 %v18
  %v537 = vunpack.c.l.b16 %v19
  %v538 = vunpack.c.l.b16 %v20
  %v539 = vunpack.c.l.b16 %v21
  %v540 = vunpack.c.l.b16 %v22
  %v541 = vunpack.c.l.b16 %v23
  %v542 = vunpack.c.l.b16 %v24
  %v543 = vunpack.c.l.b16 %v25
  %v544 = vunpack.c.l.b16 %v26
  %v545 = vunpack.c.l.b16 %v27
  %v546 = vunpack.c.l.b16 %v28
  %v547 = vunpack.c.l.b16 %v29
  %v548 = vunpack.c.l.b16 %v30
  %v549 = vunpack.c.l.b16 %v31
  %v550 = vunpack.c.l.b16 %v32
  %v551 = vunpack.c.l.b16 %v33
  %v552 = vunpack.c.l.b16 %v34
  %v553 = vunpack.c.l.b16 %v35
  %v554 = vunpack.c.l.b16 %v36
  %v555 = vunpack.c.l.b16 %v37
  %v556 = vunpack.c.l.b16 %v38
  %v557 = vunpack.c.l.b16 %v39
  %v558 = vunpack.c.l.b16 %v40
  %v559 = vunpack.c.l.b16 %v41
  %v560 = vunpack.c.l.b16 %v42
  %v561 = vunpack.c.l.b16 %v43
  %v562 = vunpack.c.l.b16 %v44
  %v563 = vunpack.c.l.b16 %v45
  %v564 = vunpack.c.l.b16 %v46
  %v565 = vunpack.c.l.b16 %v47
  %v566 = vunpack.c.l.b16 %v48
  %v567 = vunpack.c.l.b16 %v49
  %v568 = vunpack.c.l.b16 %v50
  %v569 = vunpack.c.l.b16 %v51
  %v570 = vunpack.c.l.b16 %v52
  %v571 = vunpack.c.l.b16 %v53
  %v572 = vunpack.c.l.b16 %v54
  %v573 = vunpack.c.l.b16 %v55
  %v574 = vunpack.c.l.b16 %v56
  %v575 = vunpack.c.l.b16 %v57
  %v576 = vunpack.c.l.b16 %v58
  %v577 = vunpack.c.l.b16 %v59
  %v578 = vunpack.c.l.b16 %v60
  %v579 = vunpack.c.l.b16 %v61
  %v580 = vunpack.c.l.b16 %v62
  %v581 = vunpack.c.l.b16 %v63
  %v582 = vunpack.c.l.b16 %v64
  %v583 = vunpack.c.l.b16 %v65
  %v584 = vunpack.c.l.b16 %v66
  %v585 = vunpack.c.l.b16 %v67
  %v586 = vunpack.c.l.b16 %v68
  %v587 = vunpack.c.l.b16 %v69
  %v588 = vunpack.c.l.b16 %v70
  %v589 = vunpack.c.l.b16 %v71
  %v590 = vunpack.c.l.b16 %v72
  %v591 = vunpack.c.l.b16 %v73
  %v592 = vunpack.c.l.b16 %v74
  %v593 = vunpack.c.l.b16 %v75
  %v594 = vunpack.c.l.b16 %v76
  %v595 = vunpack.c.l.b16 %v77
  %v596 = vunpack.c.l.b16 %v78
  %v597 = vunpack.c.l.b16 %v79
  %v598 = vunpack.c.l.b16 %v80
  %v599 = vunpack.c.l.b16 %v81
  %v600 = vunpack.c.l.b16 %v82
  %v601 = vunpack.c.l.b16 %v83
  %v602 = vunpack.c.l.b16 %v84
  %v603 = vunpack.c.l.b16 %v85
  %v604 = vunpack.c.l.b16 %v86
  %v605 = vunpack.c.l.b16 %v87
  %v606 = vunpack.c.l.b16 %v88
  %v607 = vunpack.c.l.b16 %v89
  %v608 = vunpack.c.l.b16 %v90
  %v609 = vunpack.c.l.b16 %v91
  %v610 = vunpack.c.l.b16 %v92
  %v611 = vunpack.c.l.b16 %v93
  %v612 = vunpack.c.l.b16 %v94
  %v613 = vunpack.c.l.b16 %v95
  %v614 = vunpack.c.l.b16 %v96
  %v615 = vunpack.c.l.b16 %v97
  %v616 = vunpack.c.l.b16 %v98
  %v617 = vunpack.c.l.b16 %v99
  %v618 = vunpack.c.l.b16 %v100
  %v619 = vunpack.c.l.b16 %v101
  %v620 = vunpack.c.l.b16 %v102
  %v621 = vunpack.c.l.b16 %v103
  %v622 = vunpack.c.l.b16 %v104
  %v623 = vunpack.c.l.b16 %v105
  %v624 = vunpack.c.l.b16 %v106
  %v625 = vunpack.c.l.b16 %v107
  %v626 = vunpack.c.l.b16 %v108
  %v627 = vunpack.c.l.b16 %v109
  %v628 = vunpack.c.l.b16 %v110
  %v629 = vunpack.c.l.b16 %v111
  %v630 = vunpack.c.l.b16 %v112
  %v631 = vunpack.c.l.b16 %v113
  %v632 = vunpack.c.l.b16 %v114
  %v633 = vunpack.c.l.b16 %v115
  %v634 = vunpack.c.l.b16 %v116
  %v635 = vunpack.c.l.b16 %v117
  %v636 = vunpack.c.l.b16 %v118
  %v637 = vunpack.c.l.b16 %v119
  %v638 = vunpack.c.l.b16 %v120
  %v639 = vunpack.c.l.b16 %v121
  %v640 = vunpack.c.l.b16 %v122
  %v641 = vunpack.c.l.b16 %v123
  %v642 = vunpack.c.l.b16 %v124
  %v643 = vunpack.c.l.b16 %v125
  %v644 = vunpack.c.l.b16 %v126
  %v645 = vunpack.c.l.b16 %v127
  %v646 = vunpack.c.l.b16 %v128
  %v647 = vunpack.c.l.b16 %v129
  %v648 = vunpack.c.l.b16 %v130
  %v649 = vunpack.c.l.b16 %v131
  %v650 = vunpack.c.l.b16 %v132
  %v651 = vunpack.c.l.b16 %v133
  %v652 = vunpack.c.l.b16 %v134
  %v653 = vunpack.c.l.b16 %v135
  %v654 = vunpack.c.l.b16 %v136
  %v655 = vunpack.c.l.b16 %v137
  %v656 = vunpack.c.l.b16 %v138
  %v657 = vunpack.c.l.b16 %v139
  %v658 = vunpack.c.l.b16 %v140
  %v659 = vunpack.c.l.b16 %v141
  %v660 = vunpack.c.l.b16 %v142
  %v661 = vunpack.c.l.b16 %v143
  %v662 = vunpack.c.l.b16 %v144
  %v663 = vunpack.c.l.b16 %v145
  %v664 = vunpack.c.l.b16 %v146
  %v665 = vunpack.c.l.b16 %v147
  %v666 = vunpack.c.l.b16 %v148
  %v667 = vunpack.c.l.b16 %v149
  %v668 = vunpack.c.l.b16 %v150
  %v669 = vunpack.c.l.b16 %v151
  %v670 = vunpack.c.l.b16 %v152
  %v671 = vunpack.c.l.b16 %v153
  %v672 = vunpack.c.l.b16 %v154
  %v673 = vunpack.c.l.b16 %v155
  %v674 = vunpack.c.l.b16 %v156
  %v675 = vunpack.c.l.b16 %v157
  %v676 = vunpack.c.l.b16 %v158
  %v677 = vunpack.c.l.b16 %v159
  %v678 = vunpack.c.l.b16 %v160
  %v679 = vunpack.c.l.b16 %v161
  %v680 = vunpack.c.l.b16 %v162
  %v681 = vunpack.c.l.b16 %v163
  %v682 = vunpack.c.l.b16 %v164
  %v683 = vunpack.c.l.b16 %v165
  %v684 = vunpack.c.l.b16 %v166
  %v685 = vunpack.c.l.b16 %v167
  %v686 = vunpack.c.l.b16 %v168
  %v687 = vunpack.c.l.b16 %v169
  %v688 = vunpack.c.l.b16 %v170
  %v689 = vunpack.c.l.b16 %v171
  %v690 = vunpack.c.l.b16 %v172
  %v691 = vunpack.c.l.b16 %v173
  %v692 = vunpack.c.l.b16 %v174
  %v693 = vunpack.c.l.b16 %v175
  %v694 = vunpack.c.l.b16 %v176
  %v695 = vunpack.c.l.b16 %v177
  %v696 = vunpack.c.l.b16 %v178
  %v697 = vunpack.c.l.b16 %v179
  %v698 = vunpack.c.l.b16 %v180
  %v699 = vunpack.c.l.b16 %v181
  %v700 = vunpack.c.l.b16 %v182
  %v701 = vunpack.c.l.b16 %v183
  %v702 = vunpack.c.l.b16 %v184
  %v703 = vunpack.c.l.b16 %v185
  %v704 = vunpack.c.l.b16 %v186
  %v705 = vunpack.c.l.b16 %v187
  %v706 = vunpack.c.l.b16 %v188
  %v707 = vunpack.c.l.b16 %v189
  %v708 = vunpack.c.l.b16 %v190
  %v709 = vunpack.c.l.b16 %v191
  %v710 = vunpack.c.l.b16 %v192
  %v711 = vunpack.c.l.b16 %v193
  %v712 = vunpack.c.l.b16 %v194
  %v713 = vunpack.c.l.b16 %v195
  %v714 = vunpack.c.l.b16 %v196
  %v715 = vunpack.c.l.b16 %v197
  %v716 = vunpack.c.l.b16 %v198
  %v717 = vunpack.c.l.b16 %v199
  %v718 = vunpack.c.l.b16 %v200
  %v719 = vunpack.c.l.b16 %v201
  %v720 = vunpack.c.l.b16 %v202
  %v721 = vunpack.c.l.b16 %v203
  %v722 = vunpack.c.l.b16 %v204
  %v723 = vunpack.c.l.b16 %v205
  %v724 = vunpack.c.l.b16 %v206
  %v725 = vunpack.c.l.b16 %v207
  %v726 = vunpack.c.l.b16 %v208
  %v727 = vunpack.c.l.b16 %v209
  %v728 = vunpack.c.l.b16 %v210
  %v729 = vunpack.c.l.b16 %v211
  %v730 = vunpack.c.l.b16 %v212
  %v731 = vunpack.c.l.b16 %v213
  %v732 = vunpack.c.l.b16 %v214
  %v733 = vunpack.c.l.b16 %v215
  %v734 = vunpack.c.l.b16 %v216
  %v735 = vunpack.c.l.b16 %v217
  %v736 = vunpack.c.l.b16 %v218
  %v737 = vunpack.c.l.b16 %v219
  %v738 = vunpack.c.l.b16 %v220
  %v739 = vunpack.c.l.b16 %v221
  %v740 = vunpack.c.l.b16 %v222
  %v741 = vunpack.c.l.b16 %v223
  %v742 = vunpack.c.l.b16 %v224
  %v743 = vunpack.c.l.b16 %v225
  %v744 = vunpack.c.l.b16 %v226
  %v745 = vunpack.c.l.b16 %v227
  %v746 = vunpack.c.l.b16 %v228
  %v747 = vunpack.c.l.b16 %v229
  %v748 = vunpack.c.l.b16 %v230
  %v749 = vunpack.c.l.b16 %v231
  %v750 = vunpack.c.l.b16 %v232
  %v751 = vunpack.c.l.b16 %v233
  %v752 = vunpack.c.l.b16 %v234
  %v753 = vunpack.c.l.b16 %v235
  %v754 = vunpack.c.l.b16 %v236
  %v755 = vunpack.c.l.b16 %v237
  %v756 = vunpack.c.l.b16 %v238
  %v757 = vunpack.c.l.b16 %v239
  %v758 = vunpack.c.l.b16 %v240
  %v759 = vunpack.c.l.b16 %v241
  %v760 = vunpack.c.l.b16 %v242
  %v761 = vunpack.c.l.b16 %v243
  %v762 = vunpack.c.l.b16 %v244
  %v763 = vunpack.c.l.b16 %v245
  %v764 = vunpack.c.l.b16 %v246
  %v765 = vunpack.c.l.b16 %v247
  %v766 = vunpack.c.l.b16 %v248
  %v767 = vunpack.c.l.b16 %v249
  %v768 = vunpack.c.l.b16 %v250
  %v769 = vunpack.c.l.b16 %v251
  %v770 = vunpack.c.l.b16 %v252
  %v771 = vunpack.c.l.b16 %v253
  %v772 = vunpack.c.l.b16 %v254
  %v773 = vunpack.c.l.b16 %v255
  %v774 = vunpack.c.l.b16 %v256
  %v775 = vunpack.c.l.b16 %v257
  %v776 = vunpack.c.l.b16 %v258
  %v777 = vunpack.c.l.b16 %v259
  %v778 = vunpack.c.l.b16 %v260
  %v779 = vunpack.c.l.b16 %v261
  %v780 = vunpack.c.l.b16 %v262
  %v781 = vunpack.c.l.b16 %v263
  %v782 = vunpack.c.l.b16 %v264
  %v783 = vunpack.c.l.b16 %v265
  %v784 = vunpack.c.l.b16 %v266
  %v785 = vunpack.c.l.b16 %v267
  %v786 = vunpack.c.l.b16 %v268
  %v787 = vunpack.c.l.b16 %v269
  %v788 = vunpack.c.l.b16 %v270
  %v789 = vpack.c.b16 %v534, %v533
  %v790 = vpack.c.b16 %v536, %v535
  %v791 = vpack.c.b16 %v538, %v537
  %v792 = vpack.c.b16 %v540, %v539
  %v793 = vpack.c.b16 %v542, %v541
  %v794 = vpack.c.b16 %v544, %v543
  %v795 = vpack.c.b16 %v546, %v545
  %v796 = vpack.c.b16 %v548, %v547
  %v797 = vpack.c.b16 %v550, %v549
  %v798 = vpack.c.b16 %v552, %v551
  %v799 = vpack.c.b16 %v554, %v553
  %v800 = vpack.c.b16 %v556, %v555
  %v801 = vpack.c.b16 %v558, %v557
  %v802 = vpack.c.b16 %v560, %v559
  %v803 = vpack.c.b16 %v562, %v561
  %v804 = vpack.c.b16 %v564, %v563
  %v805 = vpack.c.b16 %v566, %v565
  %v806 = vpack.c.b16 %v568, %v567
  %v807 = vpack.c.b16 %v570, %v569
  %v808 = vpack.c.b16 %v572, %v571
  %v809 = vpack.c.b16 %v574, %v573
  %v810 = vpack.c.b16 %v576, %v575
  %v811 = vpack.c.b16 %v578, %v577
  %v812 = vpack.c.b16 %v580, %v579
  %v813 = vpack.c.b16 %v582, %v581
  %v814 = vpack.c.b16 %v584, %v583
  %v815 = vpack.c.b16 %v586, %v585
  %v816 = vpack.c.b16 %v588, %v587
  %v817 = vpack.c.b16 %v590, %v589
  %v818 = vpack.c.b16 %v592, %v591
  %v819 = vpack.c.b16 %v594, %v593
  %v820 = vpack.c.b16 %v596, %v595
  %v821 = vpack.c.b16 %v598, %v597
  %v822 = vpack.c.b16 %v600, %v599
  %v823 = vpack.c.b16 %v602, %v601
  %v824 = vpack.c.b16 %v604, %v603
  %v825 = vpack.c.b16 %v606, %v605
  %v826 = vpack.c.b16 %v608, %v607
  %v827 = vpack.c.b16 %v610, %v609
  %v828 = vpack.c.b16 %v612, %v611
  %v829 = vpack.c.b16 %v614, %v613
  %v830 = vpack.c.b16 %v616, %v615
  %v831 = vpack.c.b16 %v618, %v617
  %v832 = vpack.c.b16 %v620, %v619
  %v833 = vpack.c.b16 %v622, %v621
  %v834 = vpack.c.b16 %v624, %v623
  %v835 = vpack.c.b16 %v626, %v625
  %v836 = vpack.c.b16 %v628, %v627
  %v837 = vpack.c.b16 %v630, %v629
  %v838 = vpack.c.b16 %v632, %v631
  %v839 = vpack.c.b16 %v634, %v633
  %v840 = vpack.c.b16 %v636, %v635
  %v841 = vpack.c.b16 %v638, %v637
  %v842 = vpack.c.b16 %v640, %v639
  %v843 = vpack.c.b16 %v642, %v641
  %v844 = vpack.c.b16 %v644, %v643
  %v845 = vpack.c.b16 %v646, %v645
  %v846 = vpack.c.b16 %v648, %v647
  %v847 = vpack.c.b16 %v650, %v649
  %v848 = vpack.c.b16 %v652, %v651
  %v849 = vpack.c.b16 %v654, %v653
  %v850 = vpack.c.b16 %v656, %v655
  %v851 = vpack.c.b16 %v658, %v657
  %v852 = vpack.c.b16 %v660, %v659
  %v853 = vpack.c.b16 %v662, %v661
  %v854 = vpack.c.b16 %v664, %v663
  %v855 = vpack.c.b16 %v666, %v665
  %v856 = vpack.c.b16 %v668, %v667
  %v857 = vpack.c.b16 %v670, %v669
  %v858 = vpack.c.b16 %v672, %v671
  %v859 = vpack.c.b16 %v674, %v673
  %v860 = vpack.c.b16 %v676, %v675
  %v861 = vpack.c.b16 %v678, %v677
  %v862 = vpack.c.b16 %v680, %v679
  %v863 = vpack.c.b16 %v682, %v681
  %v864 = vpack.c.b16 %v684, %v683
  %v865 = vpack.c.b16 %v686, %v685
  %v866 = vpack.c.b16 %v688, %v687
  %v867 = vpack.c.b16 %v690, %v689
  %v868 = vpack.c.b16 %v692, %v691
  %v869 = vpack.c.b16 %v694, %v693
  %v870 = vpack.c.b16 %v696, %v695
  %v871 = vpack.c.b16 %v698, %v697
  %v872 = vpack.c.b16 %v700, %v699
  %v873 = vpack.c.b16 %v702, %v701
  %v874 = vpack.c.b16 %v704, %v703
  %v875 = vpack.c.b16 %v706, %v705
  %v876 = vpack.c.b16 %v708, %v707
  %v877 = vpack.c.b16 %v710, %v709
  %v878 = vpack.c.b16 %v712, %v711
  %v879 = vpack.c.b16 %v714, %v713
  %v880 = vpack.c.b16 %v716, %v715
  %v881 = vpack.c.b16 %v718, %v717
  %v882 = vpack.c.b16 %v720, %v719
  %v883 = vpack.c.b16 %v722, %v721
  %v884 = vpack.c.b16 %v724, %v723
  %v885 = vpack.c.b16 %v726, %v725
  %v886 = vpack.c.b16 %v728, %v727
  %v887 = vpack.c.b16 %v730, %v729
  %v888 = vpack.c.b16 %v732, %v731
  %v889 = vpack.c.b16 %v734, %v733
  %v890 = vpack.c.b16 %v736, %v735
  %v891 = vpack.c.b16 %v738, %v737
  %v892 = vpack.c.b16 %v740, %v739
  %v893 = vpack.c.b16 %v742, %v741
  %v894 = vpack.c.b16 %v744, %v743
  %v895 = vpack.c.b16 %v746, %v745
  %v896 = vpack.c.b16 %v748, %v747
  %v897 = vpack.c.b16 %v750, %v749
  %v898 = vpack.c.b16 %v752, %v751
  %v899 = vpack.c.b16 %v754, %v753
  %v900 = vpack.c.b16 %v756, %v755
  %v901 = vpack.c.b16 %v758, %v757
  %v902 = vpack.c.b16 %v760, %v759
  %v903 = vpack.c.b16 %v762, %v761
  %v904 = vpack.c.b16 %v764, %v763
  %v905 = vpack.c.b16 %v766, %v765
  %v906 = vpack.c.b16 %v768, %v767
  %v907 = vpack.c.b16 %v770, %v769
  %v908 = vpack.c.b16 %v772, %v771
  %v909 = vpack.c.b16 %v774, %v773
  %v910 = vpack.c.b16 %v776, %v775
  %v911 = vpack.c.b16 %v778, %v777
  %v912 = vpack.c.b16 %v780, %v779
  %v913 = vpack.c.b16 %v782, %v781
  %v914 = vpack.c.b16 %v784, %v783
  %v915 = vpack.c.b16 %v786, %v785
  %v916 = vpack.c.b16 %v788, %v787
  %v923 = vunpack.c.l.b16 %v271
  %v924 = vunpack.c.l.b16 %v272
  %v925 = vunpack.c.l.b16 %v273
  %v926 = vunpack.c.l.b16 %v274
  %v927 = vunpack.c.l.b16 %v275
  %v928 = vunpack.c.l.b16 %v276
  %v929 = vpack.c.b16 %v924, %v923
  %v930 = vpack.c.b16 %v926, %v925
  %v931 = vpack.c.b16 %v928, %v927
  %vm935 = vcmask 392192
  %v937 = vsel %vm935, %v789, 0
  %v940 = vsel %vm935, %v790, 0
  %v943 = vsel %vm935, %v791, 0
  %v946 = vsel %vm935, %v792, 0
  %v949 = vsel %vm935, %v793, 0
  %v952 = vsel %vm935, %v794, 0
  %v955 = vsel %vm935, %v795, 0
  %v958 = vsel %vm935, %v796, 0
  %v961 = vsel %vm935, %v797, 0
  %v964 = vsel %vm935, %v798, 0
  %v967 = vsel %vm935, %v799, 0
  %v970 = vsel %vm935, %v800, 0
  %v973 = vsel %vm935, %v801, 0
  %v976 = vsel %vm935, %v802, 0
  %v979 = vsel %vm935, %v803, 0
  %v982 = vsel %vm935, %v804, 0
  %v985 = vsel %vm935, %v805, 0
  %v988 = vsel %vm935, %v806, 0
  %v991 = vsel %vm935, %v807, 0
  %v994 = vsel %vm935, %v808, 0
  %v997 = vsel %vm935, %v809, 0
  %v1000 = vsel %vm935, %v810, 0
  %v1003 = vsel %vm935, %v811, 0
  %v1006 = vsel %vm935, %v812, 0
  %v1009 = vsel %vm935, %v813, 0
  %v1012 = vsel %vm935, %v814, 0
  %v1015 = vsel %vm935, %v815, 0
  %v1018 = vsel %vm935, %v816, 0
  %v1021 = vsel %vm935, %v817, 0
  %v1024 = vsel %vm935, %v818, 0
  %v1027 = vsel %vm935, %v819, 0
  %v1030 = vsel %vm935, %v820, 0
  %v1033 = vsel %vm935, %v821, 0
  %v1036 = vsel %vm935, %v822, 0
  %v1039 = vsel %vm935, %v823, 0
  %v1042 = vsel %vm935, %v824, 0
  %v1045 = vsel %vm935, %v825, 0
  %v1048 = vsel %vm935, %v826, 0
  %v1051 = vsel %vm935, %v827, 0
  %v1054 = vsel %vm935, %v828, 0
  %v1057 = vsel %vm935, %v829, 0
  %v1060 = vsel %vm935, %v830, 0
  %v1063 = vsel %vm935, %v831, 0
  %v1066 = vsel %vm935, %v832, 0
  %v1069 = vsel %vm935, %v833, 0
  %v1072 = vsel %vm935, %v834, 0
  %v1075 = vsel %vm935, %v835, 0
  %v1078 = vsel %vm935, %v836, 0
  %v1081 = vsel %vm935, %v837, 0
  %v1084 = vsel %vm935, %v838, 0
  %v1087 = vsel %vm935, %v839, 0
  %v1090 = vsel %vm935, %v840, 0
  %v1093 = vsel %vm935, %v841, 0
  %v1096 = vsel %vm935, %v842, 0
  %v1099 = vsel %vm935, %v843, 0
  %v1102 = vsel %vm935, %v844, 0
  %v1105 = vsel %vm935, %v845, 0
  %v1108 = vsel %vm935, %v846, 0
  %v1111 = vsel %vm935, %v847, 0
  %v1114 = vsel %vm935, %v848, 0
  %v1117 = vsel %vm935, %v849, 0
  %v1120 = vsel %vm935, %v850, 0
  %v1123 = vsel %vm935, %v851, 0
  %v1126 = vsel %vm935, %v852, 0
  %v1129 = vsel %vm935, %v853, 0
  %v1132 = vsel %vm935, %v854, 0
  %v1135 = vsel %vm935, %v855, 0
  %v1138 = vsel %vm935, %v856, 0
  %v1141 = vsel %vm935, %v857, 0
  %v1144 = vsel %vm935, %v858, 0
  %v1147 = vsel %vm935, %v859, 0
  %v1150 = vsel %vm935, %v860, 0
  %v1153 = vsel %vm935, %v861, 0
  %v1156 = vsel %vm935, %v862, 0
  %v1159 = vsel %vm935, %v863, 0
  %v1162 = vsel %vm935, %v864, 0
  %v1165 = vsel %vm935, %v865, 0
  %v1168 = vsel %vm935, %v866, 0
  %v1171 = vsel %vm935, %v867, 0
  %v1174 = vsel %vm935, %v868, 0
  %v1177 = vsel %vm935, %v869, 0
  %v1180 = vsel %vm935, %v870, 0
  %v1183 = vsel %vm935, %v871, 0
  %v1186 = vsel %vm935, %v872, 0
  %v1189 = vsel %vm935, %v873, 0
  %v1192 = vsel %vm935, %v874, 0
  %v1195 = vsel %vm935, %v875, 0
  %v1198 = vsel %vm935, %v876, 0
  %v1201 = vsel %vm935, %v877, 0
  %v1204 = vsel %vm935, %v878, 0
  %v1207 = vsel %vm935, %v879, 0
  %v1210 = vsel %vm935, %v880, 0
  %v1213 = vsel %vm935, %v881, 0
  %v1216 = vsel %vm935, %v882, 0
  %v1219 = vsel %vm935, %v883, 0
  %v1222 = vsel %vm935, %v884, 0
  %v1225 = vsel %vm935, %v885, 0
  %v1228 = vsel %vm935, %v886, 0
  %v1231 = vsel %vm935, %v887, 0
  %v1234 = vsel %vm935, %v888, 0
  %v1237 = vsel %vm935, %v889, 0
  %v1240 = vsel %vm935, %v890, 0
  %v1243 = vsel %vm935, %v891, 0
  %v1246 = vsel %vm935, %v892, 0
  %v1249 = vsel %vm935, %v893, 0
  %v1252 = vsel %vm935, %v894, 0
  %v1255 = vsel %vm935, %v895, 0
  %v1258 = vsel %vm935, %v896, 0
  %v1261 = vsel %vm935, %v897, 0
  %v1264 = vsel %vm935, %v898, 0
  %v1267 = vsel %vm935, %v899, 0
  %v1270 = vsel %vm935, %v900, 0
  %v1273 = vsel %vm935, %v901, 0
  %v1276 = vsel %vm935, %v902, 0
  %v1279 = vsel %vm935, %v903, 0
  %v1282 = vsel %vm935, %v904, 0
  %v1285 = vsel %vm935, %v905, 0
  %v1288 = vsel %vm935, %v906, 0
  %v1291 = vsel %vm935, %v907, 0
  %v1294 = vsel %vm935, %v908, 0
  %v1297 = vsel %vm935, %v909, 0
  %v1300 = vsel %vm935, %v910, 0
  %v1303 = vsel %vm935, %v911, 0
  %v1306 = vsel %vm935, %v912, 0
  %v1309 = vsel %vm935, %v913, 0
  %v1312 = vsel %vm935, %v914, 0
  %v1315 = vsel %vm935, %v915, 0
  %v1318 = vsel %vm935, %v916, 0
  %1320 = vmatprep.subr.bf16.mxu0 0
  %1321 = vmatpush1.bf16.msra.mxu0 %v929
  %1322 = vmatprep.subr.bf16.mxu0 0
  %1323 = vmatpush1.bf16.msra.mxu0 %v930
  %1324 = vmatprep.subr.bf16.mxu0 0
  %1325 = vmatpush1.bf16.msra.mxu0 %v931
  %1326 = vmatprep.subr.bf16.mxu0 0
  %1327 = vmatpush1.bf16.msra.mxu0 0
  %1328 = vmatprep.subr.bf16.mxu0 0
  %1329 = vmatpush1.bf16.msra.mxu0 0
  %1330 = vmatprep.subr.bf16.mxu0 0
  %1331 = vmatpush1.bf16.msra.mxu0 0
  %1332 = vmatprep.subr.bf16.mxu0 0
  %1333 = vmatpush1.bf16.msra.mxu0 0
  %1334 = vmatprep.subr.bf16.mxu0 0
  %1335 = vmatpush1.bf16.msra.mxu0 0
  %1336 = vmatprep.subr.bf16.mxu0 0
  %1337 = vmatpush1.bf16.msra.mxu0 0
  %1338 = vmatprep.subr.bf16.mxu0 0
  %1339 = vmatpush1.bf16.msra.mxu0 0
  %1340 = vmatprep.subr.bf16.mxu0 0
  %1341 = vmatpush1.bf16.msra.mxu0 0
  %1342 = vmatprep.subr.bf16.mxu0 0
  %1343 = vmatpush1.bf16.msra.mxu0 0
  %1344 = vmatprep.subr.bf16.mxu0 0
  %1345 = vmatpush1.bf16.msra.mxu0 0
  %1346 = vmatprep.subr.bf16.mxu0 0
  %1347 = vmatpush1.bf16.msra.mxu0 0
  %1348 = vmatprep.subr.bf16.mxu0 0
  %1349 = vmatpush1.bf16.msra.mxu0 0
  %1350 = vmatprep.subr.bf16.mxu0 0
  %1351 = vmatpush1.bf16.msra.mxu0 0
  %1352 = vmatprep.mubr.bf16.mxu0 0
  %1353 = vmatmul.mubr.bf16.gmra.mrb[0].mxu0 %v937
  %v1354 = vpop.f32.mrb[0].mxu0
  %v1355 = vadd.f32 0.0, %v1354
  %v1356 = vpop.f32.mrb[0].mxu0
  %v1357 = vpop.f32.mrb[0].mxu0
  %v1358 = vadd.f32 0.0, %v1357
  %v1359 = vpop.f32.mrb[0].mxu0
  %1360 = vmatprep.mubr.bf16.mxu0 0
  %1361 = vmatmul.mubr.bf16.gmra.mrb[0].mxu0 %v940
  %v1362 = vpop.f32.mrb[0].mxu0
  %v1363 = vadd.f32 0.0, %v1362
  %v1364 = vpop.f32.mrb[0].mxu0
  %v1365 = vpop.f32.mrb[0].mxu0
  %v1366 = vadd.f32 0.0, %v1365
  %v1367 = vpop.f32.mrb[0].mxu0
  %1368 = vmatprep.mubr.bf16.mxu0 0
  %1369 = vmatmul.mubr.bf16.gmra.mrb[0].mxu0 %v943
  %v1370 = vpop.f32.mrb[0].mxu0
  %v1371 = vadd.f32 0.0, %v1370
  %v1372 = vpop.f32.mrb[0].mxu0
  %v1373 = vpop.f32.mrb[0].mxu0
  %v1374 = vadd.f32 0.0, %v1373
  %v1375 = vpop.f32.mrb[0].mxu0
  %1376 = vmatprep.mubr.bf16.mxu0 0
  %1377 = vmatmul.mubr.bf16.gmra.mrb[0].mxu0 %v946
  %v1378 = vpop.f32.mrb[0].mxu0
  %v1379 = vadd.f32 0.0, %v1378
  %v1380 = vpop.f32.mrb[0].mxu0
  %v1381 = vpop.f32.mrb[0].mxu0
  %v1382 = vadd.f32 0.0, %v1381
  %v1383 = vpop.f32.mrb[0].mxu0
  %1384 = vmatprep.mubr.bf16.mxu0 0
  %1385 = vmatmul.mubr.bf16.gmra.mrb[0].mxu0 %v949
  %v1386 = vpop.f32.mrb[0].mxu0
  %v1387 = vadd.f32 0.0, %v1386
  %v1388 = vpop.f32.mrb[0].mxu0
  %v1389 = vpop.f32.mrb[0].mxu0
  %v1390 = vadd.f32 0.0, %v1389
  %v1391 = vpop.f32.mrb[0].mxu0
  %1392 = vmatprep.mubr.bf16.mxu0 0
  %1393 = vmatmul.mubr.bf16.gmra.mrb[0].mxu0 %v952
  %v1394 = vpop.f32.mrb[0].mxu0
  %v1395 = vadd.f32 0.0, %v1394
  %v1396 = vpop.f32.mrb[0].mxu0
  %v1397 = vpop.f32.mrb[0].mxu0
  %v1398 = vadd.f32 0.0, %v1397
  %v1399 = vpop.f32.mrb[0].mxu0
  %1400 = vmatprep.mubr.bf16.mxu0 0
  %1401 = vmatmul.mubr.bf16.gmra.mrb[0].mxu0 %v955
  %v1402 = vpop.f32.mrb[0].mxu0
  %v1403 = vadd.f32 0.0, %v1402
  %v1404 = vpop.f32.mrb[0].mxu0
  %v1405 = vpop.f32.mrb[0].mxu0
  %v1406 = vadd.f32 0.0, %v1405
  %v1407 = vpop.f32.mrb[0].mxu0
  %1408 = vmatprep.mubr.bf16.mxu0 0
  %1409 = vmatmul.mubr.bf16.gmra.mrb[0].mxu0 %v958
  %v1410 = vpop.f32.mrb[0].mxu0
  %v1411 = vadd.f32 0.0, %v1410
  %v1412 = vpop.f32.mrb[0].mxu0
  %v1413 = vpop.f32.mrb[0].mxu0
  %v1414 = vadd.f32 0.0, %v1413
  %v1415 = vpop.f32.mrb[0].mxu0
  %1416 = vmatprep.mubr.bf16.mxu0 0
  %1417 = vmatmul.mubr.bf16.gmra.mrb[0].mxu0 %v961
  %v1418 = vpop.f32.mrb[0].mxu0
  %v1419 = vadd.f32 0.0, %v1418
  %v1420 = vpop.f32.mrb[0].mxu0
  %v1421 = vpop.f32.mrb[0].mxu0
  %v1422 = vadd.f32 0.0, %v1421
  %v1423 = vpop.f32.mrb[0].mxu0
  %1424 = vmatprep.mubr.bf16.mxu0 0
  %1425 = vmatmul.mubr.bf16.gmra.mrb[0].mxu0 %v964
  %v1426 = vpop.f32.mrb[0].mxu0
  %v1427 = vadd.f32 0.0, %v1426
  %v1428 = vpop.f32.mrb[0].mxu0
  %v1429 = vpop.f32.mrb[0].mxu0
  %v1430 = vadd.f32 0.0, %v1429
  %v1431 = vpop.f32.mrb[0].mxu0
  %1432 = vmatprep.mubr.bf16.mxu0 0
  %1433 = vmatmul.mubr.bf16.gmra.mrb[0].mxu0 %v967
  %v1434 = vpop.f32.mrb[0].mxu0
  %v1435 = vadd.f32 0.0, %v1434
  %v1436 = vpop.f32.mrb[0].mxu0
  %v1437 = vpop.f32.mrb[0].mxu0
  %v1438 = vadd.f32 0.0, %v1437
  %v1439 = vpop.f32.mrb[0].mxu0
  %1440 = vmatprep.mubr.bf16.mxu0 0
  %1441 = vmatmul.mubr.bf16.gmra.mrb[0].mxu0 %v970
  %v1442 = vpop.f32.mrb[0].mxu0
  %v1443 = vadd.f32 0.0, %v1442
  %v1444 = vpop.f32.mrb[0].mxu0
  %v1445 = vpop.f32.mrb[0].mxu0
  %v1446 = vadd.f32 0.0, %v1445
  %v1447 = vpop.f32.mrb[0].mxu0
  %1448 = vmatprep.mubr.bf16.mxu0 0
  %1449 = vmatmul.mubr.bf16.gmra.mrb[0].mxu0 %v973
  %v1450 = vpop.f32.mrb[0].mxu0
  %v1451 = vadd.f32 0.0, %v1450
  %v1452 = vpop.f32.mrb[0].mxu0
  %v1453 = vpop.f32.mrb[0].mxu0
  %v1454 = vadd.f32 0.0, %v1453
  %v1455 = vpop.f32.mrb[0].mxu0
  %1456 = vmatprep.mubr.bf16.mxu0 0
  %1457 = vmatmul.mubr.bf16.gmra.mrb[0].mxu0 %v976
  %v1458 = vpop.f32.mrb[0].mxu0
  %v1459 = vadd.f32 0.0, %v1458
  %v1460 = vpop.f32.mrb[0].mxu0
  %v1461 = vpop.f32.mrb[0].mxu0
  %v1462 = vadd.f32 0.0, %v1461
  %v1463 = vpop.f32.mrb[0].mxu0
  %1464 = vmatprep.mubr.bf16.mxu0 0
  %1465 = vmatmul.mubr.bf16.gmra.mrb[0].mxu0 %v979
  %v1466 = vpop.f32.mrb[0].mxu0
  %v1467 = vadd.f32 0.0, %v1466
  %v1468 = vpop.f32.mrb[0].mxu0
  %v1469 = vpop.f32.mrb[0].mxu0
  %v1470 = vadd.f32 0.0, %v1469
  %v1471 = vpop.f32.mrb[0].mxu0
  %1472 = vmatprep.mubr.bf16.mxu0 0
  %1473 = vmatmul.mubr.bf16.gmra.mrb[0].mxu0 %v982
  %v1474 = vpop.f32.mrb[0].mxu0
  %v1475 = vadd.f32 0.0, %v1474
  %v1476 = vpop.f32.mrb[0].mxu0
  %v1477 = vpop.f32.mrb[0].mxu0
  %v1478 = vadd.f32 0.0, %v1477
  %v1479 = vpop.f32.mrb[0].mxu0
  %1480 = vmatprep.mubr.bf16.mxu0 0
  %1481 = vmatmul.mubr.bf16.gmra.mrb[0].mxu0 %v985
  %v1482 = vpop.f32.mrb[0].mxu0
  %v1483 = vadd.f32 0.0, %v1482
  %v1484 = vpop.f32.mrb[0].mxu0
  %v1485 = vpop.f32.mrb[0].mxu0
  %v1486 = vadd.f32 0.0, %v1485
  %v1487 = vpop.f32.mrb[0].mxu0
  %1488 = vmatprep.mubr.bf16.mxu0 0
  %1489 = vmatmul.mubr.bf16.gmra.mrb[0].mxu0 %v988
  %v1490 = vpop.f32.mrb[0].mxu0
  %v1491 = vadd.f32 0.0, %v1490
  %v1492 = vpop.f32.mrb[0].mxu0
  %v1493 = vpop.f32.mrb[0].mxu0
  %v1494 = vadd.f32 0.0, %v1493
  %v1495 = vpop.f32.mrb[0].mxu0
  %1496 = vmatprep.mubr.bf16.mxu0 0
  %1497 = vmatmul.mubr.bf16.gmra.mrb[0].mxu0 %v991
  %v1498 = vpop.f32.mrb[0].mxu0
  %v1499 = vadd.f32 0.0, %v1498
  %v1500 = vpop.f32.mrb[0].mxu0
  %v1501 = vpop.f32.mrb[0].mxu0
  %v1502 = vadd.f32 0.0, %v1501
  %v1503 = vpop.f32.mrb[0].mxu0
  %1504 = vmatprep.mubr.bf16.mxu0 0
  %1505 = vmatmul.mubr.bf16.gmra.mrb[0].mxu0 %v994
  %v1506 = vpop.f32.mrb[0].mxu0
  %v1507 = vadd.f32 0.0, %v1506
  %v1508 = vpop.f32.mrb[0].mxu0
  %v1509 = vpop.f32.mrb[0].mxu0
  %v1510 = vadd.f32 0.0, %v1509
  %v1511 = vpop.f32.mrb[0].mxu0
  %1512 = vmatprep.mubr.bf16.mxu0 0
  %1513 = vmatmul.mubr.bf16.gmra.mrb[0].mxu0 %v997
  %v1514 = vpop.f32.mrb[0].mxu0
  %v1515 = vadd.f32 0.0, %v1514
  %v1516 = vpop.f32.mrb[0].mxu0
  %v1517 = vpop.f32.mrb[0].mxu0
  %v1518 = vadd.f32 0.0, %v1517
  %v1519 = vpop.f32.mrb[0].mxu0
  %1520 = vmatprep.mubr.bf16.mxu0 0
  %1521 = vmatmul.mubr.bf16.gmra.mrb[0].mxu0 %v1000
  %v1522 = vpop.f32.mrb[0].mxu0
  %v1523 = vadd.f32 0.0, %v1522
  %v1524 = vpop.f32.mrb[0].mxu0
  %v1525 = vpop.f32.mrb[0].mxu0
  %v1526 = vadd.f32 0.0, %v1525
  %v1527 = vpop.f32.mrb[0].mxu0
  %1528 = vmatprep.mubr.bf16.mxu0 0
  %1529 = vmatmul.mubr.bf16.gmra.mrb[0].mxu0 %v1003
  %v1530 = vpop.f32.mrb[0].mxu0
  %v1531 = vadd.f32 0.0, %v1530
  %v1532 = vpop.f32.mrb[0].mxu0
  %v1533 = vpop.f32.mrb[0].mxu0
  %v1534 = vadd.f32 0.0, %v1533
  %v1535 = vpop.f32.mrb[0].mxu0
  %1536 = vmatprep.mubr.bf16.mxu0 0
  %1537 = vmatmul.mubr.bf16.gmra.mrb[0].mxu0 %v1006
  %v1538 = vpop.f32.mrb[0].mxu0
  %v1539 = vadd.f32 0.0, %v1538
  %v1540 = vpop.f32.mrb[0].mxu0
  %v1541 = vpop.f32.mrb[0].mxu0
  %v1542 = vadd.f32 0.0, %v1541
  %v1543 = vpop.f32.mrb[0].mxu0
  %1544 = vmatprep.mubr.bf16.mxu0 0
  %1545 = vmatmul.mubr.bf16.gmra.mrb[0].mxu0 %v1009
  %v1546 = vpop.f32.mrb[0].mxu0
  %v1547 = vadd.f32 0.0, %v1546
  %v1548 = vpop.f32.mrb[0].mxu0
  %v1549 = vpop.f32.mrb[0].mxu0
  %v1550 = vadd.f32 0.0, %v1549
  %v1551 = vpop.f32.mrb[0].mxu0
  %1552 = vmatprep.mubr.bf16.mxu0 0
  %1553 = vmatmul.mubr.bf16.gmra.mrb[0].mxu0 %v1012
  %v1554 = vpop.f32.mrb[0].mxu0
  %v1555 = vadd.f32 0.0, %v1554
  %v1556 = vpop.f32.mrb[0].mxu0
  %v1557 = vpop.f32.mrb[0].mxu0
  %v1558 = vadd.f32 0.0, %v1557
  %v1559 = vpop.f32.mrb[0].mxu0
  %1560 = vmatprep.mubr.bf16.mxu0 0
  %1561 = vmatmul.mubr.bf16.gmra.mrb[0].mxu0 %v1015
  %v1562 = vpop.f32.mrb[0].mxu0
  %v1563 = vadd.f32 0.0, %v1562
  %v1564 = vpop.f32.mrb[0].mxu0
  %v1565 = vpop.f32.mrb[0].mxu0
  %v1566 = vadd.f32 0.0, %v1565
  %v1567 = vpop.f32.mrb[0].mxu0
  %1568 = vmatprep.mubr.bf16.mxu0 0
  %1569 = vmatmul.mubr.bf16.gmra.mrb[0].mxu0 %v1018
  %v1570 = vpop.f32.mrb[0].mxu0
  %v1571 = vadd.f32 0.0, %v1570
  %v1572 = vpop.f32.mrb[0].mxu0
  %v1573 = vpop.f32.mrb[0].mxu0
  %v1574 = vadd.f32 0.0, %v1573
  %v1575 = vpop.f32.mrb[0].mxu0
  %1576 = vmatprep.mubr.bf16.mxu0 0
  %1577 = vmatmul.mubr.bf16.gmra.mrb[0].mxu0 %v1021
  %v1578 = vpop.f32.mrb[0].mxu0
  %v1579 = vadd.f32 0.0, %v1578
  %v1580 = vpop.f32.mrb[0].mxu0
  %v1581 = vpop.f32.mrb[0].mxu0
  %v1582 = vadd.f32 0.0, %v1581
  %v1583 = vpop.f32.mrb[0].mxu0
  %1584 = vmatprep.mubr.bf16.mxu0 0
  %1585 = vmatmul.mubr.bf16.gmra.mrb[0].mxu0 %v1024
  %v1586 = vpop.f32.mrb[0].mxu0
  %v1587 = vadd.f32 0.0, %v1586
  %v1588 = vpop.f32.mrb[0].mxu0
  %v1589 = vpop.f32.mrb[0].mxu0
  %v1590 = vadd.f32 0.0, %v1589
  %v1591 = vpop.f32.mrb[0].mxu0
  %1592 = vmatprep.mubr.bf16.mxu0 0
  %1593 = vmatmul.mubr.bf16.gmra.mrb[0].mxu0 %v1027
  %v1594 = vpop.f32.mrb[0].mxu0
  %v1595 = vadd.f32 0.0, %v1594
  %v1596 = vpop.f32.mrb[0].mxu0
  %v1597 = vpop.f32.mrb[0].mxu0
  %v1598 = vadd.f32 0.0, %v1597
  %v1599 = vpop.f32.mrb[0].mxu0
  %1600 = vmatprep.mubr.bf16.mxu0 0
  %1601 = vmatmul.mubr.bf16.gmra.mrb[0].mxu0 %v1030
  %v1602 = vpop.f32.mrb[0].mxu0
  %v1603 = vadd.f32 0.0, %v1602
  %v1604 = vpop.f32.mrb[0].mxu0
  %v1605 = vpop.f32.mrb[0].mxu0
  %v1606 = vadd.f32 0.0, %v1605
  %v1607 = vpop.f32.mrb[0].mxu0
  %1608 = vmatprep.mubr.bf16.mxu0 0
  %1609 = vmatmul.mubr.bf16.gmra.mrb[0].mxu0 %v1033
  %v1610 = vpop.f32.mrb[0].mxu0
  %v1611 = vadd.f32 0.0, %v1610
  %v1612 = vpop.f32.mrb[0].mxu0
  %v1613 = vpop.f32.mrb[0].mxu0
  %v1614 = vadd.f32 0.0, %v1613
  %v1615 = vpop.f32.mrb[0].mxu0
  %1616 = vmatprep.mubr.bf16.mxu0 0
  %1617 = vmatmul.mubr.bf16.gmra.mrb[0].mxu0 %v1036
  %v1618 = vpop.f32.mrb[0].mxu0
  %v1619 = vadd.f32 0.0, %v1618
  %v1620 = vpop.f32.mrb[0].mxu0
  %v1621 = vpop.f32.mrb[0].mxu0
  %v1622 = vadd.f32 0.0, %v1621
  %v1623 = vpop.f32.mrb[0].mxu0
  %1624 = vmatprep.mubr.bf16.mxu0 0
  %1625 = vmatmul.mubr.bf16.gmra.mrb[0].mxu0 %v1039
  %v1626 = vpop.f32.mrb[0].mxu0
  %v1627 = vadd.f32 0.0, %v1626
  %v1628 = vpop.f32.mrb[0].mxu0
  %v1629 = vpop.f32.mrb[0].mxu0
  %v1630 = vadd.f32 0.0, %v1629
  %v1631 = vpop.f32.mrb[0].mxu0
  %1632 = vmatprep.mubr.bf16.mxu0 0
  %1633 = vmatmul.mubr.bf16.gmra.mrb[0].mxu0 %v1042
  %v1634 = vpop.f32.mrb[0].mxu0
  %v1635 = vadd.f32 0.0, %v1634
  %v1636 = vpop.f32.mrb[0].mxu0
  %v1637 = vpop.f32.mrb[0].mxu0
  %v1638 = vadd.f32 0.0, %v1637
  %v1639 = vpop.f32.mrb[0].mxu0
  %1640 = vmatprep.mubr.bf16.mxu0 0
  %1641 = vmatmul.mubr.bf16.gmra.mrb[0].mxu0 %v1045
  %v1642 = vpop.f32.mrb[0].mxu0
  %v1643 = vadd.f32 0.0, %v1642
  %v1644 = vpop.f32.mrb[0].mxu0
  %v1645 = vpop.f32.mrb[0].mxu0
  %v1646 = vadd.f32 0.0, %v1645
  %v1647 = vpop.f32.mrb[0].mxu0
  %1648 = vmatprep.mubr.bf16.mxu0 0
  %1649 = vmatmul.mubr.bf16.gmra.mrb[0].mxu0 %v1048
  %v1650 = vpop.f32.mrb[0].mxu0
  %v1651 = vadd.f32 0.0, %v1650
  %v1652 = vpop.f32.mrb[0].mxu0
  %v1653 = vpop.f32.mrb[0].mxu0
  %v1654 = vadd.f32 0.0, %v1653
  %v1655 = vpop.f32.mrb[0].mxu0
  %1656 = vmatprep.mubr.bf16.mxu0 0
  %1657 = vmatmul.mubr.bf16.gmra.mrb[0].mxu0 %v1051
  %v1658 = vpop.f32.mrb[0].mxu0
  %v1659 = vadd.f32 0.0, %v1658
  %v1660 = vpop.f32.mrb[0].mxu0
  %v1661 = vpop.f32.mrb[0].mxu0
  %v1662 = vadd.f32 0.0, %v1661
  %v1663 = vpop.f32.mrb[0].mxu0
  %1664 = vmatprep.mubr.bf16.mxu0 0
  %1665 = vmatmul.mubr.bf16.gmra.mrb[0].mxu0 %v1054
  %v1666 = vpop.f32.mrb[0].mxu0
  %v1667 = vadd.f32 0.0, %v1666
  %v1668 = vpop.f32.mrb[0].mxu0
  %v1669 = vpop.f32.mrb[0].mxu0
  %v1670 = vadd.f32 0.0, %v1669
  %v1671 = vpop.f32.mrb[0].mxu0
  %1672 = vmatprep.mubr.bf16.mxu0 0
  %1673 = vmatmul.mubr.bf16.gmra.mrb[0].mxu0 %v1057
  %v1674 = vpop.f32.mrb[0].mxu0
  %v1675 = vadd.f32 0.0, %v1674
  %v1676 = vpop.f32.mrb[0].mxu0
  %v1677 = vpop.f32.mrb[0].mxu0
  %v1678 = vadd.f32 0.0, %v1677
  %v1679 = vpop.f32.mrb[0].mxu0
  %1680 = vmatprep.mubr.bf16.mxu0 0
  %1681 = vmatmul.mubr.bf16.gmra.mrb[0].mxu0 %v1060
  %v1682 = vpop.f32.mrb[0].mxu0
  %v1683 = vadd.f32 0.0, %v1682
  %v1684 = vpop.f32.mrb[0].mxu0
  %v1685 = vpop.f32.mrb[0].mxu0
  %v1686 = vadd.f32 0.0, %v1685
  %v1687 = vpop.f32.mrb[0].mxu0
  %1688 = vmatprep.mubr.bf16.mxu0 0
  %1689 = vmatmul.mubr.bf16.gmra.mrb[0].mxu0 %v1063
  %v1690 = vpop.f32.mrb[0].mxu0
  %v1691 = vadd.f32 0.0, %v1690
  %v1692 = vpop.f32.mrb[0].mxu0
  %v1693 = vpop.f32.mrb[0].mxu0
  %v1694 = vadd.f32 0.0, %v1693
  %v1695 = vpop.f32.mrb[0].mxu0
  %1696 = vmatprep.mubr.bf16.mxu0 0
  %1697 = vmatmul.mubr.bf16.gmra.mrb[0].mxu0 %v1066
  %v1698 = vpop.f32.mrb[0].mxu0
  %v1699 = vadd.f32 0.0, %v1698
  %v1700 = vpop.f32.mrb[0].mxu0
  %v1701 = vpop.f32.mrb[0].mxu0
  %v1702 = vadd.f32 0.0, %v1701
  %v1703 = vpop.f32.mrb[0].mxu0
  %1704 = vmatprep.mubr.bf16.mxu0 0
  %1705 = vmatmul.mubr.bf16.gmra.mrb[0].mxu0 %v1069
  %v1706 = vpop.f32.mrb[0].mxu0
  %v1707 = vadd.f32 0.0, %v1706
  %v1708 = vpop.f32.mrb[0].mxu0
  %v1709 = vpop.f32.mrb[0].mxu0
  %v1710 = vadd.f32 0.0, %v1709
  %v1711 = vpop.f32.mrb[0].mxu0
  %1712 = vmatprep.mubr.bf16.mxu0 0
  %1713 = vmatmul.mubr.bf16.gmra.mrb[0].mxu0 %v1072
  %v1714 = vpop.f32.mrb[0].mxu0
  %v1715 = vadd.f32 0.0, %v1714
  %v1716 = vpop.f32.mrb[0].mxu0
  %v1717 = vpop.f32.mrb[0].mxu0
  %v1718 = vadd.f32 0.0, %v1717
  %v1719 = vpop.f32.mrb[0].mxu0
  %1720 = vmatprep.mubr.bf16.mxu0 0
  %1721 = vmatmul.mubr.bf16.gmra.mrb[0].mxu0 %v1075
  %v1722 = vpop.f32.mrb[0].mxu0
  %v1723 = vadd.f32 0.0, %v1722
  %v1724 = vpop.f32.mrb[0].mxu0
  %v1725 = vpop.f32.mrb[0].mxu0
  %v1726 = vadd.f32 0.0, %v1725
  %v1727 = vpop.f32.mrb[0].mxu0
  %1728 = vmatprep.mubr.bf16.mxu0 0
  %1729 = vmatmul.mubr.bf16.gmra.mrb[0].mxu0 %v1078
  %v1730 = vpop.f32.mrb[0].mxu0
  %v1731 = vadd.f32 0.0, %v1730
  %v1732 = vpop.f32.mrb[0].mxu0
  %v1733 = vpop.f32.mrb[0].mxu0
  %v1734 = vadd.f32 0.0, %v1733
  %v1735 = vpop.f32.mrb[0].mxu0
  %1736 = vmatprep.mubr.bf16.mxu0 0
  %1737 = vmatmul.mubr.bf16.gmra.mrb[0].mxu0 %v1081
  %v1738 = vpop.f32.mrb[0].mxu0
  %v1739 = vadd.f32 0.0, %v1738
  %v1740 = vpop.f32.mrb[0].mxu0
  %v1741 = vpop.f32.mrb[0].mxu0
  %v1742 = vadd.f32 0.0, %v1741
  %v1743 = vpop.f32.mrb[0].mxu0
  %1744 = vmatprep.mubr.bf16.mxu0 0
  %1745 = vmatmul.mubr.bf16.gmra.mrb[0].mxu0 %v1084
  %v1746 = vpop.f32.mrb[0].mxu0
  %v1747 = vadd.f32 0.0, %v1746
  %v1748 = vpop.f32.mrb[0].mxu0
  %v1749 = vpop.f32.mrb[0].mxu0
  %v1750 = vadd.f32 0.0, %v1749
  %v1751 = vpop.f32.mrb[0].mxu0
  %1752 = vmatprep.mubr.bf16.mxu0 0
  %1753 = vmatmul.mubr.bf16.gmra.mrb[0].mxu0 %v1087
  %v1754 = vpop.f32.mrb[0].mxu0
  %v1755 = vadd.f32 0.0, %v1754
  %v1756 = vpop.f32.mrb[0].mxu0
  %v1757 = vpop.f32.mrb[0].mxu0
  %v1758 = vadd.f32 0.0, %v1757
  %v1759 = vpop.f32.mrb[0].mxu0
  %1760 = vmatprep.mubr.bf16.mxu0 0
  %1761 = vmatmul.mubr.bf16.gmra.mrb[0].mxu0 %v1090
  %v1762 = vpop.f32.mrb[0].mxu0
  %v1763 = vadd.f32 0.0, %v1762
  %v1764 = vpop.f32.mrb[0].mxu0
  %v1765 = vpop.f32.mrb[0].mxu0
  %v1766 = vadd.f32 0.0, %v1765
  %v1767 = vpop.f32.mrb[0].mxu0
  %1768 = vmatprep.mubr.bf16.mxu0 0
  %1769 = vmatmul.mubr.bf16.gmra.mrb[0].mxu0 %v1093
  %v1770 = vpop.f32.mrb[0].mxu0
  %v1771 = vadd.f32 0.0, %v1770
  %v1772 = vpop.f32.mrb[0].mxu0
  %v1773 = vpop.f32.mrb[0].mxu0
  %v1774 = vadd.f32 0.0, %v1773
  %v1775 = vpop.f32.mrb[0].mxu0
  %1776 = vmatprep.mubr.bf16.mxu0 0
  %1777 = vmatmul.mubr.bf16.gmra.mrb[0].mxu0 %v1096
  %v1778 = vpop.f32.mrb[0].mxu0
  %v1779 = vadd.f32 0.0, %v1778
  %v1780 = vpop.f32.mrb[0].mxu0
  %v1781 = vpop.f32.mrb[0].mxu0
  %v1782 = vadd.f32 0.0, %v1781
  %v1783 = vpop.f32.mrb[0].mxu0
  %1784 = vmatprep.mubr.bf16.mxu0 0
  %1785 = vmatmul.mubr.bf16.gmra.mrb[0].mxu0 %v1099
  %v1786 = vpop.f32.mrb[0].mxu0
  %v1787 = vadd.f32 0.0, %v1786
  %v1788 = vpop.f32.mrb[0].mxu0
  %v1789 = vpop.f32.mrb[0].mxu0
  %v1790 = vadd.f32 0.0, %v1789
  %v1791 = vpop.f32.mrb[0].mxu0
  %1792 = vmatprep.mubr.bf16.mxu0 0
  %1793 = vmatmul.mubr.bf16.gmra.mrb[0].mxu0 %v1102
  %v1794 = vpop.f32.mrb[0].mxu0
  %v1795 = vadd.f32 0.0, %v1794
  %v1796 = vpop.f32.mrb[0].mxu0
  %v1797 = vpop.f32.mrb[0].mxu0
  %v1798 = vadd.f32 0.0, %v1797
  %v1799 = vpop.f32.mrb[0].mxu0
  %1800 = vmatprep.mubr.bf16.mxu0 0
  %1801 = vmatmul.mubr.bf16.gmra.mrb[0].mxu0 %v1105
  %v1802 = vpop.f32.mrb[0].mxu0
  %v1803 = vadd.f32 0.0, %v1802
  %v1804 = vpop.f32.mrb[0].mxu0
  %v1805 = vpop.f32.mrb[0].mxu0
  %v1806 = vadd.f32 0.0, %v1805
  %v1807 = vpop.f32.mrb[0].mxu0
  %1808 = vmatprep.mubr.bf16.mxu0 0
  %1809 = vmatmul.mubr.bf16.gmra.mrb[0].mxu0 %v1108
  %v1810 = vpop.f32.mrb[0].mxu0
  %v1811 = vadd.f32 0.0, %v1810
  %v1812 = vpop.f32.mrb[0].mxu0
  %v1813 = vpop.f32.mrb[0].mxu0
  %v1814 = vadd.f32 0.0, %v1813
  %v1815 = vpop.f32.mrb[0].mxu0
  %1816 = vmatprep.mubr.bf16.mxu0 0
  %1817 = vmatmul.mubr.bf16.gmra.mrb[0].mxu0 %v1111
  %v1818 = vpop.f32.mrb[0].mxu0
  %v1819 = vadd.f32 0.0, %v1818
  %v1820 = vpop.f32.mrb[0].mxu0
  %v1821 = vpop.f32.mrb[0].mxu0
  %v1822 = vadd.f32 0.0, %v1821
  %v1823 = vpop.f32.mrb[0].mxu0
  %1824 = vmatprep.mubr.bf16.mxu0 0
  %1825 = vmatmul.mubr.bf16.gmra.mrb[0].mxu0 %v1114
  %v1826 = vpop.f32.mrb[0].mxu0
  %v1827 = vadd.f32 0.0, %v1826
  %v1828 = vpop.f32.mrb[0].mxu0
  %v1829 = vpop.f32.mrb[0].mxu0
  %v1830 = vadd.f32 0.0, %v1829
  %v1831 = vpop.f32.mrb[0].mxu0
  %1832 = vmatprep.mubr.bf16.mxu0 0
  %1833 = vmatmul.mubr.bf16.gmra.mrb[0].mxu0 %v1117
  %v1834 = vpop.f32.mrb[0].mxu0
  %v1835 = vadd.f32 0.0, %v1834
  %v1836 = vpop.f32.mrb[0].mxu0
  %v1837 = vpop.f32.mrb[0].mxu0
  %v1838 = vadd.f32 0.0, %v1837
  %v1839 = vpop.f32.mrb[0].mxu0
  %1840 = vmatprep.mubr.bf16.mxu0 0
  %1841 = vmatmul.mubr.bf16.gmra.mrb[0].mxu0 %v1120
  %v1842 = vpop.f32.mrb[0].mxu0
  %v1843 = vadd.f32 0.0, %v1842
  %v1844 = vpop.f32.mrb[0].mxu0
  %v1845 = vpop.f32.mrb[0].mxu0
  %v1846 = vadd.f32 0.0, %v1845
  %v1847 = vpop.f32.mrb[0].mxu0
  %1848 = vmatprep.mubr.bf16.mxu0 0
  %1849 = vmatmul.mubr.bf16.gmra.mrb[0].mxu0 %v1123
  %v1850 = vpop.f32.mrb[0].mxu0
  %v1851 = vadd.f32 0.0, %v1850
  %v1852 = vpop.f32.mrb[0].mxu0
  %v1853 = vpop.f32.mrb[0].mxu0
  %v1854 = vadd.f32 0.0, %v1853
  %v1855 = vpop.f32.mrb[0].mxu0
  %1856 = vmatprep.mubr.bf16.mxu0 0
  %1857 = vmatmul.mubr.bf16.gmra.mrb[0].mxu0 %v1126
  %v1858 = vpop.f32.mrb[0].mxu0
  %v1859 = vadd.f32 0.0, %v1858
  %v1860 = vpop.f32.mrb[0].mxu0
  %v1861 = vpop.f32.mrb[0].mxu0
  %v1862 = vadd.f32 0.0, %v1861
  %v1863 = vpop.f32.mrb[0].mxu0
  %1864 = vmatprep.mubr.bf16.mxu0 0
  %1865 = vmatmul.mubr.bf16.gmra.mrb[0].mxu0 %v1129
  %v1866 = vpop.f32.mrb[0].mxu0
  %v1867 = vadd.f32 0.0, %v1866
  %v1868 = vpop.f32.mrb[0].mxu0
  %v1869 = vpop.f32.mrb[0].mxu0
  %v1870 = vadd.f32 0.0, %v1869
  %v1871 = vpop.f32.mrb[0].mxu0
  %1872 = vmatprep.mubr.bf16.mxu0 0
  %1873 = vmatmul.mubr.bf16.gmra.mrb[0].mxu0 %v1132
  %v1874 = vpop.f32.mrb[0].mxu0
  %v1875 = vadd.f32 0.0, %v1874
  %v1876 = vpop.f32.mrb[0].mxu0
  %v1877 = vpop.f32.mrb[0].mxu0
  %v1878 = vadd.f32 0.0, %v1877
  %v1879 = vpop.f32.mrb[0].mxu0
  %1880 = vmatprep.mubr.bf16.mxu0 0
  %1881 = vmatmul.mubr.bf16.gmra.mrb[0].mxu0 %v1135
  %v1882 = vpop.f32.mrb[0].mxu0
  %v1883 = vadd.f32 0.0, %v1882
  %v1884 = vpop.f32.mrb[0].mxu0
  %v1885 = vpop.f32.mrb[0].mxu0
  %v1886 = vadd.f32 0.0, %v1885
  %v1887 = vpop.f32.mrb[0].mxu0
  %1888 = vmatprep.mubr.bf16.mxu0 0
  %1889 = vmatmul.mubr.bf16.gmra.mrb[0].mxu0 %v1138
  %v1890 = vpop.f32.mrb[0].mxu0
  %v1891 = vadd.f32 0.0, %v1890
  %v1892 = vpop.f32.mrb[0].mxu0
  %v1893 = vpop.f32.mrb[0].mxu0
  %v1894 = vadd.f32 0.0, %v1893
  %v1895 = vpop.f32.mrb[0].mxu0
  %1896 = vmatprep.mubr.bf16.mxu0 0
  %1897 = vmatmul.mubr.bf16.gmra.mrb[0].mxu0 %v1141
  %v1898 = vpop.f32.mrb[0].mxu0
  %v1899 = vadd.f32 0.0, %v1898
  %v1900 = vpop.f32.mrb[0].mxu0
  %v1901 = vpop.f32.mrb[0].mxu0
  %v1902 = vadd.f32 0.0, %v1901
  %v1903 = vpop.f32.mrb[0].mxu0
  %1904 = vmatprep.mubr.bf16.mxu0 0
  %1905 = vmatmul.mubr.bf16.gmra.mrb[0].mxu0 %v1144
  %v1906 = vpop.f32.mrb[0].mxu0
  %v1907 = vadd.f32 0.0, %v1906
  %v1908 = vpop.f32.mrb[0].mxu0
  %v1909 = vpop.f32.mrb[0].mxu0
  %v1910 = vadd.f32 0.0, %v1909
  %v1911 = vpop.f32.mrb[0].mxu0
  %1912 = vmatprep.mubr.bf16.mxu0 0
  %1913 = vmatmul.mubr.bf16.gmra.mrb[0].mxu0 %v1147
  %v1914 = vpop.f32.mrb[0].mxu0
  %v1915 = vadd.f32 0.0, %v1914
  %v1916 = vpop.f32.mrb[0].mxu0
  %v1917 = vpop.f32.mrb[0].mxu0
  %v1918 = vadd.f32 0.0, %v1917
  %v1919 = vpop.f32.mrb[0].mxu0
  %1920 = vmatprep.mubr.bf16.mxu0 0
  %1921 = vmatmul.mubr.bf16.gmra.mrb[0].mxu0 %v1150
  %v1922 = vpop.f32.mrb[0].mxu0
  %v1923 = vadd.f32 0.0, %v1922
  %v1924 = vpop.f32.mrb[0].mxu0
  %v1925 = vpop.f32.mrb[0].mxu0
  %v1926 = vadd.f32 0.0, %v1925
  %v1927 = vpop.f32.mrb[0].mxu0
  %1928 = vmatprep.mubr.bf16.mxu0 0
  %1929 = vmatmul.mubr.bf16.gmra.mrb[0].mxu0 %v1153
  %v1930 = vpop.f32.mrb[0].mxu0
  %v1931 = vadd.f32 0.0, %v1930
  %v1932 = vpop.f32.mrb[0].mxu0
  %v1933 = vpop.f32.mrb[0].mxu0
  %v1934 = vadd.f32 0.0, %v1933
  %v1935 = vpop.f32.mrb[0].mxu0
  %1936 = vmatprep.mubr.bf16.mxu0 0
  %1937 = vmatmul.mubr.bf16.gmra.mrb[0].mxu0 %v1156
  %v1938 = vpop.f32.mrb[0].mxu0
  %v1939 = vadd.f32 0.0, %v1938
  %v1940 = vpop.f32.mrb[0].mxu0
  %v1941 = vpop.f32.mrb[0].mxu0
  %v1942 = vadd.f32 0.0, %v1941
  %v1943 = vpop.f32.mrb[0].mxu0
  %1944 = vmatprep.mubr.bf16.mxu0 0
  %1945 = vmatmul.mubr.bf16.gmra.mrb[0].mxu0 %v1159
  %v1946 = vpop.f32.mrb[0].mxu0
  %v1947 = vadd.f32 0.0, %v1946
  %v1948 = vpop.f32.mrb[0].mxu0
  %v1949 = vpop.f32.mrb[0].mxu0
  %v1950 = vadd.f32 0.0, %v1949
  %v1951 = vpop.f32.mrb[0].mxu0
  %1952 = vmatprep.mubr.bf16.mxu0 0
  %1953 = vmatmul.mubr.bf16.gmra.mrb[0].mxu0 %v1162
  %v1954 = vpop.f32.mrb[0].mxu0
  %v1955 = vadd.f32 0.0, %v1954
  %v1956 = vpop.f32.mrb[0].mxu0
  %v1957 = vpop.f32.mrb[0].mxu0
  %v1958 = vadd.f32 0.0, %v1957
  %v1959 = vpop.f32.mrb[0].mxu0
  %1960 = vmatprep.mubr.bf16.mxu0 0
  %1961 = vmatmul.mubr.bf16.gmra.mrb[0].mxu0 %v1165
  %v1962 = vpop.f32.mrb[0].mxu0
  %v1963 = vadd.f32 0.0, %v1962
  %v1964 = vpop.f32.mrb[0].mxu0
  %v1965 = vpop.f32.mrb[0].mxu0
  %v1966 = vadd.f32 0.0, %v1965
  %v1967 = vpop.f32.mrb[0].mxu0
  %1968 = vmatprep.mubr.bf16.mxu0 0
  %1969 = vmatmul.mubr.bf16.gmra.mrb[0].mxu0 %v1168
  %v1970 = vpop.f32.mrb[0].mxu0
  %v1971 = vadd.f32 0.0, %v1970
  %v1972 = vpop.f32.mrb[0].mxu0
  %v1973 = vpop.f32.mrb[0].mxu0
  %v1974 = vadd.f32 0.0, %v1973
  %v1975 = vpop.f32.mrb[0].mxu0
  %1976 = vmatprep.mubr.bf16.mxu0 0
  %1977 = vmatmul.mubr.bf16.gmra.mrb[0].mxu0 %v1171
  %v1978 = vpop.f32.mrb[0].mxu0
  %v1979 = vadd.f32 0.0, %v1978
  %v1980 = vpop.f32.mrb[0].mxu0
  %v1981 = vpop.f32.mrb[0].mxu0
  %v1982 = vadd.f32 0.0, %v1981
  %v1983 = vpop.f32.mrb[0].mxu0
  %1984 = vmatprep.mubr.bf16.mxu0 0
  %1985 = vmatmul.mubr.bf16.gmra.mrb[0].mxu0 %v1174
  %v1986 = vpop.f32.mrb[0].mxu0
  %v1987 = vadd.f32 0.0, %v1986
  %v1988 = vpop.f32.mrb[0].mxu0
  %v1989 = vpop.f32.mrb[0].mxu0
  %v1990 = vadd.f32 0.0, %v1989
  %v1991 = vpop.f32.mrb[0].mxu0
  %1992 = vmatprep.mubr.bf16.mxu0 0
  %1993 = vmatmul.mubr.bf16.gmra.mrb[0].mxu0 %v1177
  %v1994 = vpop.f32.mrb[0].mxu0
  %v1995 = vadd.f32 0.0, %v1994
  %v1996 = vpop.f32.mrb[0].mxu0
  %v1997 = vpop.f32.mrb[0].mxu0
  %v1998 = vadd.f32 0.0, %v1997
  %v1999 = vpop.f32.mrb[0].mxu0
  %2000 = vmatprep.mubr.bf16.mxu0 0
  %2001 = vmatmul.mubr.bf16.gmra.mrb[0].mxu0 %v1180
  %v2002 = vpop.f32.mrb[0].mxu0
  %v2003 = vadd.f32 0.0, %v2002
  %v2004 = vpop.f32.mrb[0].mxu0
  %v2005 = vpop.f32.mrb[0].mxu0
  %v2006 = vadd.f32 0.0, %v2005
  %v2007 = vpop.f32.mrb[0].mxu0
  %2008 = vmatprep.mubr.bf16.mxu0 0
  %2009 = vmatmul.mubr.bf16.gmra.mrb[0].mxu0 %v1183
  %v2010 = vpop.f32.mrb[0].mxu0
  %v2011 = vadd.f32 0.0, %v2010
  %v2012 = vpop.f32.mrb[0].mxu0
  %v2013 = vpop.f32.mrb[0].mxu0
  %v2014 = vadd.f32 0.0, %v2013
  %v2015 = vpop.f32.mrb[0].mxu0
  %2016 = vmatprep.mubr.bf16.mxu0 0
  %2017 = vmatmul.mubr.bf16.gmra.mrb[0].mxu0 %v1186
  %v2018 = vpop.f32.mrb[0].mxu0
  %v2019 = vadd.f32 0.0, %v2018
  %v2020 = vpop.f32.mrb[0].mxu0
  %v2021 = vpop.f32.mrb[0].mxu0
  %v2022 = vadd.f32 0.0, %v2021
  %v2023 = vpop.f32.mrb[0].mxu0
  %2024 = vmatprep.mubr.bf16.mxu0 0
  %2025 = vmatmul.mubr.bf16.gmra.mrb[0].mxu0 %v1189
  %v2026 = vpop.f32.mrb[0].mxu0
  %v2027 = vadd.f32 0.0, %v2026
  %v2028 = vpop.f32.mrb[0].mxu0
  %v2029 = vpop.f32.mrb[0].mxu0
  %v2030 = vadd.f32 0.0, %v2029
  %v2031 = vpop.f32.mrb[0].mxu0
  %2032 = vmatprep.mubr.bf16.mxu0 0
  %2033 = vmatmul.mubr.bf16.gmra.mrb[0].mxu0 %v1192
  %v2034 = vpop.f32.mrb[0].mxu0
  %v2035 = vadd.f32 0.0, %v2034
  %v2036 = vpop.f32.mrb[0].mxu0
  %v2037 = vpop.f32.mrb[0].mxu0
  %v2038 = vadd.f32 0.0, %v2037
  %v2039 = vpop.f32.mrb[0].mxu0
  %2040 = vmatprep.mubr.bf16.mxu0 0
  %2041 = vmatmul.mubr.bf16.gmra.mrb[0].mxu0 %v1195
  %v2042 = vpop.f32.mrb[0].mxu0
  %v2043 = vadd.f32 0.0, %v2042
  %v2044 = vpop.f32.mrb[0].mxu0
  %v2045 = vpop.f32.mrb[0].mxu0
  %v2046 = vadd.f32 0.0, %v2045
  %v2047 = vpop.f32.mrb[0].mxu0
  %2048 = vmatprep.mubr.bf16.mxu0 0
  %2049 = vmatmul.mubr.bf16.gmra.mrb[0].mxu0 %v1198
  %v2050 = vpop.f32.mrb[0].mxu0
  %v2051 = vadd.f32 0.0, %v2050
  %v2052 = vpop.f32.mrb[0].mxu0
  %v2053 = vpop.f32.mrb[0].mxu0
  %v2054 = vadd.f32 0.0, %v2053
  %v2055 = vpop.f32.mrb[0].mxu0
  %2056 = vmatprep.mubr.bf16.mxu0 0
  %2057 = vmatmul.mubr.bf16.gmra.mrb[0].mxu0 %v1201
  %v2058 = vpop.f32.mrb[0].mxu0
  %v2059 = vadd.f32 0.0, %v2058
  %v2060 = vpop.f32.mrb[0].mxu0
  %v2061 = vpop.f32.mrb[0].mxu0
  %v2062 = vadd.f32 0.0, %v2061
  %v2063 = vpop.f32.mrb[0].mxu0
  %2064 = vmatprep.mubr.bf16.mxu0 0
  %2065 = vmatmul.mubr.bf16.gmra.mrb[0].mxu0 %v1204
  %v2066 = vpop.f32.mrb[0].mxu0
  %v2067 = vadd.f32 0.0, %v2066
  %v2068 = vpop.f32.mrb[0].mxu0
  %v2069 = vpop.f32.mrb[0].mxu0
  %v2070 = vadd.f32 0.0, %v2069
  %v2071 = vpop.f32.mrb[0].mxu0
  %2072 = vmatprep.mubr.bf16.mxu0 0
  %2073 = vmatmul.mubr.bf16.gmra.mrb[0].mxu0 %v1207
  %v2074 = vpop.f32.mrb[0].mxu0
  %v2075 = vadd.f32 0.0, %v2074
  %v2076 = vpop.f32.mrb[0].mxu0
  %v2077 = vpop.f32.mrb[0].mxu0
  %v2078 = vadd.f32 0.0, %v2077
  %v2079 = vpop.f32.mrb[0].mxu0
  %2080 = vmatprep.mubr.bf16.mxu0 0
  %2081 = vmatmul.mubr.bf16.gmra.mrb[0].mxu0 %v1210
  %v2082 = vpop.f32.mrb[0].mxu0
  %v2083 = vadd.f32 0.0, %v2082
  %v2084 = vpop.f32.mrb[0].mxu0
  %v2085 = vpop.f32.mrb[0].mxu0
  %v2086 = vadd.f32 0.0, %v2085
  %v2087 = vpop.f32.mrb[0].mxu0
  %2088 = vmatprep.mubr.bf16.mxu0 0
  %2089 = vmatmul.mubr.bf16.gmra.mrb[0].mxu0 %v1213
  %v2090 = vpop.f32.mrb[0].mxu0
  %v2091 = vadd.f32 0.0, %v2090
  %v2092 = vpop.f32.mrb[0].mxu0
  %v2093 = vpop.f32.mrb[0].mxu0
  %v2094 = vadd.f32 0.0, %v2093
  %v2095 = vpop.f32.mrb[0].mxu0
  %2096 = vmatprep.mubr.bf16.mxu0 0
  %2097 = vmatmul.mubr.bf16.gmra.mrb[0].mxu0 %v1216
  %v2098 = vpop.f32.mrb[0].mxu0
  %v2099 = vadd.f32 0.0, %v2098
  %v2100 = vpop.f32.mrb[0].mxu0
  %v2101 = vpop.f32.mrb[0].mxu0
  %v2102 = vadd.f32 0.0, %v2101
  %v2103 = vpop.f32.mrb[0].mxu0
  %2104 = vmatprep.mubr.bf16.mxu0 0
  %2105 = vmatmul.mubr.bf16.gmra.mrb[0].mxu0 %v1219
  %v2106 = vpop.f32.mrb[0].mxu0
  %v2107 = vadd.f32 0.0, %v2106
  %v2108 = vpop.f32.mrb[0].mxu0
  %v2109 = vpop.f32.mrb[0].mxu0
  %v2110 = vadd.f32 0.0, %v2109
  %v2111 = vpop.f32.mrb[0].mxu0
  %2112 = vmatprep.mubr.bf16.mxu0 0
  %2113 = vmatmul.mubr.bf16.gmra.mrb[0].mxu0 %v1222
  %v2114 = vpop.f32.mrb[0].mxu0
  %v2115 = vadd.f32 0.0, %v2114
  %v2116 = vpop.f32.mrb[0].mxu0
  %v2117 = vpop.f32.mrb[0].mxu0
  %v2118 = vadd.f32 0.0, %v2117
  %v2119 = vpop.f32.mrb[0].mxu0
  %2120 = vmatprep.mubr.bf16.mxu0 0
  %2121 = vmatmul.mubr.bf16.gmra.mrb[0].mxu0 %v1225
  %v2122 = vpop.f32.mrb[0].mxu0
  %v2123 = vadd.f32 0.0, %v2122
  %v2124 = vpop.f32.mrb[0].mxu0
  %v2125 = vpop.f32.mrb[0].mxu0
  %v2126 = vadd.f32 0.0, %v2125
  %v2127 = vpop.f32.mrb[0].mxu0
  %2128 = vmatprep.mubr.bf16.mxu0 0
  %2129 = vmatmul.mubr.bf16.gmra.mrb[0].mxu0 %v1228
  %v2130 = vpop.f32.mrb[0].mxu0
  %v2131 = vadd.f32 0.0, %v2130
  %v2132 = vpop.f32.mrb[0].mxu0
  %v2133 = vpop.f32.mrb[0].mxu0
  %v2134 = vadd.f32 0.0, %v2133
  %v2135 = vpop.f32.mrb[0].mxu0
  %2136 = vmatprep.mubr.bf16.mxu0 0
  %2137 = vmatmul.mubr.bf16.gmra.mrb[0].mxu0 %v1231
  %v2138 = vpop.f32.mrb[0].mxu0
  %v2139 = vadd.f32 0.0, %v2138
  %v2140 = vpop.f32.mrb[0].mxu0
  %v2141 = vpop.f32.mrb[0].mxu0
  %v2142 = vadd.f32 0.0, %v2141
  %v2143 = vpop.f32.mrb[0].mxu0
  %2144 = vmatprep.mubr.bf16.mxu0 0
  %2145 = vmatmul.mubr.bf16.gmra.mrb[0].mxu0 %v1234
  %v2146 = vpop.f32.mrb[0].mxu0
  %v2147 = vadd.f32 0.0, %v2146
  %v2148 = vpop.f32.mrb[0].mxu0
  %v2149 = vpop.f32.mrb[0].mxu0
  %v2150 = vadd.f32 0.0, %v2149
  %v2151 = vpop.f32.mrb[0].mxu0
  %2152 = vmatprep.mubr.bf16.mxu0 0
  %2153 = vmatmul.mubr.bf16.gmra.mrb[0].mxu0 %v1237
  %v2154 = vpop.f32.mrb[0].mxu0
  %v2155 = vadd.f32 0.0, %v2154
  %v2156 = vpop.f32.mrb[0].mxu0
  %v2157 = vpop.f32.mrb[0].mxu0
  %v2158 = vadd.f32 0.0, %v2157
  %v2159 = vpop.f32.mrb[0].mxu0
  %2160 = vmatprep.mubr.bf16.mxu0 0
  %2161 = vmatmul.mubr.bf16.gmra.mrb[0].mxu0 %v1240
  %v2162 = vpop.f32.mrb[0].mxu0
  %v2163 = vadd.f32 0.0, %v2162
  %v2164 = vpop.f32.mrb[0].mxu0
  %v2165 = vpop.f32.mrb[0].mxu0
  %v2166 = vadd.f32 0.0, %v2165
  %v2167 = vpop.f32.mrb[0].mxu0
  %2168 = vmatprep.mubr.bf16.mxu0 0
  %2169 = vmatmul.mubr.bf16.gmra.mrb[0].mxu0 %v1243
  %v2170 = vpop.f32.mrb[0].mxu0
  %v2171 = vadd.f32 0.0, %v2170
  %v2172 = vpop.f32.mrb[0].mxu0
  %v2173 = vpop.f32.mrb[0].mxu0
  %v2174 = vadd.f32 0.0, %v2173
  %v2175 = vpop.f32.mrb[0].mxu0
  %2176 = vmatprep.mubr.bf16.mxu0 0
  %2177 = vmatmul.mubr.bf16.gmra.mrb[0].mxu0 %v1246
  %v2178 = vpop.f32.mrb[0].mxu0
  %v2179 = vadd.f32 0.0, %v2178
  %v2180 = vpop.f32.mrb[0].mxu0
  %v2181 = vpop.f32.mrb[0].mxu0
  %v2182 = vadd.f32 0.0, %v2181
  %v2183 = vpop.f32.mrb[0].mxu0
  %2184 = vmatprep.mubr.bf16.mxu0 0
  %2185 = vmatmul.mubr.bf16.gmra.mrb[0].mxu0 %v1249
  %v2186 = vpop.f32.mrb[0].mxu0
  %v2187 = vadd.f32 0.0, %v2186
  %v2188 = vpop.f32.mrb[0].mxu0
  %v2189 = vpop.f32.mrb[0].mxu0
  %v2190 = vadd.f32 0.0, %v2189
  %v2191 = vpop.f32.mrb[0].mxu0
  %2192 = vmatprep.mubr.bf16.mxu0 0
  %2193 = vmatmul.mubr.bf16.gmra.mrb[0].mxu0 %v1252
  %v2194 = vpop.f32.mrb[0].mxu0
  %v2195 = vadd.f32 0.0, %v2194
  %v2196 = vpop.f32.mrb[0].mxu0
  %v2197 = vpop.f32.mrb[0].mxu0
  %v2198 = vadd.f32 0.0, %v2197
  %v2199 = vpop.f32.mrb[0].mxu0
  %2200 = vmatprep.mubr.bf16.mxu0 0
  %2201 = vmatmul.mubr.bf16.gmra.mrb[0].mxu0 %v1255
  %v2202 = vpop.f32.mrb[0].mxu0
  %v2203 = vadd.f32 0.0, %v2202
  %v2204 = vpop.f32.mrb[0].mxu0
  %v2205 = vpop.f32.mrb[0].mxu0
  %v2206 = vadd.f32 0.0, %v2205
  %v2207 = vpop.f32.mrb[0].mxu0
  %2208 = vmatprep.mubr.bf16.mxu0 0
  %2209 = vmatmul.mubr.bf16.gmra.mrb[0].mxu0 %v1258
  %v2210 = vpop.f32.mrb[0].mxu0
  %v2211 = vadd.f32 0.0, %v2210
  %v2212 = vpop.f32.mrb[0].mxu0
  %v2213 = vpop.f32.mrb[0].mxu0
  %v2214 = vadd.f32 0.0, %v2213
  %v2215 = vpop.f32.mrb[0].mxu0
  %2216 = vmatprep.mubr.bf16.mxu0 0
  %2217 = vmatmul.mubr.bf16.gmra.mrb[0].mxu0 %v1261
  %v2218 = vpop.f32.mrb[0].mxu0
  %v2219 = vadd.f32 0.0, %v2218
  %v2220 = vpop.f32.mrb[0].mxu0
  %v2221 = vpop.f32.mrb[0].mxu0
  %v2222 = vadd.f32 0.0, %v2221
  %v2223 = vpop.f32.mrb[0].mxu0
  %2224 = vmatprep.mubr.bf16.mxu0 0
  %2225 = vmatmul.mubr.bf16.gmra.mrb[0].mxu0 %v1264
  %v2226 = vpop.f32.mrb[0].mxu0
  %v2227 = vadd.f32 0.0, %v2226
  %v2228 = vpop.f32.mrb[0].mxu0
  %v2229 = vpop.f32.mrb[0].mxu0
  %v2230 = vadd.f32 0.0, %v2229
  %v2231 = vpop.f32.mrb[0].mxu0
  %2232 = vmatprep.mubr.bf16.mxu0 0
  %2233 = vmatmul.mubr.bf16.gmra.mrb[0].mxu0 %v1267
  %v2234 = vpop.f32.mrb[0].mxu0
  %v2235 = vadd.f32 0.0, %v2234
  %v2236 = vpop.f32.mrb[0].mxu0
  %v2237 = vpop.f32.mrb[0].mxu0
  %v2238 = vadd.f32 0.0, %v2237
  %v2239 = vpop.f32.mrb[0].mxu0
  %2240 = vmatprep.mubr.bf16.mxu0 0
  %2241 = vmatmul.mubr.bf16.gmra.mrb[0].mxu0 %v1270
  %v2242 = vpop.f32.mrb[0].mxu0
  %v2243 = vadd.f32 0.0, %v2242
  %v2244 = vpop.f32.mrb[0].mxu0
  %v2245 = vpop.f32.mrb[0].mxu0
  %v2246 = vadd.f32 0.0, %v2245
  %v2247 = vpop.f32.mrb[0].mxu0
  %2248 = vmatprep.mubr.bf16.mxu0 0
  %2249 = vmatmul.mubr.bf16.gmra.mrb[0].mxu0 %v1273
  %v2250 = vpop.f32.mrb[0].mxu0
  %v2251 = vadd.f32 0.0, %v2250
  %v2252 = vpop.f32.mrb[0].mxu0
  %v2253 = vpop.f32.mrb[0].mxu0
  %v2254 = vadd.f32 0.0, %v2253
  %v2255 = vpop.f32.mrb[0].mxu0
  %2256 = vmatprep.mubr.bf16.mxu0 0
  %2257 = vmatmul.mubr.bf16.gmra.mrb[0].mxu0 %v1276
  %v2258 = vpop.f32.mrb[0].mxu0
  %v2259 = vadd.f32 0.0, %v2258
  %v2260 = vpop.f32.mrb[0].mxu0
  %v2261 = vpop.f32.mrb[0].mxu0
  %v2262 = vadd.f32 0.0, %v2261
  %v2263 = vpop.f32.mrb[0].mxu0
  %2264 = vmatprep.mubr.bf16.mxu0 0
  %2265 = vmatmul.mubr.bf16.gmra.mrb[0].mxu0 %v1279
  %v2266 = vpop.f32.mrb[0].mxu0
  %v2267 = vadd.f32 0.0, %v2266
  %v2268 = vpop.f32.mrb[0].mxu0
  %v2269 = vpop.f32.mrb[0].mxu0
  %v2270 = vadd.f32 0.0, %v2269
  %v2271 = vpop.f32.mrb[0].mxu0
  %2272 = vmatprep.mubr.bf16.mxu0 0
  %2273 = vmatmul.mubr.bf16.gmra.mrb[0].mxu0 %v1282
  %v2274 = vpop.f32.mrb[0].mxu0
  %v2275 = vadd.f32 0.0, %v2274
  %v2276 = vpop.f32.mrb[0].mxu0
  %v2277 = vpop.f32.mrb[0].mxu0
  %v2278 = vadd.f32 0.0, %v2277
  %v2279 = vpop.f32.mrb[0].mxu0
  %2280 = vmatprep.mubr.bf16.mxu0 0
  %2281 = vmatmul.mubr.bf16.gmra.mrb[0].mxu0 %v1285
  %v2282 = vpop.f32.mrb[0].mxu0
  %v2283 = vadd.f32 0.0, %v2282
  %v2284 = vpop.f32.mrb[0].mxu0
  %v2285 = vpop.f32.mrb[0].mxu0
  %v2286 = vadd.f32 0.0, %v2285
  %v2287 = vpop.f32.mrb[0].mxu0
  %2288 = vmatprep.mubr.bf16.mxu0 0
  %2289 = vmatmul.mubr.bf16.gmra.mrb[0].mxu0 %v1288
  %v2290 = vpop.f32.mrb[0].mxu0
  %v2291 = vadd.f32 0.0, %v2290
  %v2292 = vpop.f32.mrb[0].mxu0
  %v2293 = vpop.f32.mrb[0].mxu0
  %v2294 = vadd.f32 0.0, %v2293
  %v2295 = vpop.f32.mrb[0].mxu0
  %2296 = vmatprep.mubr.bf16.mxu0 0
  %2297 = vmatmul.mubr.bf16.gmra.mrb[0].mxu0 %v1291
  %v2298 = vpop.f32.mrb[0].mxu0
  %v2299 = vadd.f32 0.0, %v2298
  %v2300 = vpop.f32.mrb[0].mxu0
  %v2301 = vpop.f32.mrb[0].mxu0
  %v2302 = vadd.f32 0.0, %v2301
  %v2303 = vpop.f32.mrb[0].mxu0
  %2304 = vmatprep.mubr.bf16.mxu0 0
  %2305 = vmatmul.mubr.bf16.gmra.mrb[0].mxu0 %v1294
  %v2306 = vpop.f32.mrb[0].mxu0
  %v2307 = vadd.f32 0.0, %v2306
  %v2308 = vpop.f32.mrb[0].mxu0
  %v2309 = vpop.f32.mrb[0].mxu0
  %v2310 = vadd.f32 0.0, %v2309
  %v2311 = vpop.f32.mrb[0].mxu0
  %2312 = vmatprep.mubr.bf16.mxu0 0
  %2313 = vmatmul.mubr.bf16.gmra.mrb[0].mxu0 %v1297
  %v2314 = vpop.f32.mrb[0].mxu0
  %v2315 = vadd.f32 0.0, %v2314
  %v2316 = vpop.f32.mrb[0].mxu0
  %v2317 = vpop.f32.mrb[0].mxu0
  %v2318 = vadd.f32 0.0, %v2317
  %v2319 = vpop.f32.mrb[0].mxu0
  %2320 = vmatprep.mubr.bf16.mxu0 0
  %2321 = vmatmul.mubr.bf16.gmra.mrb[0].mxu0 %v1300
  %v2322 = vpop.f32.mrb[0].mxu0
  %v2323 = vadd.f32 0.0, %v2322
  %v2324 = vpop.f32.mrb[0].mxu0
  %v2325 = vpop.f32.mrb[0].mxu0
  %v2326 = vadd.f32 0.0, %v2325
  %v2327 = vpop.f32.mrb[0].mxu0
  %2328 = vmatprep.mubr.bf16.mxu0 0
  %2329 = vmatmul.mubr.bf16.gmra.mrb[0].mxu0 %v1303
  %v2330 = vpop.f32.mrb[0].mxu0
  %v2331 = vadd.f32 0.0, %v2330
  %v2332 = vpop.f32.mrb[0].mxu0
  %v2333 = vpop.f32.mrb[0].mxu0
  %v2334 = vadd.f32 0.0, %v2333
  %v2335 = vpop.f32.mrb[0].mxu0
  %2336 = vmatprep.mubr.bf16.mxu0 0
  %2337 = vmatmul.mubr.bf16.gmra.mrb[0].mxu0 %v1306
  %v2338 = vpop.f32.mrb[0].mxu0
  %v2339 = vadd.f32 0.0, %v2338
  %v2340 = vpop.f32.mrb[0].mxu0
  %v2341 = vpop.f32.mrb[0].mxu0
  %v2342 = vadd.f32 0.0, %v2341
  %v2343 = vpop.f32.mrb[0].mxu0
  %2344 = vmatprep.mubr.bf16.mxu0 0
  %2345 = vmatmul.mubr.bf16.gmra.mrb[0].mxu0 %v1309
  %v2346 = vpop.f32.mrb[0].mxu0
  %v2347 = vadd.f32 0.0, %v2346
  %v2348 = vpop.f32.mrb[0].mxu0
  %v2349 = vpop.f32.mrb[0].mxu0
  %v2350 = vadd.f32 0.0, %v2349
  %v2351 = vpop.f32.mrb[0].mxu0
  %2352 = vmatprep.mubr.bf16.mxu0 0
  %2353 = vmatmul.mubr.bf16.gmra.mrb[0].mxu0 %v1312
  %v2354 = vpop.f32.mrb[0].mxu0
  %v2355 = vadd.f32 0.0, %v2354
  %v2356 = vpop.f32.mrb[0].mxu0
  %v2357 = vpop.f32.mrb[0].mxu0
  %v2358 = vadd.f32 0.0, %v2357
  %v2359 = vpop.f32.mrb[0].mxu0
  %2360 = vmatprep.mubr.bf16.mxu0 0
  %2361 = vmatmul.mubr.bf16.gmra.mrb[0].mxu0 %v1315
  %v2362 = vpop.f32.mrb[0].mxu0
  %v2363 = vadd.f32 0.0, %v2362
  %v2364 = vpop.f32.mrb[0].mxu0
  %v2365 = vpop.f32.mrb[0].mxu0
  %v2366 = vadd.f32 0.0, %v2365
  %v2367 = vpop.f32.mrb[0].mxu0
  %2368 = vmatprep.mubr.bf16.mxu0 0
  %2369 = vmatmul.mubr.bf16.gmra.mrb[0].mxu0 %v1318
  %v2370 = vpop.f32.mrb[0].mxu0
  %v2371 = vadd.f32 0.0, %v2370
  %v2372 = vpop.f32.mrb[0].mxu0
  %v2373 = vpop.f32.mrb[0].mxu0
  %v2374 = vadd.f32 0.0, %v2373
  %v2375 = vpop.f32.mrb[0].mxu0
  %2376 = vdwg.mxu0
  %v2377 = vmax.f32 %v1355, %v1611
  %v2378 = vmax.f32 %v1358, %v1614
  %v2379 = vmax.f32 %v1363, %v1619
  %v2380 = vmax.f32 %v1366, %v1622
  %v2381 = vmax.f32 %v1371, %v1627
  %v2382 = vmax.f32 %v1374, %v1630
  %v2383 = vmax.f32 %v1379, %v1635
  %v2384 = vmax.f32 %v1382, %v1638
  %v2385 = vmax.f32 %v1387, %v1643
  %v2386 = vmax.f32 %v1390, %v1646
  %v2387 = vmax.f32 %v1395, %v1651
  %v2388 = vmax.f32 %v1398, %v1654
  %v2389 = vmax.f32 %v1403, %v1659
  %v2390 = vmax.f32 %v1406, %v1662
  %v2391 = vmax.f32 %v1411, %v1667
  %v2392 = vmax.f32 %v1414, %v1670
  %v2393 = vmax.f32 %v1419, %v1675
  %v2394 = vmax.f32 %v1422, %v1678
  %v2395 = vmax.f32 %v1427, %v1683
  %v2396 = vmax.f32 %v1430, %v1686
  %v2397 = vmax.f32 %v1435, %v1691
  %v2398 = vmax.f32 %v1438, %v1694
  %v2399 = vmax.f32 %v1443, %v1699
  %v2400 = vmax.f32 %v1446, %v1702
  %v2401 = vmax.f32 %v1451, %v1707
  %v2402 = vmax.f32 %v1454, %v1710
  %v2403 = vmax.f32 %v1459, %v1715
  %v2404 = vmax.f32 %v1462, %v1718
  %v2405 = vmax.f32 %v1467, %v1723
  %v2406 = vmax.f32 %v1470, %v1726
  %v2407 = vmax.f32 %v1475, %v1731
  %v2408 = vmax.f32 %v1478, %v1734
  %v2409 = vmax.f32 %v1483, %v1739
  %v2410 = vmax.f32 %v1486, %v1742
  %v2411 = vmax.f32 %v1491, %v1747
  %v2412 = vmax.f32 %v1494, %v1750
  %v2413 = vmax.f32 %v1499, %v1755
  %v2414 = vmax.f32 %v1502, %v1758
  %v2415 = vmax.f32 %v1507, %v1763
  %v2416 = vmax.f32 %v1510, %v1766
  %v2417 = vmax.f32 %v1515, %v1771
  %v2418 = vmax.f32 %v1518, %v1774
  %v2419 = vmax.f32 %v1523, %v1779
  %v2420 = vmax.f32 %v1526, %v1782
  %v2421 = vmax.f32 %v1531, %v1787
  %v2422 = vmax.f32 %v1534, %v1790
  %v2423 = vmax.f32 %v1539, %v1795
  %v2424 = vmax.f32 %v1542, %v1798
  %v2425 = vmax.f32 %v1547, %v1803
  %v2426 = vmax.f32 %v1550, %v1806
  %v2427 = vmax.f32 %v1555, %v1811
  %v2428 = vmax.f32 %v1558, %v1814
  %v2429 = vmax.f32 %v1563, %v1819
  %v2430 = vmax.f32 %v1566, %v1822
  %v2431 = vmax.f32 %v1571, %v1827
  %v2432 = vmax.f32 %v1574, %v1830
  %v2433 = vmax.f32 %v1579, %v1835
  %v2434 = vmax.f32 %v1582, %v1838
  %v2435 = vmax.f32 %v1587, %v1843
  %v2436 = vmax.f32 %v1590, %v1846
  %v2437 = vmax.f32 %v1595, %v1851
  %v2438 = vmax.f32 %v1598, %v1854
  %v2439 = vmax.f32 %v1603, %v1859
  %v2440 = vmax.f32 %v1606, %v1862
  %v2441 = vmax.f32 %v1867, %v2123
  %v2442 = vmax.f32 %v1870, %v2126
  %v2443 = vmax.f32 %v1875, %v2131
  %v2444 = vmax.f32 %v1878, %v2134
  %v2445 = vmax.f32 %v1883, %v2139
  %v2446 = vmax.f32 %v1886, %v2142
  %v2447 = vmax.f32 %v1891, %v2147
  %v2448 = vmax.f32 %v1894, %v2150
  %v2449 = vmax.f32 %v1899, %v2155
  %v2450 = vmax.f32 %v1902, %v2158
  %v2451 = vmax.f32 %v1907, %v2163
  %v2452 = vmax.f32 %v1910, %v2166
  %v2453 = vmax.f32 %v1915, %v2171
  %v2454 = vmax.f32 %v1918, %v2174
  %v2455 = vmax.f32 %v1923, %v2179
  %v2456 = vmax.f32 %v1926, %v2182
  %v2457 = vmax.f32 %v1931, %v2187
  %v2458 = vmax.f32 %v1934, %v2190
  %v2459 = vmax.f32 %v1939, %v2195
  %v2460 = vmax.f32 %v1942, %v2198
  %v2461 = vmax.f32 %v1947, %v2203
  %v2462 = vmax.f32 %v1950, %v2206
  %v2463 = vmax.f32 %v1955, %v2211
  %v2464 = vmax.f32 %v1958, %v2214
  %v2465 = vmax.f32 %v1963, %v2219
  %v2466 = vmax.f32 %v1966, %v2222
  %v2467 = vmax.f32 %v1971, %v2227
  %v2468 = vmax.f32 %v1974, %v2230
  %v2469 = vmax.f32 %v1979, %v2235
  %v2470 = vmax.f32 %v1982, %v2238
  %v2471 = vmax.f32 %v1987, %v2243
  %v2472 = vmax.f32 %v1990, %v2246
  %v2473 = vmax.f32 %v1995, %v2251
  %v2474 = vmax.f32 %v1998, %v2254
  %v2475 = vmax.f32 %v2003, %v2259
  %v2476 = vmax.f32 %v2006, %v2262
  %v2477 = vmax.f32 %v2011, %v2267
  %v2478 = vmax.f32 %v2014, %v2270
  %v2479 = vmax.f32 %v2019, %v2275
  %v2480 = vmax.f32 %v2022, %v2278
  %v2481 = vmax.f32 %v2027, %v2283
  %v2482 = vmax.f32 %v2030, %v2286
  %v2483 = vmax.f32 %v2035, %v2291
  %v2484 = vmax.f32 %v2038, %v2294
  %v2485 = vmax.f32 %v2043, %v2299
  %v2486 = vmax.f32 %v2046, %v2302
  %v2487 = vmax.f32 %v2051, %v2307
  %v2488 = vmax.f32 %v2054, %v2310
  %v2489 = vmax.f32 %v2059, %v2315
  %v2490 = vmax.f32 %v2062, %v2318
  %v2491 = vmax.f32 %v2067, %v2323
  %v2492 = vmax.f32 %v2070, %v2326
  %v2493 = vmax.f32 %v2075, %v2331
  %v2494 = vmax.f32 %v2078, %v2334
  %v2495 = vmax.f32 %v2083, %v2339
  %v2496 = vmax.f32 %v2086, %v2342
  %v2497 = vmax.f32 %v2091, %v2347
  %v2498 = vmax.f32 %v2094, %v2350
  %v2499 = vmax.f32 %v2099, %v2355
  %v2500 = vmax.f32 %v2102, %v2358
  %v2501 = vmax.f32 %v2107, %v2363
  %v2502 = vmax.f32 %v2110, %v2366
  %v2503 = vmax.f32 %v2115, %v2371
  %v2504 = vmax.f32 %v2118, %v2374
  %v2505 = vmax.f32 %v2377, %v2441
  %v2506 = vmax.f32 %v2378, %v2442
  %v2507 = vmax.f32 %v2379, %v2443
  %v2508 = vmax.f32 %v2380, %v2444
  %v2509 = vmax.f32 %v2381, %v2445
  %v2510 = vmax.f32 %v2382, %v2446
  %v2511 = vmax.f32 %v2383, %v2447
  %v2512 = vmax.f32 %v2384, %v2448
  %v2513 = vmax.f32 %v2385, %v2449
  %v2514 = vmax.f32 %v2386, %v2450
  %v2515 = vmax.f32 %v2387, %v2451
  %v2516 = vmax.f32 %v2388, %v2452
  %v2517 = vmax.f32 %v2389, %v2453
  %v2518 = vmax.f32 %v2390, %v2454
  %v2519 = vmax.f32 %v2391, %v2455
  %v2520 = vmax.f32 %v2392, %v2456
  %v2521 = vmax.f32 %v2393, %v2457
  %v2522 = vmax.f32 %v2394, %v2458
  %v2523 = vmax.f32 %v2395, %v2459
  %v2524 = vmax.f32 %v2396, %v2460
  %v2525 = vmax.f32 %v2397, %v2461
  %v2526 = vmax.f32 %v2398, %v2462
  %v2527 = vmax.f32 %v2399, %v2463
  %v2528 = vmax.f32 %v2400, %v2464
  %v2529 = vmax.f32 %v2401, %v2465
  %v2530 = vmax.f32 %v2402, %v2466
  %v2531 = vmax.f32 %v2403, %v2467
  %v2532 = vmax.f32 %v2404, %v2468
  %v2533 = vmax.f32 %v2405, %v2469
  %v2534 = vmax.f32 %v2406, %v2470
  %v2535 = vmax.f32 %v2407, %v2471
  %v2536 = vmax.f32 %v2408, %v2472
  %v2537 = vmax.f32 %v2409, %v2473
  %v2538 = vmax.f32 %v2410, %v2474
  %v2539 = vmax.f32 %v2411, %v2475
  %v2540 = vmax.f32 %v2412, %v2476
  %v2541 = vmax.f32 %v2413, %v2477
  %v2542 = vmax.f32 %v2414, %v2478
  %v2543 = vmax.f32 %v2415, %v2479
  %v2544 = vmax.f32 %v2416, %v2480
  %v2545 = vmax.f32 %v2417, %v2481
  %v2546 = vmax.f32 %v2418, %v2482
  %v2547 = vmax.f32 %v2419, %v2483
  %v2548 = vmax.f32 %v2420, %v2484
  %v2549 = vmax.f32 %v2421, %v2485
  %v2550 = vmax.f32 %v2422, %v2486
  %v2551 = vmax.f32 %v2423, %v2487
  %v2552 = vmax.f32 %v2424, %v2488
  %v2553 = vmax.f32 %v2425, %v2489
  %v2554 = vmax.f32 %v2426, %v2490
  %v2555 = vmax.f32 %v2427, %v2491
  %v2556 = vmax.f32 %v2428, %v2492
  %v2557 = vmax.f32 %v2429, %v2493
  %v2558 = vmax.f32 %v2430, %v2494
  %v2559 = vmax.f32 %v2431, %v2495
  %v2560 = vmax.f32 %v2432, %v2496
  %v2561 = vmax.f32 %v2433, %v2497
  %v2562 = vmax.f32 %v2434, %v2498
  %v2563 = vmax.f32 %v2435, %v2499
  %v2564 = vmax.f32 %v2436, %v2500
  %v2565 = vmax.f32 %v2437, %v2501
  %v2566 = vmax.f32 %v2438, %v2502
  %v2567 = vmax.f32 %v2439, %v2503
  %v2568 = vmax.f32 %v2440, %v2504
  %v2569 = vld [vmem:[%s2] sm:$0x1]
  %v2571 = vlaneseq
  %v2572 = vshrl.u32 %v2571, 7
  %v2573 = vsub.s32 0, %v2572
  %v2574 = vrot.slane %v2569, %v2573
  %v2576 = vadd.f32 %v2505, %v2574
  %v2577 = vadd.f32 %v2506, %v2574
  %v2578 = vadd.f32 %v2507, %v2574
  %v2579 = vadd.f32 %v2508, %v2574
  %v2580 = vadd.f32 %v2509, %v2574
  %v2581 = vadd.f32 %v2510, %v2574
  %v2582 = vadd.f32 %v2511, %v2574
  %v2583 = vadd.f32 %v2512, %v2574
  %v2584 = vadd.f32 %v2513, %v2574
  %v2585 = vadd.f32 %v2514, %v2574
  %v2586 = vadd.f32 %v2515, %v2574
  %v2587 = vadd.f32 %v2516, %v2574
  %v2588 = vadd.f32 %v2517, %v2574
  %v2589 = vadd.f32 %v2518, %v2574
  %v2590 = vadd.f32 %v2519, %v2574
  %v2591 = vadd.f32 %v2520, %v2574
  %v2592 = vadd.f32 %v2521, %v2574
  %v2593 = vadd.f32 %v2522, %v2574
  %v2594 = vadd.f32 %v2523, %v2574
  %v2595 = vadd.f32 %v2524, %v2574
  %v2596 = vadd.f32 %v2525, %v2574
  %v2597 = vadd.f32 %v2526, %v2574
  %v2598 = vadd.f32 %v2527, %v2574
  %v2599 = vadd.f32 %v2528, %v2574
  %v2600 = vadd.f32 %v2529, %v2574
  %v2601 = vadd.f32 %v2530, %v2574
  %v2602 = vadd.f32 %v2531, %v2574
  %v2603 = vadd.f32 %v2532, %v2574
  %v2604 = vadd.f32 %v2533, %v2574
  %v2605 = vadd.f32 %v2534, %v2574
  %v2606 = vadd.f32 %v2535, %v2574
  %v2607 = vadd.f32 %v2536, %v2574
  %v2608 = vadd.f32 %v2537, %v2574
  %v2609 = vadd.f32 %v2538, %v2574
  %v2610 = vadd.f32 %v2539, %v2574
  %v2611 = vadd.f32 %v2540, %v2574
  %v2612 = vadd.f32 %v2541, %v2574
  %v2613 = vadd.f32 %v2542, %v2574
  %v2614 = vadd.f32 %v2543, %v2574
  %v2615 = vadd.f32 %v2544, %v2574
  %v2616 = vadd.f32 %v2545, %v2574
  %v2617 = vadd.f32 %v2546, %v2574
  %v2618 = vadd.f32 %v2547, %v2574
  %v2619 = vadd.f32 %v2548, %v2574
  %v2620 = vadd.f32 %v2549, %v2574
  %v2621 = vadd.f32 %v2550, %v2574
  %v2622 = vadd.f32 %v2551, %v2574
  %v2623 = vadd.f32 %v2552, %v2574
  %v2624 = vadd.f32 %v2553, %v2574
  %v2625 = vadd.f32 %v2554, %v2574
  %v2626 = vadd.f32 %v2555, %v2574
  %v2627 = vadd.f32 %v2556, %v2574
  %v2628 = vadd.f32 %v2557, %v2574
  %v2629 = vadd.f32 %v2558, %v2574
  %v2630 = vadd.f32 %v2559, %v2574
  %v2631 = vadd.f32 %v2560, %v2574
  %v2632 = vadd.f32 %v2561, %v2574
  %v2633 = vadd.f32 %v2562, %v2574
  %v2634 = vadd.f32 %v2563, %v2574
  %v2635 = vadd.f32 %v2564, %v2574
  %v2636 = vadd.f32 %v2565, %v2574
  %v2637 = vadd.f32 %v2566, %v2574
  %v2638 = vadd.f32 %v2567, %v2574
  %v2639 = vadd.f32 %v2568, %v2574
  %v2640 = vmax.f32 %v2576, 0.0
  %v2641 = vmax.f32 %v2577, 0.0
  %v2642 = vmax.f32 %v2578, 0.0
  %v2643 = vmax.f32 %v2579, 0.0
  %v2644 = vmax.f32 %v2580, 0.0
  %v2645 = vmax.f32 %v2581, 0.0
  %v2646 = vmax.f32 %v2582, 0.0
  %v2647 = vmax.f32 %v2583, 0.0
  %v2648 = vmax.f32 %v2584, 0.0
  %v2649 = vmax.f32 %v2585, 0.0
  %v2650 = vmax.f32 %v2586, 0.0
  %v2651 = vmax.f32 %v2587, 0.0
  %v2652 = vmax.f32 %v2588, 0.0
  %v2653 = vmax.f32 %v2589, 0.0
  %v2654 = vmax.f32 %v2590, 0.0
  %v2655 = vmax.f32 %v2591, 0.0
  %v2656 = vmax.f32 %v2592, 0.0
  %v2657 = vmax.f32 %v2593, 0.0
  %v2658 = vmax.f32 %v2594, 0.0
  %v2659 = vmax.f32 %v2595, 0.0
  %v2660 = vmax.f32 %v2596, 0.0
  %v2661 = vmax.f32 %v2597, 0.0
  %v2662 = vmax.f32 %v2598, 0.0
  %v2663 = vmax.f32 %v2599, 0.0
  %v2664 = vmax.f32 %v2600, 0.0
  %v2665 = vmax.f32 %v2601, 0.0
  %v2666 = vmax.f32 %v2602, 0.0
  %v2667 = vmax.f32 %v2603, 0.0
  %v2668 = vmax.f32 %v2604, 0.0
  %v2669 = vmax.f32 %v2605, 0.0
  %v2670 = vmax.f32 %v2606, 0.0
  %v2671 = vmax.f32 %v2607, 0.0
  %v2672 = vmax.f32 %v2608, 0.0
  %v2673 = vmax.f32 %v2609, 0.0
  %v2674 = vmax.f32 %v2610, 0.0
  %v2675 = vmax.f32 %v2611, 0.0
  %v2676 = vmax.f32 %v2612, 0.0
  %v2677 = vmax.f32 %v2613, 0.0
  %v2678 = vmax.f32 %v2614, 0.0
  %v2679 = vmax.f32 %v2615, 0.0
  %v2680 = vmax.f32 %v2616, 0.0
  %v2681 = vmax.f32 %v2617, 0.0
  %v2682 = vmax.f32 %v2618, 0.0
  %v2683 = vmax.f32 %v2619, 0.0
  %v2684 = vmax.f32 %v2620, 0.0
  %v2685 = vmax.f32 %v2621, 0.0
  %v2686 = vmax.f32 %v2622, 0.0
  %v2687 = vmax.f32 %v2623, 0.0
  %v2688 = vmax.f32 %v2624, 0.0
  %v2689 = vmax.f32 %v2625, 0.0
  %v2690 = vmax.f32 %v2626, 0.0
  %v2691 = vmax.f32 %v2627, 0.0
  %v2692 = vmax.f32 %v2628, 0.0
  %v2693 = vmax.f32 %v2629, 0.0
  %v2694 = vmax.f32 %v2630, 0.0
  %v2695 = vmax.f32 %v2631, 0.0
  %v2696 = vmax.f32 %v2632, 0.0
  %v2697 = vmax.f32 %v2633, 0.0
  %v2698 = vmax.f32 %v2634, 0.0
  %v2699 = vmax.f32 %v2635, 0.0
  %v2700 = vmax.f32 %v2636, 0.0
  %v2701 = vmax.f32 %v2637, 0.0
  %v2702 = vmax.f32 %v2638, 0.0
  %v2703 = vmax.f32 %v2639, 0.0
  %v2704 = vpack.c.bf16 %v2641, %v2640
  %v2705 = vpack.c.bf16 %v2643, %v2642
  %v2706 = vpack.c.bf16 %v2645, %v2644
  %v2707 = vpack.c.bf16 %v2647, %v2646
  %v2708 = vpack.c.bf16 %v2649, %v2648
  %v2709 = vpack.c.bf16 %v2651, %v2650
  %v2710 = vpack.c.bf16 %v2653, %v2652
  %v2711 = vpack.c.bf16 %v2655, %v2654
  %v2712 = vpack.c.bf16 %v2657, %v2656
  %v2713 = vpack.c.bf16 %v2659, %v2658
  %v2714 = vpack.c.bf16 %v2661, %v2660
  %v2715 = vpack.c.bf16 %v2663, %v2662
  %v2716 = vpack.c.bf16 %v2665, %v2664
  %v2717 = vpack.c.bf16 %v2667, %v2666
  %v2718 = vpack.c.bf16 %v2669, %v2668
  %v2719 = vpack.c.bf16 %v2671, %v2670
  %v2720 = vpack.c.bf16 %v2673, %v2672
  %v2721 = vpack.c.bf16 %v2675, %v2674
  %v2722 = vpack.c.bf16 %v2677, %v2676
  %v2723 = vpack.c.bf16 %v2679, %v2678
  %v2724 = vpack.c.bf16 %v2681, %v2680
  %v2725 = vpack.c.bf16 %v2683, %v2682
  %v2726 = vpack.c.bf16 %v2685, %v2684
  %v2727 = vpack.c.bf16 %v2687, %v2686
  %v2728 = vpack.c.bf16 %v2689, %v2688
  %v2729 = vpack.c.bf16 %v2691, %v2690
  %v2730 = vpack.c.bf16 %v2693, %v2692
  %v2731 = vpack.c.bf16 %v2695, %v2694
  %v2732 = vpack.c.bf16 %v2697, %v2696
  %v2733 = vpack.c.bf16 %v2699, %v2698
  %v2734 = vpack.c.bf16 %v2701, %v2700
  %v2735 = vpack.c.bf16 %v2703, %v2702
  %v2768 = vunpack.c.l.b16 %v2704
  %v2769 = vunpack.c.h.b16 %v2704
  %v2770 = vunpack.c.l.b16 %v2705
  %v2771 = vunpack.c.h.b16 %v2705
  %v2772 = vunpack.c.l.b16 %v2706
  %v2773 = vunpack.c.h.b16 %v2706
  %v2774 = vunpack.c.l.b16 %v2707
  %v2775 = vunpack.c.h.b16 %v2707
  %v2776 = vunpack.c.l.b16 %v2708
  %v2777 = vunpack.c.h.b16 %v2708
  %v2778 = vunpack.c.l.b16 %v2709
  %v2779 = vunpack.c.h.b16 %v2709
  %v2780 = vunpack.c.l.b16 %v2710
  %v2781 = vunpack.c.h.b16 %v2710
  %v2782 = vunpack.c.l.b16 %v2711
  %v2783 = vunpack.c.h.b16 %v2711
  %v2784 = vunpack.c.l.b16 %v2712
  %v2785 = vunpack.c.h.b16 %v2712
  %v2786 = vunpack.c.l.b16 %v2713
  %v2787 = vunpack.c.h.b16 %v2713
  %v2788 = vunpack.c.l.b16 %v2714
  %v2789 = vunpack.c.h.b16 %v2714
  %v2790 = vunpack.c.l.b16 %v2715
  %v2791 = vunpack.c.h.b16 %v2715
  %v2792 = vunpack.c.l.b16 %v2716
  %v2793 = vunpack.c.h.b16 %v2716
  %v2794 = vunpack.c.l.b16 %v2717
  %v2795 = vunpack.c.h.b16 %v2717
  %v2796 = vunpack.c.l.b16 %v2718
  %v2797 = vunpack.c.h.b16 %v2718
  %v2798 = vunpack.c.l.b16 %v2719
  %v2799 = vunpack.c.h.b16 %v2719
  %v2800 = vunpack.c.l.b16 %v2720
  %v2801 = vunpack.c.h.b16 %v2720
  %v2802 = vunpack.c.l.b16 %v2721
  %v2803 = vunpack.c.h.b16 %v2721
  %v2804 = vunpack.c.l.b16 %v2722
  %v2805 = vunpack.c.h.b16 %v2722
  %v2806 = vunpack.c.l.b16 %v2723
  %v2807 = vunpack.c.h.b16 %v2723
  %v2808 = vunpack.c.l.b16 %v2724
  %v2809 = vunpack.c.h.b16 %v2724
  %v2810 = vunpack.c.l.b16 %v2725
  %v2811 = vunpack.c.h.b16 %v2725
  %v2812 = vunpack.c.l.b16 %v2726
  %v2813 = vunpack.c.h.b16 %v2726
  %v2814 = vunpack.c.l.b16 %v2727
  %v2815 = vunpack.c.h.b16 %v2727
  %v2816 = vunpack.c.l.b16 %v2728
  %v2817 = vunpack.c.h.b16 %v2728
  %v2818 = vunpack.c.l.b16 %v2729
  %v2819 = vunpack.c.h.b16 %v2729
  %v2820 = vunpack.c.l.b16 %v2730
  %v2821 = vunpack.c.h.b16 %v2730
  %v2822 = vunpack.c.l.b16 %v2731
  %v2823 = vunpack.c.h.b16 %v2731
  %v2824 = vunpack.c.l.b16 %v2732
  %v2825 = vunpack.c.h.b16 %v2732
  %v2826 = vunpack.c.l.b16 %v2733
  %v2827 = vunpack.c.h.b16 %v2733
  %v2828 = vunpack.c.l.b16 %v2734
  %v2829 = vunpack.c.h.b16 %v2734
  %v2830 = vunpack.c.l.b16 %v2735
  %v2831 = vunpack.c.h.b16 %v2735
  %v2832 = vpack.c.b16 %v2768, %v2768
  %v2833 = vpack.c.b16 %v2769, %v2769
  %v2834 = vpack.c.b16 %v2770, %v2770
  %v2835 = vpack.c.b16 %v2771, %v2771
  %v2836 = vpack.c.b16 %v2772, %v2772
  %v2837 = vpack.c.b16 %v2773, %v2773
  %v2838 = vpack.c.b16 %v2774, %v2774
  %v2839 = vpack.c.b16 %v2775, %v2775
  %v2840 = vpack.c.b16 %v2776, %v2776
  %v2841 = vpack.c.b16 %v2777, %v2777
  %v2842 = vpack.c.b16 %v2778, %v2778
  %v2843 = vpack.c.b16 %v2779, %v2779
  %v2844 = vpack.c.b16 %v2780, %v2780
  %v2845 = vpack.c.b16 %v2781, %v2781
  %v2846 = vpack.c.b16 %v2782, %v2782
  %v2847 = vpack.c.b16 %v2783, %v2783
  %v2848 = vpack.c.b16 %v2784, %v2784
  %v2849 = vpack.c.b16 %v2785, %v2785
  %v2850 = vpack.c.b16 %v2786, %v2786
  %v2851 = vpack.c.b16 %v2787, %v2787
  %v2852 = vpack.c.b16 %v2788, %v2788
  %v2853 = vpack.c.b16 %v2789, %v2789
  %v2854 = vpack.c.b16 %v2790, %v2790
  %v2855 = vpack.c.b16 %v2791, %v2791
  %v2856 = vpack.c.b16 %v2792, %v2792
  %v2857 = vpack.c.b16 %v2793, %v2793
  %v2858 = vpack.c.b16 %v2794, %v2794
  %v2859 = vpack.c.b16 %v2795, %v2795
  %v2860 = vpack.c.b16 %v2796, %v2796
  %v2861 = vpack.c.b16 %v2797, %v2797
  %v2862 = vpack.c.b16 %v2798, %v2798
  %v2863 = vpack.c.b16 %v2799, %v2799
  %v2864 = vpack.c.b16 %v2800, %v2800
  %v2865 = vpack.c.b16 %v2801, %v2801
  %v2866 = vpack.c.b16 %v2802, %v2802
  %v2867 = vpack.c.b16 %v2803, %v2803
  %v2868 = vpack.c.b16 %v2804, %v2804
  %v2869 = vpack.c.b16 %v2805, %v2805
  %v2870 = vpack.c.b16 %v2806, %v2806
  %v2871 = vpack.c.b16 %v2807, %v2807
  %v2872 = vpack.c.b16 %v2808, %v2808
  %v2873 = vpack.c.b16 %v2809, %v2809
  %v2874 = vpack.c.b16 %v2810, %v2810
  %v2875 = vpack.c.b16 %v2811, %v2811
  %v2876 = vpack.c.b16 %v2812, %v2812
  %v2877 = vpack.c.b16 %v2813, %v2813
  %v2878 = vpack.c.b16 %v2814, %v2814
  %v2879 = vpack.c.b16 %v2815, %v2815
  %v2880 = vpack.c.b16 %v2816, %v2816
  %v2881 = vpack.c.b16 %v2817, %v2817
  %v2882 = vpack.c.b16 %v2818, %v2818
  %v2883 = vpack.c.b16 %v2819, %v2819
  %v2884 = vpack.c.b16 %v2820, %v2820
  %v2885 = vpack.c.b16 %v2821, %v2821
  %v2886 = vpack.c.b16 %v2822, %v2822
  %v2887 = vpack.c.b16 %v2823, %v2823
  %v2888 = vpack.c.b16 %v2824, %v2824
  %v2889 = vpack.c.b16 %v2825, %v2825
  %v2890 = vpack.c.b16 %v2826, %v2826
  %v2891 = vpack.c.b16 %v2827, %v2827
  %v2892 = vpack.c.b16 %v2828, %v2828
  %v2893 = vpack.c.b16 %v2829, %v2829
  %v2894 = vpack.c.b16 %v2830, %v2830
  %v2895 = vpack.c.b16 %v2831, %v2831
  %2960 = vst [vmem:[%s3] sm:$0xf] %v2832
  %2961 = vst [vmem:[%s3 + $0x4] sm:$0xf] %v2833
  %2962 = vst [vmem:[%s3 + $0x8] sm:$0xf] %v2834
  %2963 = vst [vmem:[%s3 + $0xc] sm:$0xf] %v2835
  %2964 = vst [vmem:[%s3 + $0x10] sm:$0xf] %v2836
  %2965 = vst [vmem:[%s3 + $0x14] sm:$0xf] %v2837
  %2966 = vst [vmem:[%s3 + $0x18] sm:$0xf] %v2838
  %2967 = vst [vmem:[%s3 + $0x1c] sm:$0xf] %v2839
  %2968 = vst [vmem:[%s3 + $0x20] sm:$0xf] %v2840
  %2969 = vst [vmem:[%s3 + $0x24] sm:$0xf] %v2841
  %2970 = vst [vmem:[%s3 + $0x28] sm:$0xf] %v2842
  %2971 = vst [vmem:[%s3 + $0x2c] sm:$0xf] %v2843
  %2972 = vst [vmem:[%s3 + $0x30] sm:$0xf] %v2844
  %2973 = vst [vmem:[%s3 + $0x34] sm:$0xf] %v2845
  %2974 = vst [vmem:[%s3 + $0x38] sm:$0xf] %v2846
  %2975 = vst [vmem:[%s3 + $0x3c] sm:$0xf] %v2847
  %2976 = vst [vmem:[%s3 + $0x40] sm:$0xf] %v2848
  %2977 = vst [vmem:[%s3 + $0x44] sm:$0xf] %v2849
  %2978 = vst [vmem:[%s3 + $0x48] sm:$0xf] %v2850
  %2979 = vst [vmem:[%s3 + $0x4c] sm:$0xf] %v2851
  %2980 = vst [vmem:[%s3 + $0x50] sm:$0xf] %v2852
  %2981 = vst [vmem:[%s3 + $0x54] sm:$0xf] %v2853
  %2982 = vst [vmem:[%s3 + $0x58] sm:$0xf] %v2854
  %2983 = vst [vmem:[%s3 + $0x5c] sm:$0xf] %v2855
  %2984 = vst [vmem:[%s3 + $0x60] sm:$0xf] %v2856
  %2985 = vst [vmem:[%s3 + $0x64] sm:$0xf] %v2857
  %2986 = vst [vmem:[%s3 + $0x68] sm:$0xf] %v2858
  %2987 = vst [vmem:[%s3 + $0x6c] sm:$0xf] %v2859
  %2988 = vst [vmem:[%s3 + $0x70] sm:$0xf] %v2860
  %2989 = vst [vmem:[%s3 + $0x74] sm:$0xf] %v2861
  %2990 = vst [vmem:[%s3 + $0x78] sm:$0xf] %v2862
  %2991 = vst [vmem:[%s3 + $0x7c] sm:$0xf] %v2863
  %2992 = vst [vmem:[%s3 + $0x80] sm:$0xf] %v2864
  %2993 = vst [vmem:[%s3 + $0x84] sm:$0xf] %v2865
  %2994 = vst [vmem:[%s3 + $0x88] sm:$0xf] %v2866
  %2995 = vst [vmem:[%s3 + $0x8c] sm:$0xf] %v2867
  %2996 = vst [vmem:[%s3 + $0x90] sm:$0xf] %v2868
  %2997 = vst [vmem:[%s3 + $0x94] sm:$0xf] %v2869
  %2998 = vst [vmem:[%s3 + $0x98] sm:$0xf] %v2870
  %2999 = vst [vmem:[%s3 + $0x9c] sm:$0xf] %v2871
  %3000 = vst [vmem:[%s3 + $0xa0] sm:$0xf] %v2872
  %3001 = vst [vmem:[%s3 + $0xa4] sm:$0xf] %v2873
  %3002 = vst [vmem:[%s3 + $0xa8] sm:$0xf] %v2874
  %3003 = vst [vmem:[%s3 + $0xac] sm:$0xf] %v2875
  %3004 = vst [vmem:[%s3 + $0xb0] sm:$0xf] %v2876
  %3005 = vst [vmem:[%s3 + $0xb4] sm:$0xf] %v2877
  %3006 = vst [vmem:[%s3 + $0xb8] sm:$0xf] %v2878
  %3007 = vst [vmem:[%s3 + $0xbc] sm:$0xf] %v2879
  %3008 = vst [vmem:[%s3 + $0xc0] sm:$0xf] %v2880
  %3009 = vst [vmem:[%s3 + $0xc4] sm:$0xf] %v2881
  %3010 = vst [vmem:[%s3 + $0xc8] sm:$0xf] %v2882
  %3011 = vst [vmem:[%s3 + $0xcc] sm:$0xf] %v2883
  %3012 = vst [vmem:[%s3 + $0xd0] sm:$0xf] %v2884
  %3013 = vst [vmem:[%s3 + $0xd4] sm:$0xf] %v2885
  %3014 = vst [vmem:[%s3 + $0xd8] sm:$0xf] %v2886
  %3015 = vst [vmem:[%s3 + $0xdc] sm:$0xf] %v2887
  %3016 = vst [vmem:[%s3 + $0xe0] sm:$0xf] %v2888
  %3017 = vst [vmem:[%s3 + $0xe4] sm:$0xf] %v2889
  %3018 = vst [vmem:[%s3 + $0xe8] sm:$0xf] %v2890
  %3019 = vst [vmem:[%s3 + $0xec] sm:$0xf] %v2891
  %3020 = vst [vmem:[%s3 + $0xf0] sm:$0xf] %v2892
  %3021 = vst [vmem:[%s3 + $0xf4] sm:$0xf] %v2893
  %3022 = vst [vmem:[%s3 + $0xf8] sm:$0xf] %v2894
  %3023 = vst [vmem:[%s3 + $0xfc] sm:$0xf] %v2895
  // Predicated region
  $region14: #{encoder_image_full_forward.2} parent=0 // pred_check
    _
  $region15: #{encoder_image_full_forward.2} parent=0 // pred_check_branch
    %3025 = sbr.rel (0) target = $region17
  $region16: #{encoder_image_full_forward.2} parent=0 // pred_region
    _
  $region17: #{encoder_image_full_forward.2} parent=0 // pred_fallthru
    _
  // Predicated region
  $region18: #{encoder_image_full_forward.2} parent=0 // pred_check
    _
  $region19: #{encoder_image_full_forward.2} parent=0 // pred_check_branch
    %3027 = sbr.rel (0) target = $region21
  $region20: #{encoder_image_full_forward.2} parent=0 // pred_region
    _
  $region21: #{encoder_image_full_forward.2} parent=0 // pred_fallthru
    _

// kernel: encoder_image_full_forward.3
$region0: #{encoder_image_full_forward.3}
  #allocation0 [shape = 'u32[]', space=smem, size = 0x4, offset = 0x4, fixed_abs, tag = 'smem constant byte address 0x4 - core index']
  #allocation1 [shape = 'u32[144,128]{1,0:T(1,128)}', space=vmem, size = 0x12000, scoped, tag = 'internal scratch']
  %s0 = inlined_call_operand.vmem [shape: bf16[512,80], index: 0, kind: input, shape index: {}]
  %s1 = inlined_call_operand.vmem [shape: bf16[80,16], index: 1, kind: input, shape index: {}]
  %s2 = inlined_call_operand.vmem [shape: f32[1,16], index: 2, kind: input, shape index: {}]
  %s3 = inlined_call_operand.vmem [shape: bf16[16,16,64], index: 3, kind: input, shape index: {}]
  %s4 = inlined_call_operand.vmem [shape: f32[1,64], index: 4, kind: input, shape index: {}]
  %s5 = inlined_call_operand.vmem [shape: bf16[64,64], index: 5, kind: input, shape index: {}]
  %s6 = inlined_call_operand.vmem [shape: f32[1,64], index: 6, kind: input, shape index: {}]
  %s7 = inlined_call_operand.vmem [shape: bf16[64,128], index: 7, kind: input, shape index: {}]
  %s8 = inlined_call_operand.vmem [shape: f32[1,128], index: 8, kind: input, shape index: {}]
  %s9 = inlined_call_operand.vmem [shape: f32[8,128], index: 9, kind: output, shape index: {}]
  %s10 = sld [smem:[#allocation0]]
  $region46: #{encoder_image_full_forward.3} parent=0
    _
  %s12 = ssub.s32 1, %s10
  %s13 = scalar_select 0, %s12, %s10
  // Predicated region
  $region2: #{encoder_image_full_forward.3} parent=0 // pred_check
    _
  $region3: #{encoder_image_full_forward.3} parent=0 // pred_check_branch
    %15 = sbr.rel (0) target = $region5
  $region4: #{encoder_image_full_forward.3} parent=0 // pred_region
    _
  $region5: #{encoder_image_full_forward.3} parent=0 // pred_fallthru
    _
  // Predicated region
  $region6: #{encoder_image_full_forward.3} parent=0 // pred_check
    _
  $region7: #{encoder_image_full_forward.3} parent=0 // pred_check_branch
    %17 = sbr.rel (0) target = $region9
  $region8: #{encoder_image_full_forward.3} parent=0 // pred_region
    _
  $region9: #{encoder_image_full_forward.3} parent=0 // pred_fallthru
    _
  // Predicated region
  $region10: #{encoder_image_full_forward.3} parent=0 // pred_check
    _
  $region11: #{encoder_image_full_forward.3} parent=0 // pred_check_branch
    %19 = sbr.rel (0) target = $region13
  $region12: #{encoder_image_full_forward.3} parent=0 // pred_region
    _
  $region13: #{encoder_image_full_forward.3} parent=0 // pred_fallthru
    _
  // Predicated region
  $region14: #{encoder_image_full_forward.3} parent=0 // pred_check
    _
  $region15: #{encoder_image_full_forward.3} parent=0 // pred_check_branch
    %21 = sbr.rel (0) target = $region17
  $region16: #{encoder_image_full_forward.3} parent=0 // pred_region
    _
  $region17: #{encoder_image_full_forward.3} parent=0 // pred_fallthru
    _
  // Predicated region
  $region18: #{encoder_image_full_forward.3} parent=0 // pred_check
    _
  $region19: #{encoder_image_full_forward.3} parent=0 // pred_check_branch
    %23 = sbr.rel (0) target = $region21
  $region20: #{encoder_image_full_forward.3} parent=0 // pred_region
    _
  $region21: #{encoder_image_full_forward.3} parent=0 // pred_fallthru
    _
  // Predicated region
  $region22: #{encoder_image_full_forward.3} parent=0 // pred_check
    _
  $region23: #{encoder_image_full_forward.3} parent=0 // pred_check_branch
    %25 = sbr.rel (0) target = $region25
  $region24: #{encoder_image_full_forward.3} parent=0 // pred_region
    _
  $region25: #{encoder_image_full_forward.3} parent=0 // pred_fallthru
    _
  // Predicated region
  $region26: #{encoder_image_full_forward.3} parent=0 // pred_check
    _
  $region27: #{encoder_image_full_forward.3} parent=0 // pred_check_branch
    %27 = sbr.rel (0) target = $region29
  $region28: #{encoder_image_full_forward.3} parent=0 // pred_region
    _
  $region29: #{encoder_image_full_forward.3} parent=0 // pred_fallthru
    _
  // Predicated region
  $region30: #{encoder_image_full_forward.3} parent=0 // pred_check
    _
  $region31: #{encoder_image_full_forward.3} parent=0 // pred_check_branch
    %29 = sbr.rel (0) target = $region33
  $region32: #{encoder_image_full_forward.3} parent=0 // pred_region
    _
  $region33: #{encoder_image_full_forward.3} parent=0 // pred_fallthru
    _
  // Predicated region
  $region34: #{encoder_image_full_forward.3} parent=0 // pred_check
    _
  $region35: #{encoder_image_full_forward.3} parent=0 // pred_check_branch
    %31 = sbr.rel (0) target = $region37
  $region36: #{encoder_image_full_forward.3} parent=0 // pred_region
    _
  $region37: #{encoder_image_full_forward.3} parent=0 // pred_fallthru
    _
  %v33 = vld [vmem:[%s0] sm:$0xf]
  %v34 = vld [vmem:[%s0 + $0x4] sm:$0xf]
  %v35 = vld [vmem:[%s0 + $0x8] sm:$0xf]
  %v36 = vld [vmem:[%s0 + $0xc] sm:$0xf]
  %v37 = vld [vmem:[%s0 + $0x10] sm:$0xf]
  %v38 = vld [vmem:[%s0 + $0x14] sm:$0xf]
  %v39 = vld [vmem:[%s0 + $0x18] sm:$0xf]
  %v40 = vld [vmem:[%s0 + $0x1c] sm:$0xf]
  %v41 = vld [vmem:[%s0 + $0x20] sm:$0xf]
  %v42 = vld [vmem:[%s0 + $0x24] sm:$0xf]
  %v43 = vld [vmem:[%s0 + $0x28] sm:$0xf]
  %v44 = vld [vmem:[%s0 + $0x2c] sm:$0xf]
  %v45 = vld [vmem:[%s0 + $0x30] sm:$0xf]
  %v46 = vld [vmem:[%s0 + $0x34] sm:$0xf]
  %v47 = vld [vmem:[%s0 + $0x38] sm:$0xf]
  %v48 = vld [vmem:[%s0 + $0x3c] sm:$0xf]
  %v49 = vld [vmem:[%s0 + $0x40] sm:$0xf]
  %v50 = vld [vmem:[%s0 + $0x44] sm:$0xf]
  %v51 = vld [vmem:[%s0 + $0x48] sm:$0xf]
  %v52 = vld [vmem:[%s0 + $0x4c] sm:$0xf]
  %v53 = vld [vmem:[%s0 + $0x50] sm:$0xf]
  %v54 = vld [vmem:[%s0 + $0x54] sm:$0xf]
  %v55 = vld [vmem:[%s0 + $0x58] sm:$0xf]
  %v56 = vld [vmem:[%s0 + $0x5c] sm:$0xf]
  %v57 = vld [vmem:[%s0 + $0x60] sm:$0xf]
  %v58 = vld [vmem:[%s0 + $0x64] sm:$0xf]
  %v59 = vld [vmem:[%s0 + $0x68] sm:$0xf]
  %v60 = vld [vmem:[%s0 + $0x6c] sm:$0xf]
  %v61 = vld [vmem:[%s0 + $0x70] sm:$0xf]
  %v62 = vld [vmem:[%s0 + $0x74] sm:$0xf]
  %v63 = vld [vmem:[%s0 + $0x78] sm:$0xf]
  %v64 = vld [vmem:[%s0 + $0x7c] sm:$0xf]
  %v65 = vld [vmem:[%s0 + $0x80] sm:$0xf]
  %v66 = vld [vmem:[%s0 + $0x84] sm:$0xf]
  %v67 = vld [vmem:[%s0 + $0x88] sm:$0xf]
  %v68 = vld [vmem:[%s0 + $0x8c] sm:$0xf]
  %v69 = vld [vmem:[%s0 + $0x90] sm:$0xf]
  %v70 = vld [vmem:[%s0 + $0x94] sm:$0xf]
  %v71 = vld [vmem:[%s0 + $0x98] sm:$0xf]
  %v72 = vld [vmem:[%s0 + $0x9c] sm:$0xf]
  %v73 = vld [vmem:[%s0 + $0xa0] sm:$0xf]
  %v74 = vld [vmem:[%s0 + $0xa4] sm:$0xf]
  %v75 = vld [vmem:[%s0 + $0xa8] sm:$0xf]
  %v76 = vld [vmem:[%s0 + $0xac] sm:$0xf]
  %v77 = vld [vmem:[%s0 + $0xb0] sm:$0xf]
  %v78 = vld [vmem:[%s0 + $0xb4] sm:$0xf]
  %v79 = vld [vmem:[%s0 + $0xb8] sm:$0xf]
  %v80 = vld [vmem:[%s0 + $0xbc] sm:$0xf]
  %v81 = vld [vmem:[%s0 + $0xc0] sm:$0xf]
  %v82 = vld [vmem:[%s0 + $0xc4] sm:$0xf]
  %v83 = vld [vmem:[%s0 + $0xc8] sm:$0xf]
  %v84 = vld [vmem:[%s0 + $0xcc] sm:$0xf]
  %v85 = vld [vmem:[%s0 + $0xd0] sm:$0xf]
  %v86 = vld [vmem:[%s0 + $0xd4] sm:$0xf]
  %v87 = vld [vmem:[%s0 + $0xd8] sm:$0xf]
  %v88 = vld [vmem:[%s0 + $0xdc] sm:$0xf]
  %v89 = vld [vmem:[%s0 + $0xe0] sm:$0xf]
  %v90 = vld [vmem:[%s0 + $0xe4] sm:$0xf]
  %v91 = vld [vmem:[%s0 + $0xe8] sm:$0xf]
  %v92 = vld [vmem:[%s0 + $0xec] sm:$0xf]
  %v93 = vld [vmem:[%s0 + $0xf0] sm:$0xf]
  %v94 = vld [vmem:[%s0 + $0xf4] sm:$0xf]
  %v95 = vld [vmem:[%s0 + $0xf8] sm:$0xf]
  %v96 = vld [vmem:[%s0 + $0xfc] sm:$0xf]
  %v97 = vld [vmem:[%s1] sm:$0xf]
  %v98 = vld [vmem:[%s1 + $0x4] sm:$0xf]
  %v99 = vld [vmem:[%s1 + $0x8] sm:$0xf]
  %v100 = vld [vmem:[%s1 + $0xc] sm:$0xf]
  %v101 = vld [vmem:[%s1 + $0x10] sm:$0xf]
  %v102 = vld [vmem:[%s1 + $0x14] sm:$0xf]
  %v103 = vld [vmem:[%s1 + $0x18] sm:$0xf]
  %v104 = vld [vmem:[%s1 + $0x1c] sm:$0xf]
  %v105 = vld [vmem:[%s1 + $0x20] sm:$0xf]
  %v106 = vld [vmem:[%s1 + $0x24] sm:$0xf]
  %v171 = vunpack.c.l.b16 %v33
  %v172 = vunpack.c.l.b16 %v34
  %v173 = vunpack.c.l.b16 %v35
  %v174 = vunpack.c.l.b16 %v36
  %v175 = vunpack.c.l.b16 %v37
  %v176 = vunpack.c.l.b16 %v38
  %v177 = vunpack.c.l.b16 %v39
  %v178 = vunpack.c.l.b16 %v40
  %v179 = vunpack.c.l.b16 %v41
  %v180 = vunpack.c.l.b16 %v42
  %v181 = vunpack.c.l.b16 %v43
  %v182 = vunpack.c.l.b16 %v44
  %v183 = vunpack.c.l.b16 %v45
  %v184 = vunpack.c.l.b16 %v46
  %v185 = vunpack.c.l.b16 %v47
  %v186 = vunpack.c.l.b16 %v48
  %v187 = vunpack.c.l.b16 %v49
  %v188 = vunpack.c.l.b16 %v50
  %v189 = vunpack.c.l.b16 %v51
  %v190 = vunpack.c.l.b16 %v52
  %v191 = vunpack.c.l.b16 %v53
  %v192 = vunpack.c.l.b16 %v54
  %v193 = vunpack.c.l.b16 %v55
  %v194 = vunpack.c.l.b16 %v56
  %v195 = vunpack.c.l.b16 %v57
  %v196 = vunpack.c.l.b16 %v58
  %v197 = vunpack.c.l.b16 %v59
  %v198 = vunpack.c.l.b16 %v60
  %v199 = vunpack.c.l.b16 %v61
  %v200 = vunpack.c.l.b16 %v62
  %v201 = vunpack.c.l.b16 %v63
  %v202 = vunpack.c.l.b16 %v64
  %v203 = vunpack.c.l.b16 %v65
  %v204 = vunpack.c.l.b16 %v66
  %v205 = vunpack.c.l.b16 %v67
  %v206 = vunpack.c.l.b16 %v68
  %v207 = vunpack.c.l.b16 %v69
  %v208 = vunpack.c.l.b16 %v70
  %v209 = vunpack.c.l.b16 %v71
  %v210 = vunpack.c.l.b16 %v72
  %v211 = vunpack.c.l.b16 %v73
  %v212 = vunpack.c.l.b16 %v74
  %v213 = vunpack.c.l.b16 %v75
  %v214 = vunpack.c.l.b16 %v76
  %v215 = vunpack.c.l.b16 %v77
  %v216 = vunpack.c.l.b16 %v78
  %v217 = vunpack.c.l.b16 %v79
  %v218 = vunpack.c.l.b16 %v80
  %v219 = vunpack.c.l.b16 %v81
  %v220 = vunpack.c.l.b16 %v82
  %v221 = vunpack.c.l.b16 %v83
  %v222 = vunpack.c.l.b16 %v84
  %v223 = vunpack.c.l.b16 %v85
  %v224 = vunpack.c.l.b16 %v86
  %v225 = vunpack.c.l.b16 %v87
  %v226 = vunpack.c.l.b16 %v88
  %v227 = vunpack.c.l.b16 %v89
  %v228 = vunpack.c.l.b16 %v90
  %v229 = vunpack.c.l.b16 %v91
  %v230 = vunpack.c.l.b16 %v92
  %v231 = vunpack.c.l.b16 %v93
  %v232 = vunpack.c.l.b16 %v94
  %v233 = vunpack.c.l.b16 %v95
  %v234 = vunpack.c.l.b16 %v96
  %v235 = vpack.c.b16 %v172, %v171
  %v236 = vpack.c.b16 %v174, %v173
  %v237 = vpack.c.b16 %v176, %v175
  %v238 = vpack.c.b16 %v178, %v177
  %v239 = vpack.c.b16 %v180, %v179
  %v240 = vpack.c.b16 %v182, %v181
  %v241 = vpack.c.b16 %v184, %v183
  %v242 = vpack.c.b16 %v186, %v185
  %v243 = vpack.c.b16 %v188, %v187
  %v244 = vpack.c.b16 %v190, %v189
  %v245 = vpack.c.b16 %v192, %v191
  %v246 = vpack.c.b16 %v194, %v193
  %v247 = vpack.c.b16 %v196, %v195
  %v248 = vpack.c.b16 %v198, %v197
  %v249 = vpack.c.b16 %v200, %v199
  %v250 = vpack.c.b16 %v202, %v201
  %v251 = vpack.c.b16 %v204, %v203
  %v252 = vpack.c.b16 %v206, %v205
  %v253 = vpack.c.b16 %v208, %v207
  %v254 = vpack.c.b16 %v210, %v209
  %v255 = vpack.c.b16 %v212, %v211
  %v256 = vpack.c.b16 %v214, %v213
  %v257 = vpack.c.b16 %v216, %v215
  %v258 = vpack.c.b16 %v218, %v217
  %v259 = vpack.c.b16 %v220, %v219
  %v260 = vpack.c.b16 %v222, %v221
  %v261 = vpack.c.b16 %v224, %v223
  %v262 = vpack.c.b16 %v226, %v225
  %v263 = vpack.c.b16 %v228, %v227
  %v264 = vpack.c.b16 %v230, %v229
  %v265 = vpack.c.b16 %v232, %v231
  %v266 = vpack.c.b16 %v234, %v233
  %v277 = vunpack.c.l.b16 %v97
  %v278 = vunpack.c.l.b16 %v98
  %v279 = vunpack.c.l.b16 %v99
  %v280 = vunpack.c.l.b16 %v100
  %v281 = vunpack.c.l.b16 %v101
  %v282 = vunpack.c.l.b16 %v102
  %v283 = vunpack.c.l.b16 %v103
  %v284 = vunpack.c.l.b16 %v104
  %v285 = vunpack.c.l.b16 %v105
  %v286 = vunpack.c.l.b16 %v106
  %v287 = vpack.c.b16 %v278, %v277
  %v288 = vpack.c.b16 %v280, %v279
  %v289 = vpack.c.b16 %v282, %v281
  %v290 = vpack.c.b16 %v284, %v283
  %v291 = vpack.c.b16 %v286, %v285
  %vm297 = vcmask 654336
  %v299 = vsel %vm297, %v235, 0
  %v302 = vsel %vm297, %v236, 0
  %v305 = vsel %vm297, %v237, 0
  %v308 = vsel %vm297, %v238, 0
  %v311 = vsel %vm297, %v239, 0
  %v314 = vsel %vm297, %v240, 0
  %v317 = vsel %vm297, %v241, 0
  %v320 = vsel %vm297, %v242, 0
  %v323 = vsel %vm297, %v243, 0
  %v326 = vsel %vm297, %v244, 0
  %v329 = vsel %vm297, %v245, 0
  %v332 = vsel %vm297, %v246, 0
  %v335 = vsel %vm297, %v247, 0
  %v338 = vsel %vm297, %v248, 0
  %v341 = vsel %vm297, %v249, 0
  %v344 = vsel %vm297, %v250, 0
  %v347 = vsel %vm297, %v251, 0
  %v350 = vsel %vm297, %v252, 0
  %v353 = vsel %vm297, %v253, 0
  %v356 = vsel %vm297, %v254, 0
  %v359 = vsel %vm297, %v255, 0
  %v362 = vsel %vm297, %v256, 0
  %v365 = vsel %vm297, %v257, 0
  %v368 = vsel %vm297, %v258, 0
  %v371 = vsel %vm297, %v259, 0
  %v374 = vsel %vm297, %v260, 0
  %v377 = vsel %vm297, %v261, 0
  %v380 = vsel %vm297, %v262, 0
  %v383 = vsel %vm297, %v263, 0
  %v386 = vsel %vm297, %v264, 0
  %v389 = vsel %vm297, %v265, 0
  %v392 = vsel %vm297, %v266, 0
  %394 = vmatprep.subr.bf16.mxu0 0
  %395 = vmatpush1.bf16.msra.mxu0 %v287
  %396 = vmatprep.subr.bf16.mxu0 0
  %397 = vmatpush1.bf16.msra.mxu0 %v288
  %398 = vmatprep.subr.bf16.mxu0 0
  %399 = vmatpush1.bf16.msra.mxu0 %v289
  %400 = vmatprep.subr.bf16.mxu0 0
  %401 = vmatpush1.bf16.msra.mxu0 %v290
  %402 = vmatprep.subr.bf16.mxu0 0
  %403 = vmatpush1.bf16.msra.mxu0 %v291
  %404 = vmatprep.subr.bf16.mxu0 0
  %405 = vmatpush1.bf16.msra.mxu0 0
  %406 = vmatprep.subr.bf16.mxu0 0
  %407 = vmatpush1.bf16.msra.mxu0 0
  %408 = vmatprep.subr.bf16.mxu0 0
  %409 = vmatpush1.bf16.msra.mxu0 0
  %410 = vmatprep.subr.bf16.mxu0 0
  %411 = vmatpush1.bf16.msra.mxu0 0
  %412 = vmatprep.subr.bf16.mxu0 0
  %413 = vmatpush1.bf16.msra.mxu0 0
  %414 = vmatprep.subr.bf16.mxu0 0
  %415 = vmatpush1.bf16.msra.mxu0 0
  %416 = vmatprep.subr.bf16.mxu0 0
  %417 = vmatpush1.bf16.msra.mxu0 0
  %418 = vmatprep.subr.bf16.mxu0 0
  %419 = vmatpush1.bf16.msra.mxu0 0
  %420 = vmatprep.subr.bf16.mxu0 0
  %421 = vmatpush1.bf16.msra.mxu0 0
  %422 = vmatprep.subr.bf16.mxu0 0
  %423 = vmatpush1.bf16.msra.mxu0 0
  %424 = vmatprep.subr.bf16.mxu0 0
  %425 = vmatpush1.bf16.msra.mxu0 0
  %426 = vmatprep.mubr.bf16.mxu0 0
  %427 = vmatmul.mubr.bf16.gmra.mrb[0].mxu0 %v299
  %v428 = vpop.f32.mrb[0].mxu0
  %v429 = vadd.f32 0.0, %v428
  %v430 = vpop.f32.mrb[0].mxu0
  %v431 = vpop.f32.mrb[0].mxu0
  %v432 = vadd.f32 0.0, %v431
  %v433 = vpop.f32.mrb[0].mxu0
  %434 = vmatprep.mubr.bf16.mxu0 0
  %435 = vmatmul.mubr.bf16.gmra.mrb[0].mxu0 %v302
  %v436 = vpop.f32.mrb[0].mxu0
  %v437 = vadd.f32 0.0, %v436
  %v438 = vpop.f32.mrb[0].mxu0
  %v439 = vpop.f32.mrb[0].mxu0
  %v440 = vadd.f32 0.0, %v439
  %v441 = vpop.f32.mrb[0].mxu0
  %442 = vmatprep.mubr.bf16.mxu0 0
  %443 = vmatmul.mubr.bf16.gmra.mrb[0].mxu0 %v305
  %v444 = vpop.f32.mrb[0].mxu0
  %v445 = vadd.f32 0.0, %v444
  %v446 = vpop.f32.mrb[0].mxu0
  %v447 = vpop.f32.mrb[0].mxu0
  %v448 = vadd.f32 0.0, %v447
  %v449 = vpop.f32.mrb[0].mxu0
  %450 = vmatprep.mubr.bf16.mxu0 0
  %451 = vmatmul.mubr.bf16.gmra.mrb[0].mxu0 %v308
  %v452 = vpop.f32.mrb[0].mxu0
  %v453 = vadd.f32 0.0, %v452
  %v454 = vpop.f32.mrb[0].mxu0
  %v455 = vpop.f32.mrb[0].mxu0
  %v456 = vadd.f32 0.0, %v455
  %v457 = vpop.f32.mrb[0].mxu0
  %458 = vmatprep.mubr.bf16.mxu0 0
  %459 = vmatmul.mubr.bf16.gmra.mrb[0].mxu0 %v311
  %v460 = vpop.f32.mrb[0].mxu0
  %v461 = vadd.f32 0.0, %v460
  %v462 = vpop.f32.mrb[0].mxu0
  %v463 = vpop.f32.mrb[0].mxu0
  %v464 = vadd.f32 0.0, %v463
  %v465 = vpop.f32.mrb[0].mxu0
  %466 = vmatprep.mubr.bf16.mxu0 0
  %467 = vmatmul.mubr.bf16.gmra.mrb[0].mxu0 %v314
  %v468 = vpop.f32.mrb[0].mxu0
  %v469 = vadd.f32 0.0, %v468
  %v470 = vpop.f32.mrb[0].mxu0
  %v471 = vpop.f32.mrb[0].mxu0
  %v472 = vadd.f32 0.0, %v471
  %v473 = vpop.f32.mrb[0].mxu0
  %474 = vmatprep.mubr.bf16.mxu0 0
  %475 = vmatmul.mubr.bf16.gmra.mrb[0].mxu0 %v317
  %v476 = vpop.f32.mrb[0].mxu0
  %v477 = vadd.f32 0.0, %v476
  %v478 = vpop.f32.mrb[0].mxu0
  %v479 = vpop.f32.mrb[0].mxu0
  %v480 = vadd.f32 0.0, %v479
  %v481 = vpop.f32.mrb[0].mxu0
  %482 = vmatprep.mubr.bf16.mxu0 0
  %483 = vmatmul.mubr.bf16.gmra.mrb[0].mxu0 %v320
  %v484 = vpop.f32.mrb[0].mxu0
  %v485 = vadd.f32 0.0, %v484
  %v486 = vpop.f32.mrb[0].mxu0
  %v487 = vpop.f32.mrb[0].mxu0
  %v488 = vadd.f32 0.0, %v487
  %v489 = vpop.f32.mrb[0].mxu0
  %490 = vmatprep.mubr.bf16.mxu0 0
  %491 = vmatmul.mubr.bf16.gmra.mrb[0].mxu0 %v323
  %v492 = vpop.f32.mrb[0].mxu0
  %v493 = vadd.f32 0.0, %v492
  %v494 = vpop.f32.mrb[0].mxu0
  %v495 = vpop.f32.mrb[0].mxu0
  %v496 = vadd.f32 0.0, %v495
  %v497 = vpop.f32.mrb[0].mxu0
  %498 = vmatprep.mubr.bf16.mxu0 0
  %499 = vmatmul.mubr.bf16.gmra.mrb[0].mxu0 %v326
  %v500 = vpop.f32.mrb[0].mxu0
  %v501 = vadd.f32 0.0, %v500
  %v502 = vpop.f32.mrb[0].mxu0
  %v503 = vpop.f32.mrb[0].mxu0
  %v504 = vadd.f32 0.0, %v503
  %v505 = vpop.f32.mrb[0].mxu0
  %506 = vmatprep.mubr.bf16.mxu0 0
  %507 = vmatmul.mubr.bf16.gmra.mrb[0].mxu0 %v329
  %v508 = vpop.f32.mrb[0].mxu0
  %v509 = vadd.f32 0.0, %v508
  %v510 = vpop.f32.mrb[0].mxu0
  %v511 = vpop.f32.mrb[0].mxu0
  %v512 = vadd.f32 0.0, %v511
  %v513 = vpop.f32.mrb[0].mxu0
  %514 = vmatprep.mubr.bf16.mxu0 0
  %515 = vmatmul.mubr.bf16.gmra.mrb[0].mxu0 %v332
  %v516 = vpop.f32.mrb[0].mxu0
  %v517 = vadd.f32 0.0, %v516
  %v518 = vpop.f32.mrb[0].mxu0
  %v519 = vpop.f32.mrb[0].mxu0
  %v520 = vadd.f32 0.0, %v519
  %v521 = vpop.f32.mrb[0].mxu0
  %522 = vmatprep.mubr.bf16.mxu0 0
  %523 = vmatmul.mubr.bf16.gmra.mrb[0].mxu0 %v335
  %v524 = vpop.f32.mrb[0].mxu0
  %v525 = vadd.f32 0.0, %v524
  %v526 = vpop.f32.mrb[0].mxu0
  %v527 = vpop.f32.mrb[0].mxu0
  %v528 = vadd.f32 0.0, %v527
  %v529 = vpop.f32.mrb[0].mxu0
  %530 = vmatprep.mubr.bf16.mxu0 0
  %531 = vmatmul.mubr.bf16.gmra.mrb[0].mxu0 %v338
  %v532 = vpop.f32.mrb[0].mxu0
  %v533 = vadd.f32 0.0, %v532
  %v534 = vpop.f32.mrb[0].mxu0
  %v535 = vpop.f32.mrb[0].mxu0
  %v536 = vadd.f32 0.0, %v535
  %v537 = vpop.f32.mrb[0].mxu0
  %538 = vmatprep.mubr.bf16.mxu0 0
  %539 = vmatmul.mubr.bf16.gmra.mrb[0].mxu0 %v341
  %v540 = vpop.f32.mrb[0].mxu0
  %v541 = vadd.f32 0.0, %v540
  %v542 = vpop.f32.mrb[0].mxu0
  %v543 = vpop.f32.mrb[0].mxu0
  %v544 = vadd.f32 0.0, %v543
  %v545 = vpop.f32.mrb[0].mxu0
  %546 = vmatprep.mubr.bf16.mxu0 0
  %547 = vmatmul.mubr.bf16.gmra.mrb[0].mxu0 %v344
  %v548 = vpop.f32.mrb[0].mxu0
  %v549 = vadd.f32 0.0, %v548
  %v550 = vpop.f32.mrb[0].mxu0
  %v551 = vpop.f32.mrb[0].mxu0
  %v552 = vadd.f32 0.0, %v551
  %v553 = vpop.f32.mrb[0].mxu0
  %554 = vmatprep.mubr.bf16.mxu0 0
  %555 = vmatmul.mubr.bf16.gmra.mrb[0].mxu0 %v347
  %v556 = vpop.f32.mrb[0].mxu0
  %v557 = vadd.f32 0.0, %v556
  %v558 = vpop.f32.mrb[0].mxu0
  %v559 = vpop.f32.mrb[0].mxu0
  %v560 = vadd.f32 0.0, %v559
  %v561 = vpop.f32.mrb[0].mxu0
  %562 = vmatprep.mubr.bf16.mxu0 0
  %563 = vmatmul.mubr.bf16.gmra.mrb[0].mxu0 %v350
  %v564 = vpop.f32.mrb[0].mxu0
  %v565 = vadd.f32 0.0, %v564
  %v566 = vpop.f32.mrb[0].mxu0
  %v567 = vpop.f32.mrb[0].mxu0
  %v568 = vadd.f32 0.0, %v567
  %v569 = vpop.f32.mrb[0].mxu0
  %570 = vmatprep.mubr.bf16.mxu0 0
  %571 = vmatmul.mubr.bf16.gmra.mrb[0].mxu0 %v353
  %v572 = vpop.f32.mrb[0].mxu0
  %v573 = vadd.f32 0.0, %v572
  %v574 = vpop.f32.mrb[0].mxu0
  %v575 = vpop.f32.mrb[0].mxu0
  %v576 = vadd.f32 0.0, %v575
  %v577 = vpop.f32.mrb[0].mxu0
  %578 = vmatprep.mubr.bf16.mxu0 0
  %579 = vmatmul.mubr.bf16.gmra.mrb[0].mxu0 %v356
  %v580 = vpop.f32.mrb[0].mxu0
  %v581 = vadd.f32 0.0, %v580
  %v582 = vpop.f32.mrb[0].mxu0
  %v583 = vpop.f32.mrb[0].mxu0
  %v584 = vadd.f32 0.0, %v583
  %v585 = vpop.f32.mrb[0].mxu0
  %586 = vmatprep.mubr.bf16.mxu0 0
  %587 = vmatmul.mubr.bf16.gmra.mrb[0].mxu0 %v359
  %v588 = vpop.f32.mrb[0].mxu0
  %v589 = vadd.f32 0.0, %v588
  %v590 = vpop.f32.mrb[0].mxu0
  %v591 = vpop.f32.mrb[0].mxu0
  %v592 = vadd.f32 0.0, %v591
  %v593 = vpop.f32.mrb[0].mxu0
  %594 = vmatprep.mubr.bf16.mxu0 0
  %595 = vmatmul.mubr.bf16.gmra.mrb[0].mxu0 %v362
  %v596 = vpop.f32.mrb[0].mxu0
  %v597 = vadd.f32 0.0, %v596
  %v598 = vpop.f32.mrb[0].mxu0
  %v599 = vpop.f32.mrb[0].mxu0
  %v600 = vadd.f32 0.0, %v599
  %v601 = vpop.f32.mrb[0].mxu0
  %602 = vmatprep.mubr.bf16.mxu0 0
  %603 = vmatmul.mubr.bf16.gmra.mrb[0].mxu0 %v365
  %v604 = vpop.f32.mrb[0].mxu0
  %v605 = vadd.f32 0.0, %v604
  %v606 = vpop.f32.mrb[0].mxu0
  %v607 = vpop.f32.mrb[0].mxu0
  %v608 = vadd.f32 0.0, %v607
  %v609 = vpop.f32.mrb[0].mxu0
  %610 = vmatprep.mubr.bf16.mxu0 0
  %611 = vmatmul.mubr.bf16.gmra.mrb[0].mxu0 %v368
  %v612 = vpop.f32.mrb[0].mxu0
  %v613 = vadd.f32 0.0, %v612
  %v614 = vpop.f32.mrb[0].mxu0
  %v615 = vpop.f32.mrb[0].mxu0
  %v616 = vadd.f32 0.0, %v615
  %v617 = vpop.f32.mrb[0].mxu0
  %618 = vmatprep.mubr.bf16.mxu0 0
  %619 = vmatmul.mubr.bf16.gmra.mrb[0].mxu0 %v371
  %v620 = vpop.f32.mrb[0].mxu0
  %v621 = vadd.f32 0.0, %v620
  %v622 = vpop.f32.mrb[0].mxu0
  %v623 = vpop.f32.mrb[0].mxu0
  %v624 = vadd.f32 0.0, %v623
  %v625 = vpop.f32.mrb[0].mxu0
  %626 = vmatprep.mubr.bf16.mxu0 0
  %627 = vmatmul.mubr.bf16.gmra.mrb[0].mxu0 %v374
  %v628 = vpop.f32.mrb[0].mxu0
  %v629 = vadd.f32 0.0, %v628
  %v630 = vpop.f32.mrb[0].mxu0
  %v631 = vpop.f32.mrb[0].mxu0
  %v632 = vadd.f32 0.0, %v631
  %v633 = vpop.f32.mrb[0].mxu0
  %634 = vmatprep.mubr.bf16.mxu0 0
  %635 = vmatmul.mubr.bf16.gmra.mrb[0].mxu0 %v377
  %v636 = vpop.f32.mrb[0].mxu0
  %v637 = vadd.f32 0.0, %v636
  %v638 = vpop.f32.mrb[0].mxu0
  %v639 = vpop.f32.mrb[0].mxu0
  %v640 = vadd.f32 0.0, %v639
  %v641 = vpop.f32.mrb[0].mxu0
  %642 = vmatprep.mubr.bf16.mxu0 0
  %643 = vmatmul.mubr.bf16.gmra.mrb[0].mxu0 %v380
  %v644 = vpop.f32.mrb[0].mxu0
  %v645 = vadd.f32 0.0, %v644
  %v646 = vpop.f32.mrb[0].mxu0
  %v647 = vpop.f32.mrb[0].mxu0
  %v648 = vadd.f32 0.0, %v647
  %v649 = vpop.f32.mrb[0].mxu0
  %650 = vmatprep.mubr.bf16.mxu0 0
  %651 = vmatmul.mubr.bf16.gmra.mrb[0].mxu0 %v383
  %v652 = vpop.f32.mrb[0].mxu0
  %v653 = vadd.f32 0.0, %v652
  %v654 = vpop.f32.mrb[0].mxu0
  %v655 = vpop.f32.mrb[0].mxu0
  %v656 = vadd.f32 0.0, %v655
  %v657 = vpop.f32.mrb[0].mxu0
  %658 = vmatprep.mubr.bf16.mxu0 0
  %659 = vmatmul.mubr.bf16.gmra.mrb[0].mxu0 %v386
  %v660 = vpop.f32.mrb[0].mxu0
  %v661 = vadd.f32 0.0, %v660
  %v662 = vpop.f32.mrb[0].mxu0
  %v663 = vpop.f32.mrb[0].mxu0
  %v664 = vadd.f32 0.0, %v663
  %v665 = vpop.f32.mrb[0].mxu0
  %666 = vmatprep.mubr.bf16.mxu0 0
  %667 = vmatmul.mubr.bf16.gmra.mrb[0].mxu0 %v389
  %v668 = vpop.f32.mrb[0].mxu0
  %v669 = vadd.f32 0.0, %v668
  %v670 = vpop.f32.mrb[0].mxu0
  %v671 = vpop.f32.mrb[0].mxu0
  %v672 = vadd.f32 0.0, %v671
  %v673 = vpop.f32.mrb[0].mxu0
  %674 = vmatprep.mubr.bf16.mxu0 0
  %675 = vmatmul.mubr.bf16.gmra.mrb[0].mxu0 %v392
  %v676 = vpop.f32.mrb[0].mxu0
  %v677 = vadd.f32 0.0, %v676
  %v678 = vpop.f32.mrb[0].mxu0
  %v679 = vpop.f32.mrb[0].mxu0
  %v680 = vadd.f32 0.0, %v679
  %v681 = vpop.f32.mrb[0].mxu0
  %682 = vdwg.mxu0
  %v683 = vmax.f32 %v429, %v493
  %v684 = vmax.f32 %v432, %v496
  %v685 = vmax.f32 %v437, %v501
  %v686 = vmax.f32 %v440, %v504
  %v687 = vmax.f32 %v445, %v509
  %v688 = vmax.f32 %v448, %v512
  %v689 = vmax.f32 %v453, %v517
  %v690 = vmax.f32 %v456, %v520
  %v691 = vmax.f32 %v461, %v525
  %v692 = vmax.f32 %v464, %v528
  %v693 = vmax.f32 %v469, %v533
  %v694 = vmax.f32 %v472, %v536
  %v695 = vmax.f32 %v477, %v541
  %v696 = vmax.f32 %v480, %v544
  %v697 = vmax.f32 %v485, %v549
  %v698 = vmax.f32 %v488, %v552
  %v699 = vmax.f32 %v557, %v621
  %v700 = vmax.f32 %v560, %v624
  %v701 = vmax.f32 %v565, %v629
  %v702 = vmax.f32 %v568, %v632
  %v703 = vmax.f32 %v573, %v637
  %v704 = vmax.f32 %v576, %v640
  %v705 = vmax.f32 %v581, %v645
  %v706 = vmax.f32 %v584, %v648
  %v707 = vmax.f32 %v589, %v653
  %v708 = vmax.f32 %v592, %v656
  %v709 = vmax.f32 %v597, %v661
  %v710 = vmax.f32 %v600, %v664
  %v711 = vmax.f32 %v605, %v669
  %v712 = vmax.f32 %v608, %v672
  %v713 = vmax.f32 %v613, %v677
  %v714 = vmax.f32 %v616, %v680
  %v715 = vmax.f32 %v683, %v699
  %v716 = vmax.f32 %v684, %v700
  %v717 = vmax.f32 %v685, %v701
  %v718 = vmax.f32 %v686, %v702
  %v719 = vmax.f32 %v687, %v703
  %v720 = vmax.f32 %v688, %v704
  %v721 = vmax.f32 %v689, %v705
  %v722 = vmax.f32 %v690, %v706
  %v723 = vmax.f32 %v691, %v707
  %v724 = vmax.f32 %v692, %v708
  %v725 = vmax.f32 %v693, %v709
  %v726 = vmax.f32 %v694, %v710
  %v727 = vmax.f32 %v695, %v711
  %v728 = vmax.f32 %v696, %v712
  %v729 = vmax.f32 %v697, %v713
  %v730 = vmax.f32 %v698, %v714
  %v731 = vld [vmem:[%s2] sm:$0x1]
  %v733 = vlaneseq
  %v734 = vshrl.u32 %v733, 7
  %v735 = vsub.s32 0, %v734
  %v736 = vrot.slane %v731, %v735
  %v738 = vadd.f32 %v715, %v736
  %v739 = vadd.f32 %v716, %v736
  %v740 = vadd.f32 %v717, %v736
  %v741 = vadd.f32 %v718, %v736
  %v742 = vadd.f32 %v719, %v736
  %v743 = vadd.f32 %v720, %v736
  %v744 = vadd.f32 %v721, %v736
  %v745 = vadd.f32 %v722, %v736
  %v746 = vadd.f32 %v723, %v736
  %v747 = vadd.f32 %v724, %v736
  %v748 = vadd.f32 %v725, %v736
  %v749 = vadd.f32 %v726, %v736
  %v750 = vadd.f32 %v727, %v736
  %v751 = vadd.f32 %v728, %v736
  %v752 = vadd.f32 %v729, %v736
  %v753 = vadd.f32 %v730, %v736
  %v754 = vmax.f32 %v738, 0.0
  %v755 = vmax.f32 %v739, 0.0
  %v756 = vmax.f32 %v740, 0.0
  %v757 = vmax.f32 %v741, 0.0
  %v758 = vmax.f32 %v742, 0.0
  %v759 = vmax.f32 %v743, 0.0
  %v760 = vmax.f32 %v744, 0.0
  %v761 = vmax.f32 %v745, 0.0
  %v762 = vmax.f32 %v746, 0.0
  %v763 = vmax.f32 %v747, 0.0
  %v764 = vmax.f32 %v748, 0.0
  %v765 = vmax.f32 %v749, 0.0
  %v766 = vmax.f32 %v750, 0.0
  %v767 = vmax.f32 %v751, 0.0
  %v768 = vmax.f32 %v752, 0.0
  %v769 = vmax.f32 %v753, 0.0
  %v770 = vpack.c.bf16 %v754, %v754
  %v771 = vld [vmem:[%s3] sm:$0xf]
  %v772 = vld [vmem:[%s3 + $0x4] sm:$0xf]
  %v773 = vpack.c.bf16 %v755, %v755
  %s774 = scalar_lea.vmem %s3, 8
  %v775 = vld [vmem:[%s774] sm:$0xf]
  %v776 = vld [vmem:[%s774 + $0x4] sm:$0xf]
  %v779 = vunpack.c.l.b16 %v775
  %v780 = vunpack.c.l.b16 %v776
  %v781 = vpack.c.b16 %v780, %v779
  %vm783 = vcmask 130048
  %v785 = vsel %vm783, %v773, 0
  %787 = vmatprep.subr.bf16.mxu0 0
  %788 = vmatpush1.bf16.msra.mxu0 %v781
  %789 = vmatprep.subr.bf16.mxu0 0
  %790 = vmatpush1.bf16.msra.mxu0 0
  %791 = vmatprep.subr.bf16.mxu0 0
  %792 = vmatpush1.bf16.msra.mxu0 0
  %793 = vmatprep.subr.bf16.mxu0 0
  %794 = vmatpush1.bf16.msra.mxu0 0
  %795 = vmatprep.subr.bf16.mxu0 0
  %796 = vmatpush1.bf16.msra.mxu0 0
  %797 = vmatprep.subr.bf16.mxu0 0
  %798 = vmatpush1.bf16.msra.mxu0 0
  %799 = vmatprep.subr.bf16.mxu0 0
  %800 = vmatpush1.bf16.msra.mxu0 0
  %801 = vmatprep.subr.bf16.mxu0 0
  %802 = vmatpush1.bf16.msra.mxu0 0
  %803 = vmatprep.subr.bf16.mxu0 0
  %804 = vmatpush1.bf16.msra.mxu0 0
  %805 = vmatprep.subr.bf16.mxu0 0
  %806 = vmatpush1.bf16.msra.mxu0 0
  %807 = vmatprep.subr.bf16.mxu0 0
  %808 = vmatpush1.bf16.msra.mxu0 0
  %809 = vmatprep.subr.bf16.mxu0 0
  %810 = vmatpush1.bf16.msra.mxu0 0
  %811 = vmatprep.subr.bf16.mxu0 0
  %812 = vmatpush1.bf16.msra.mxu0 0
  %813 = vmatprep.subr.bf16.mxu0 0
  %814 = vmatpush1.bf16.msra.mxu0 0
  %815 = vmatprep.subr.bf16.mxu0 0
  %816 = vmatpush1.bf16.msra.mxu0 0
  %817 = vmatprep.subr.bf16.mxu0 0
  %818 = vmatpush1.bf16.msra.mxu0 0
  %819 = vmatprep.mubr.bf16.mxu0 0
  %820 = vmatmul.mubr.bf16.gmra.mrb[0].mxu0 %v785
  %v821 = vpop.f32.mrb[0].mxu0
  %v822 = vadd.f32 0.0, %v821
  %v823 = vpop.f32.mrb[0].mxu0
  %v824 = vpop.f32.mrb[0].mxu0
  %v825 = vpop.f32.mrb[0].mxu0
  %826 = vdwg.mxu0
  %v829 = vunpack.c.l.b16 %v771
  %v830 = vunpack.c.l.b16 %v772
  %v831 = vpack.c.b16 %v830, %v829
  %v834 = vsel %vm783, %v770, 0
  %836 = vmatprep.subr.bf16.mxu0 0
  %837 = vmatpush1.bf16.msra.mxu0 %v831
  %838 = vmatprep.subr.bf16.mxu0 0
  %839 = vmatpush1.bf16.msra.mxu0 0
  %840 = vmatprep.subr.bf16.mxu0 0
  %841 = vmatpush1.bf16.msra.mxu0 0
  %842 = vmatprep.subr.bf16.mxu0 0
  %843 = vmatpush1.bf16.msra.mxu0 0
  %844 = vmatprep.subr.bf16.mxu0 0
  %845 = vmatpush1.bf16.msra.mxu0 0
  %846 = vmatprep.subr.bf16.mxu0 0
  %847 = vmatpush1.bf16.msra.mxu0 0
  %848 = vmatprep.subr.bf16.mxu0 0
  %849 = vmatpush1.bf16.msra.mxu0 0
  %850 = vmatprep.subr.bf16.mxu0 0
  %851 = vmatpush1.bf16.msra.mxu0 0
  %852 = vmatprep.subr.bf16.mxu0 0
  %853 = vmatpush1.bf16.msra.mxu0 0
  %854 = vmatprep.subr.bf16.mxu0 0
  %855 = vmatpush1.bf16.msra.mxu0 0
  %856 = vmatprep.subr.bf16.mxu0 0
  %857 = vmatpush1.bf16.msra.mxu0 0
  %858 = vmatprep.subr.bf16.mxu0 0
  %859 = vmatpush1.bf16.msra.mxu0 0
  %860 = vmatprep.subr.bf16.mxu0 0
  %861 = vmatpush1.bf16.msra.mxu0 0
  %862 = vmatprep.subr.bf16.mxu0 0
  %863 = vmatpush1.bf16.msra.mxu0 0
  %864 = vmatprep.subr.bf16.mxu0 0
  %865 = vmatpush1.bf16.msra.mxu0 0
  %866 = vmatprep.subr.bf16.mxu0 0
  %867 = vmatpush1.bf16.msra.mxu0 0
  %868 = vmatprep.mubr.bf16.mxu0 0
  %869 = vmatmul.mubr.bf16.gmra.mrb[0].mxu0 %v834
  %v870 = vpop.f32.mrb[0].mxu0
  %v871 = vadd.f32 %v822, %v870
  %v872 = vpop.f32.mrb[0].mxu0
  %v873 = vpop.f32.mrb[0].mxu0
  %v874 = vpop.f32.mrb[0].mxu0
  %875 = vdwg.mxu0
  %v876 = vpack.c.bf16 %v756, %v756
  %s877 = scalar_lea.vmem %s3, 16
  %v878 = vld [vmem:[%s877] sm:$0xf]
  %v879 = vld [vmem:[%s877 + $0x4] sm:$0xf]
  %v882 = vunpack.c.l.b16 %v878
  %v883 = vunpack.c.l.b16 %v879
  %v884 = vpack.c.b16 %v883, %v882
  %v887 = vsel %vm783, %v876, 0
  %889 = vmatprep.subr.bf16.mxu0 0
  %890 = vmatpush1.bf16.msra.mxu0 %v884
  %891 = vmatprep.subr.bf16.mxu0 0
  %892 = vmatpush1.bf16.msra.mxu0 0
  %893 = vmatprep.subr.bf16.mxu0 0
  %894 = vmatpush1.bf16.msra.mxu0 0
  %895 = vmatprep.subr.bf16.mxu0 0
  %896 = vmatpush1.bf16.msra.mxu0 0
  %897 = vmatprep.subr.bf16.mxu0 0
  %898 = vmatpush1.bf16.msra.mxu0 0
  %899 = vmatprep.subr.bf16.mxu0 0
  %900 = vmatpush1.bf16.msra.mxu0 0
  %901 = vmatprep.subr.bf16.mxu0 0
  %902 = vmatpush1.bf16.msra.mxu0 0
  %903 = vmatprep.subr.bf16.mxu0 0
  %904 = vmatpush1.bf16.msra.mxu0 0
  %905 = vmatprep.subr.bf16.mxu0 0
  %906 = vmatpush1.bf16.msra.mxu0 0
  %907 = vmatprep.subr.bf16.mxu0 0
  %908 = vmatpush1.bf16.msra.mxu0 0
  %909 = vmatprep.subr.bf16.mxu0 0
  %910 = vmatpush1.bf16.msra.mxu0 0
  %911 = vmatprep.subr.bf16.mxu0 0
  %912 = vmatpush1.bf16.msra.mxu0 0
  %913 = vmatprep.subr.bf16.mxu0 0
  %914 = vmatpush1.bf16.msra.mxu0 0
  %915 = vmatprep.subr.bf16.mxu0 0
  %916 = vmatpush1.bf16.msra.mxu0 0
  %917 = vmatprep.subr.bf16.mxu0 0
  %918 = vmatpush1.bf16.msra.mxu0 0
  %919 = vmatprep.subr.bf16.mxu0 0
  %920 = vmatpush1.bf16.msra.mxu0 0
  %921 = vmatprep.mubr.bf16.mxu0 0
  %922 = vmatmul.mubr.bf16.gmra.mrb[0].mxu0 %v887
  %v923 = vpop.f32.mrb[0].mxu0
  %v924 = vadd.f32 0.0, %v923
  %v925 = vpop.f32.mrb[0].mxu0
  %v926 = vpop.f32.mrb[0].mxu0
  %v927 = vpop.f32.mrb[0].mxu0
  %928 = vdwg.mxu0
  %v929 = vadd.f32 %v871, %v924
  %v930 = vpack.c.bf16 %v757, %v757
  %s931 = scalar_lea.vmem %s3, 24
  %v932 = vld [vmem:[%s931] sm:$0xf]
  %v933 = vld [vmem:[%s931 + $0x4] sm:$0xf]
  %v936 = vunpack.c.l.b16 %v932
  %v937 = vunpack.c.l.b16 %v933
  %v938 = vpack.c.b16 %v937, %v936
  %v941 = vsel %vm783, %v930, 0
  %943 = vmatprep.subr.bf16.mxu0 0
  %944 = vmatpush1.bf16.msra.mxu0 %v938
  %945 = vmatprep.subr.bf16.mxu0 0
  %946 = vmatpush1.bf16.msra.mxu0 0
  %947 = vmatprep.subr.bf16.mxu0 0
  %948 = vmatpush1.bf16.msra.mxu0 0
  %949 = vmatprep.subr.bf16.mxu0 0
  %950 = vmatpush1.bf16.msra.mxu0 0
  %951 = vmatprep.subr.bf16.mxu0 0
  %952 = vmatpush1.bf16.msra.mxu0 0
  %953 = vmatprep.subr.bf16.mxu0 0
  %954 = vmatpush1.bf16.msra.mxu0 0
  %955 = vmatprep.subr.bf16.mxu0 0
  %956 = vmatpush1.bf16.msra.mxu0 0
  %957 = vmatprep.subr.bf16.mxu0 0
  %958 = vmatpush1.bf16.msra.mxu0 0
  %959 = vmatprep.subr.bf16.mxu0 0
  %960 = vmatpush1.bf16.msra.mxu0 0
  %961 = vmatprep.subr.bf16.mxu0 0
  %962 = vmatpush1.bf16.msra.mxu0 0
  %963 = vmatprep.subr.bf16.mxu0 0
  %964 = vmatpush1.bf16.msra.mxu0 0
  %965 = vmatprep.subr.bf16.mxu0 0
  %966 = vmatpush1.bf16.msra.mxu0 0
  %967 = vmatprep.subr.bf16.mxu0 0
  %968 = vmatpush1.bf16.msra.mxu0 0
  %969 = vmatprep.subr.bf16.mxu0 0
  %970 = vmatpush1.bf16.msra.mxu0 0
  %971 = vmatprep.subr.bf16.mxu0 0
  %972 = vmatpush1.bf16.msra.mxu0 0
  %973 = vmatprep.subr.bf16.mxu0 0
  %974 = vmatpush1.bf16.msra.mxu0 0
  %975 = vmatprep.mubr.bf16.mxu0 0
  %976 = vmatmul.mubr.bf16.gmra.mrb[0].mxu0 %v941
  %v977 = vpop.f32.mrb[0].mxu0
  %v978 = vadd.f32 0.0, %v977
  %v979 = vpop.f32.mrb[0].mxu0
  %v980 = vpop.f32.mrb[0].mxu0
  %v981 = vpop.f32.mrb[0].mxu0
  %982 = vdwg.mxu0
  %v983 = vadd.f32 %v929, %v978
  %v984 = vpack.c.bf16 %v758, %v758
  %s985 = scalar_lea.vmem %s3, 32
  %v986 = vld [vmem:[%s985] sm:$0xf]
  %v987 = vld [vmem:[%s985 + $0x4] sm:$0xf]
  %v990 = vunpack.c.l.b16 %v986
  %v991 = vunpack.c.l.b16 %v987
  %v992 = vpack.c.b16 %v991, %v990
  %v995 = vsel %vm783, %v984, 0
  %997 = vmatprep.subr.bf16.mxu0 0
  %998 = vmatpush1.bf16.msra.mxu0 %v992
  %999 = vmatprep.subr.bf16.mxu0 0
  %1000 = vmatpush1.bf16.msra.mxu0 0
  %1001 = vmatprep.subr.bf16.mxu0 0
  %1002 = vmatpush1.bf16.msra.mxu0 0
  %1003 = vmatprep.subr.bf16.mxu0 0
  %1004 = vmatpush1.bf16.msra.mxu0 0
  %1005 = vmatprep.subr.bf16.mxu0 0
  %1006 = vmatpush1.bf16.msra.mxu0 0
  %1007 = vmatprep.subr.bf16.mxu0 0
  %1008 = vmatpush1.bf16.msra.mxu0 0
  %1009 = vmatprep.subr.bf16.mxu0 0
  %1010 = vmatpush1.bf16.msra.mxu0 0
  %1011 = vmatprep.subr.bf16.mxu0 0
  %1012 = vmatpush1.bf16.msra.mxu0 0
  %1013 = vmatprep.subr.bf16.mxu0 0
  %1014 = vmatpush1.bf16.msra.mxu0 0
  %1015 = vmatprep.subr.bf16.mxu0 0
  %1016 = vmatpush1.bf16.msra.mxu0 0
  %1017 = vmatprep.subr.bf16.mxu0 0
  %1018 = vmatpush1.bf16.msra.mxu0 0
  %1019 = vmatprep.subr.bf16.mxu0 0
  %1020 = vmatpush1.bf16.msra.mxu0 0
  %1021 = vmatprep.subr.bf16.mxu0 0
  %1022 = vmatpush1.bf16.msra.mxu0 0
  %1023 = vmatprep.subr.bf16.mxu0 0
  %1024 = vmatpush1.bf16.msra.mxu0 0
  %1025 = vmatprep.subr.bf16.mxu0 0
  %1026 = vmatpush1.bf16.msra.mxu0 0
  %1027 = vmatprep.subr.bf16.mxu0 0
  %1028 = vmatpush1.bf16.msra.mxu0 0
  %1029 = vmatprep.mubr.bf16.mxu0 0
  %1030 = vmatmul.mubr.bf16.gmra.mrb[0].mxu0 %v995
  %v1031 = vpop.f32.mrb[0].mxu0
  %v1032 = vadd.f32 0.0, %v1031
  %v1033 = vpop.f32.mrb[0].mxu0
  %v1034 = vpop.f32.mrb[0].mxu0
  %v1035 = vpop.f32.mrb[0].mxu0
  %1036 = vdwg.mxu0
  %v1037 = vadd.f32 %v983, %v1032
  %v1038 = vpack.c.bf16 %v759, %v759
  %s1039 = scalar_lea.vmem %s3, 40
  %v1040 = vld [vmem:[%s1039] sm:$0xf]
  %v1041 = vld [vmem:[%s1039 + $0x4] sm:$0xf]
  %v1044 = vunpack.c.l.b16 %v1040
  %v1045 = vunpack.c.l.b16 %v1041
  %v1046 = vpack.c.b16 %v1045, %v1044
  %v1049 = vsel %vm783, %v1038, 0
  %1051 = vmatprep.subr.bf16.mxu0 0
  %1052 = vmatpush1.bf16.msra.mxu0 %v1046
  %1053 = vmatprep.subr.bf16.mxu0 0
  %1054 = vmatpush1.bf16.msra.mxu0 0
  %1055 = vmatprep.subr.bf16.mxu0 0
  %1056 = vmatpush1.bf16.msra.mxu0 0
  %1057 = vmatprep.subr.bf16.mxu0 0
  %1058 = vmatpush1.bf16.msra.mxu0 0
  %1059 = vmatprep.subr.bf16.mxu0 0
  %1060 = vmatpush1.bf16.msra.mxu0 0
  %1061 = vmatprep.subr.bf16.mxu0 0
  %1062 = vmatpush1.bf16.msra.mxu0 0
  %1063 = vmatprep.subr.bf16.mxu0 0
  %1064 = vmatpush1.bf16.msra.mxu0 0
  %1065 = vmatprep.subr.bf16.mxu0 0
  %1066 = vmatpush1.bf16.msra.mxu0 0
  %1067 = vmatprep.subr.bf16.mxu0 0
  %1068 = vmatpush1.bf16.msra.mxu0 0
  %1069 = vmatprep.subr.bf16.mxu0 0
  %1070 = vmatpush1.bf16.msra.mxu0 0
  %1071 = vmatprep.subr.bf16.mxu0 0
  %1072 = vmatpush1.bf16.msra.mxu0 0
  %1073 = vmatprep.subr.bf16.mxu0 0
  %1074 = vmatpush1.bf16.msra.mxu0 0
  %1075 = vmatprep.subr.bf16.mxu0 0
  %1076 = vmatpush1.bf16.msra.mxu0 0
  %1077 = vmatprep.subr.bf16.mxu0 0
  %1078 = vmatpush1.bf16.msra.mxu0 0
  %1079 = vmatprep.subr.bf16.mxu0 0
  %1080 = vmatpush1.bf16.msra.mxu0 0
  %1081 = vmatprep.subr.bf16.mxu0 0
  %1082 = vmatpush1.bf16.msra.mxu0 0
  %1083 = vmatprep.mubr.bf16.mxu0 0
  %1084 = vmatmul.mubr.bf16.gmra.mrb[0].mxu0 %v1049
  %v1085 = vpop.f32.mrb[0].mxu0
  %v1086 = vadd.f32 0.0, %v1085
  %v1087 = vpop.f32.mrb[0].mxu0
  %v1088 = vpop.f32.mrb[0].mxu0
  %v1089 = vpop.f32.mrb[0].mxu0
  %1090 = vdwg.mxu0
  %v1091 = vadd.f32 %v1037, %v1086
  %v1092 = vpack.c.bf16 %v760, %v760
  %s1093 = scalar_lea.vmem %s3, 48
  %v1094 = vld [vmem:[%s1093] sm:$0xf]
  %v1095 = vld [vmem:[%s1093 + $0x4] sm:$0xf]
  %v1098 = vunpack.c.l.b16 %v1094
  %v1099 = vunpack.c.l.b16 %v1095
  %v1100 = vpack.c.b16 %v1099, %v1098
  %v1103 = vsel %vm783, %v1092, 0
  %1105 = vmatprep.subr.bf16.mxu0 0
  %1106 = vmatpush1.bf16.msra.mxu0 %v1100
  %1107 = vmatprep.subr.bf16.mxu0 0
  %1108 = vmatpush1.bf16.msra.mxu0 0
  %1109 = vmatprep.subr.bf16.mxu0 0
  %1110 = vmatpush1.bf16.msra.mxu0 0
  %1111 = vmatprep.subr.bf16.mxu0 0
  %1112 = vmatpush1.bf16.msra.mxu0 0
  %1113 = vmatprep.subr.bf16.mxu0 0
  %1114 = vmatpush1.bf16.msra.mxu0 0
  %1115 = vmatprep.subr.bf16.mxu0 0
  %1116 = vmatpush1.bf16.msra.mxu0 0
  %1117 = vmatprep.subr.bf16.mxu0 0
  %1118 = vmatpush1.bf16.msra.mxu0 0
  %1119 = vmatprep.subr.bf16.mxu0 0
  %1120 = vmatpush1.bf16.msra.mxu0 0
  %1121 = vmatprep.subr.bf16.mxu0 0
  %1122 = vmatpush1.bf16.msra.mxu0 0
  %1123 = vmatprep.subr.bf16.mxu0 0
  %1124 = vmatpush1.bf16.msra.mxu0 0
  %1125 = vmatprep.subr.bf16.mxu0 0
  %1126 = vmatpush1.bf16.msra.mxu0 0
  %1127 = vmatprep.subr.bf16.mxu0 0
  %1128 = vmatpush1.bf16.msra.mxu0 0
  %1129 = vmatprep.subr.bf16.mxu0 0
  %1130 = vmatpush1.bf16.msra.mxu0 0
  %1131 = vmatprep.subr.bf16.mxu0 0
  %1132 = vmatpush1.bf16.msra.mxu0 0
  %1133 = vmatprep.subr.bf16.mxu0 0
  %1134 = vmatpush1.bf16.msra.mxu0 0
  %1135 = vmatprep.subr.bf16.mxu0 0
  %1136 = vmatpush1.bf16.msra.mxu0 0
  %1137 = vmatprep.mubr.bf16.mxu0 0
  %1138 = vmatmul.mubr.bf16.gmra.mrb[0].mxu0 %v1103
  %v1139 = vpop.f32.mrb[0].mxu0
  %v1140 = vadd.f32 0.0, %v1139
  %v1141 = vpop.f32.mrb[0].mxu0
  %v1142 = vpop.f32.mrb[0].mxu0
  %v1143 = vpop.f32.mrb[0].mxu0
  %1144 = vdwg.mxu0
  %v1145 = vadd.f32 %v1091, %v1140
  %v1146 = vpack.c.bf16 %v761, %v761
  %s1147 = scalar_lea.vmem %s3, 56
  %v1148 = vld [vmem:[%s1147] sm:$0xf]
  %v1149 = vld [vmem:[%s1147 + $0x4] sm:$0xf]
  %v1152 = vunpack.c.l.b16 %v1148
  %v1153 = vunpack.c.l.b16 %v1149
  %v1154 = vpack.c.b16 %v1153, %v1152
  %v1157 = vsel %vm783, %v1146, 0
  %1159 = vmatprep.subr.bf16.mxu0 0
  %1160 = vmatpush1.bf16.msra.mxu0 %v1154
  %1161 = vmatprep.subr.bf16.mxu0 0
  %1162 = vmatpush1.bf16.msra.mxu0 0
  %1163 = vmatprep.subr.bf16.mxu0 0
  %1164 = vmatpush1.bf16.msra.mxu0 0
  %1165 = vmatprep.subr.bf16.mxu0 0
  %1166 = vmatpush1.bf16.msra.mxu0 0
  %1167 = vmatprep.subr.bf16.mxu0 0
  %1168 = vmatpush1.bf16.msra.mxu0 0
  %1169 = vmatprep.subr.bf16.mxu0 0
  %1170 = vmatpush1.bf16.msra.mxu0 0
  %1171 = vmatprep.subr.bf16.mxu0 0
  %1172 = vmatpush1.bf16.msra.mxu0 0
  %1173 = vmatprep.subr.bf16.mxu0 0
  %1174 = vmatpush1.bf16.msra.mxu0 0
  %1175 = vmatprep.subr.bf16.mxu0 0
  %1176 = vmatpush1.bf16.msra.mxu0 0
  %1177 = vmatprep.subr.bf16.mxu0 0
  %1178 = vmatpush1.bf16.msra.mxu0 0
  %1179 = vmatprep.subr.bf16.mxu0 0
  %1180 = vmatpush1.bf16.msra.mxu0 0
  %1181 = vmatprep.subr.bf16.mxu0 0
  %1182 = vmatpush1.bf16.msra.mxu0 0
  %1183 = vmatprep.subr.bf16.mxu0 0
  %1184 = vmatpush1.bf16.msra.mxu0 0
  %1185 = vmatprep.subr.bf16.mxu0 0
  %1186 = vmatpush1.bf16.msra.mxu0 0
  %1187 = vmatprep.subr.bf16.mxu0 0
  %1188 = vmatpush1.bf16.msra.mxu0 0
  %1189 = vmatprep.subr.bf16.mxu0 0
  %1190 = vmatpush1.bf16.msra.mxu0 0
  %1191 = vmatprep.mubr.bf16.mxu0 0
  %1192 = vmatmul.mubr.bf16.gmra.mrb[0].mxu0 %v1157
  %v1193 = vpop.f32.mrb[0].mxu0
  %v1194 = vadd.f32 0.0, %v1193
  %v1195 = vpop.f32.mrb[0].mxu0
  %v1196 = vpop.f32.mrb[0].mxu0
  %v1197 = vpop.f32.mrb[0].mxu0
  %1198 = vdwg.mxu0
  %v1199 = vadd.f32 %v1145, %v1194
  %v1200 = vpack.c.bf16 %v762, %v762
  %s1201 = scalar_lea.vmem %s3, 64
  %v1202 = vld [vmem:[%s1201] sm:$0xf]
  %v1203 = vld [vmem:[%s1201 + $0x4] sm:$0xf]
  %v1206 = vunpack.c.l.b16 %v1202
  %v1207 = vunpack.c.l.b16 %v1203
  %v1208 = vpack.c.b16 %v1207, %v1206
  %v1211 = vsel %vm783, %v1200, 0
  %1213 = vmatprep.subr.bf16.mxu0 0
  %1214 = vmatpush1.bf16.msra.mxu0 %v1208
  %1215 = vmatprep.subr.bf16.mxu0 0
  %1216 = vmatpush1.bf16.msra.mxu0 0
  %1217 = vmatprep.subr.bf16.mxu0 0
  %1218 = vmatpush1.bf16.msra.mxu0 0
  %1219 = vmatprep.subr.bf16.mxu0 0
  %1220 = vmatpush1.bf16.msra.mxu0 0
  %1221 = vmatprep.subr.bf16.mxu0 0
  %1222 = vmatpush1.bf16.msra.mxu0 0
  %1223 = vmatprep.subr.bf16.mxu0 0
  %1224 = vmatpush1.bf16.msra.mxu0 0
  %1225 = vmatprep.subr.bf16.mxu0 0
  %1226 = vmatpush1.bf16.msra.mxu0 0
  %1227 = vmatprep.subr.bf16.mxu0 0
  %1228 = vmatpush1.bf16.msra.mxu0 0
  %1229 = vmatprep.subr.bf16.mxu0 0
  %1230 = vmatpush1.bf16.msra.mxu0 0
  %1231 = vmatprep.subr.bf16.mxu0 0
  %1232 = vmatpush1.bf16.msra.mxu0 0
  %1233 = vmatprep.subr.bf16.mxu0 0
  %1234 = vmatpush1.bf16.msra.mxu0 0
  %1235 = vmatprep.subr.bf16.mxu0 0
  %1236 = vmatpush1.bf16.msra.mxu0 0
  %1237 = vmatprep.subr.bf16.mxu0 0
  %1238 = vmatpush1.bf16.msra.mxu0 0
  %1239 = vmatprep.subr.bf16.mxu0 0
  %1240 = vmatpush1.bf16.msra.mxu0 0
  %1241 = vmatprep.subr.bf16.mxu0 0
  %1242 = vmatpush1.bf16.msra.mxu0 0
  %1243 = vmatprep.subr.bf16.mxu0 0
  %1244 = vmatpush1.bf16.msra.mxu0 0
  %1245 = vmatprep.mubr.bf16.mxu0 0
  %1246 = vmatmul.mubr.bf16.gmra.mrb[0].mxu0 %v1211
  %v1247 = vpop.f32.mrb[0].mxu0
  %v1248 = vadd.f32 0.0, %v1247
  %v1249 = vpop.f32.mrb[0].mxu0
  %v1250 = vpop.f32.mrb[0].mxu0
  %v1251 = vpop.f32.mrb[0].mxu0
  %1252 = vdwg.mxu0
  %v1253 = vadd.f32 %v1199, %v1248
  %v1254 = vpack.c.bf16 %v763, %v763
  %s1255 = scalar_lea.vmem %s3, 72
  %v1256 = vld [vmem:[%s1255] sm:$0xf]
  %v1257 = vld [vmem:[%s1255 + $0x4] sm:$0xf]
  %v1260 = vunpack.c.l.b16 %v1256
  %v1261 = vunpack.c.l.b16 %v1257
  %v1262 = vpack.c.b16 %v1261, %v1260
  %v1265 = vsel %vm783, %v1254, 0
  %1267 = vmatprep.subr.bf16.mxu0 0
  %1268 = vmatpush1.bf16.msra.mxu0 %v1262
  %1269 = vmatprep.subr.bf16.mxu0 0
  %1270 = vmatpush1.bf16.msra.mxu0 0
  %1271 = vmatprep.subr.bf16.mxu0 0
  %1272 = vmatpush1.bf16.msra.mxu0 0
  %1273 = vmatprep.subr.bf16.mxu0 0
  %1274 = vmatpush1.bf16.msra.mxu0 0
  %1275 = vmatprep.subr.bf16.mxu0 0
  %1276 = vmatpush1.bf16.msra.mxu0 0
  %1277 = vmatprep.subr.bf16.mxu0 0
  %1278 = vmatpush1.bf16.msra.mxu0 0
  %1279 = vmatprep.subr.bf16.mxu0 0
  %1280 = vmatpush1.bf16.msra.mxu0 0
  %1281 = vmatprep.subr.bf16.mxu0 0
  %1282 = vmatpush1.bf16.msra.mxu0 0
  %1283 = vmatprep.subr.bf16.mxu0 0
  %1284 = vmatpush1.bf16.msra.mxu0 0
  %1285 = vmatprep.subr.bf16.mxu0 0
  %1286 = vmatpush1.bf16.msra.mxu0 0
  %1287 = vmatprep.subr.bf16.mxu0 0
  %1288 = vmatpush1.bf16.msra.mxu0 0
  %1289 = vmatprep.subr.bf16.mxu0 0
  %1290 = vmatpush1.bf16.msra.mxu0 0
  %1291 = vmatprep.subr.bf16.mxu0 0
  %1292 = vmatpush1.bf16.msra.mxu0 0
  %1293 = vmatprep.subr.bf16.mxu0 0
  %1294 = vmatpush1.bf16.msra.mxu0 0
  %1295 = vmatprep.subr.bf16.mxu0 0
  %1296 = vmatpush1.bf16.msra.mxu0 0
  %1297 = vmatprep.subr.bf16.mxu0 0
  %1298 = vmatpush1.bf16.msra.mxu0 0
  %1299 = vmatprep.mubr.bf16.mxu0 0
  %1300 = vmatmul.mubr.bf16.gmra.mrb[0].mxu0 %v1265
  %v1301 = vpop.f32.mrb[0].mxu0
  %v1302 = vadd.f32 0.0, %v1301
  %v1303 = vpop.f32.mrb[0].mxu0
  %v1304 = vpop.f32.mrb[0].mxu0
  %v1305 = vpop.f32.mrb[0].mxu0
  %1306 = vdwg.mxu0
  %v1307 = vadd.f32 %v1253, %v1302
  %v1308 = vpack.c.bf16 %v764, %v764
  %s1309 = scalar_lea.vmem %s3, 80
  %v1310 = vld [vmem:[%s1309] sm:$0xf]
  %v1311 = vld [vmem:[%s1309 + $0x4] sm:$0xf]
  %v1314 = vunpack.c.l.b16 %v1310
  %v1315 = vunpack.c.l.b16 %v1311
  %v1316 = vpack.c.b16 %v1315, %v1314
  %v1319 = vsel %vm783, %v1308, 0
  %1321 = vmatprep.subr.bf16.mxu0 0
  %1322 = vmatpush1.bf16.msra.mxu0 %v1316
  %1323 = vmatprep.subr.bf16.mxu0 0
  %1324 = vmatpush1.bf16.msra.mxu0 0
  %1325 = vmatprep.subr.bf16.mxu0 0
  %1326 = vmatpush1.bf16.msra.mxu0 0
  %1327 = vmatprep.subr.bf16.mxu0 0
  %1328 = vmatpush1.bf16.msra.mxu0 0
  %1329 = vmatprep.subr.bf16.mxu0 0
  %1330 = vmatpush1.bf16.msra.mxu0 0
  %1331 = vmatprep.subr.bf16.mxu0 0
  %1332 = vmatpush1.bf16.msra.mxu0 0
  %1333 = vmatprep.subr.bf16.mxu0 0
  %1334 = vmatpush1.bf16.msra.mxu0 0
  %1335 = vmatprep.subr.bf16.mxu0 0
  %1336 = vmatpush1.bf16.msra.mxu0 0
  %1337 = vmatprep.subr.bf16.mxu0 0
  %1338 = vmatpush1.bf16.msra.mxu0 0
  %1339 = vmatprep.subr.bf16.mxu0 0
  %1340 = vmatpush1.bf16.msra.mxu0 0
  %1341 = vmatprep.subr.bf16.mxu0 0
  %1342 = vmatpush1.bf16.msra.mxu0 0
  %1343 = vmatprep.subr.bf16.mxu0 0
  %1344 = vmatpush1.bf16.msra.mxu0 0
  %1345 = vmatprep.subr.bf16.mxu0 0
  %1346 = vmatpush1.bf16.msra.mxu0 0
  %1347 = vmatprep.subr.bf16.mxu0 0
  %1348 = vmatpush1.bf16.msra.mxu0 0
  %1349 = vmatprep.subr.bf16.mxu0 0
  %1350 = vmatpush1.bf16.msra.mxu0 0
  %1351 = vmatprep.subr.bf16.mxu0 0
  %1352 = vmatpush1.bf16.msra.mxu0 0
  %1353 = vmatprep.mubr.bf16.mxu0 0
  %1354 = vmatmul.mubr.bf16.gmra.mrb[0].mxu0 %v1319
  %v1355 = vpop.f32.mrb[0].mxu0
  %v1356 = vadd.f32 0.0, %v1355
  %v1357 = vpop.f32.mrb[0].mxu0
  %v1358 = vpop.f32.mrb[0].mxu0
  %v1359 = vpop.f32.mrb[0].mxu0
  %1360 = vdwg.mxu0
  %v1361 = vadd.f32 %v1307, %v1356
  %v1362 = vpack.c.bf16 %v765, %v765
  %s1363 = scalar_lea.vmem %s3, 88
  %v1364 = vld [vmem:[%s1363] sm:$0xf]
  %v1365 = vld [vmem:[%s1363 + $0x4] sm:$0xf]
  %v1368 = vunpack.c.l.b16 %v1364
  %v1369 = vunpack.c.l.b16 %v1365
  %v1370 = vpack.c.b16 %v1369, %v1368
  %v1373 = vsel %vm783, %v1362, 0
  %1375 = vmatprep.subr.bf16.mxu0 0
  %1376 = vmatpush1.bf16.msra.mxu0 %v1370
  %1377 = vmatprep.subr.bf16.mxu0 0
  %1378 = vmatpush1.bf16.msra.mxu0 0
  %1379 = vmatprep.subr.bf16.mxu0 0
  %1380 = vmatpush1.bf16.msra.mxu0 0
  %1381 = vmatprep.subr.bf16.mxu0 0
  %1382 = vmatpush1.bf16.msra.mxu0 0
  %1383 = vmatprep.subr.bf16.mxu0 0
  %1384 = vmatpush1.bf16.msra.mxu0 0
  %1385 = vmatprep.subr.bf16.mxu0 0
  %1386 = vmatpush1.bf16.msra.mxu0 0
  %1387 = vmatprep.subr.bf16.mxu0 0
  %1388 = vmatpush1.bf16.msra.mxu0 0
  %1389 = vmatprep.subr.bf16.mxu0 0
  %1390 = vmatpush1.bf16.msra.mxu0 0
  %1391 = vmatprep.subr.bf16.mxu0 0
  %1392 = vmatpush1.bf16.msra.mxu0 0
  %1393 = vmatprep.subr.bf16.mxu0 0
  %1394 = vmatpush1.bf16.msra.mxu0 0
  %1395 = vmatprep.subr.bf16.mxu0 0
  %1396 = vmatpush1.bf16.msra.mxu0 0
  %1397 = vmatprep.subr.bf16.mxu0 0
  %1398 = vmatpush1.bf16.msra.mxu0 0
  %1399 = vmatprep.subr.bf16.mxu0 0
  %1400 = vmatpush1.bf16.msra.mxu0 0
  %1401 = vmatprep.subr.bf16.mxu0 0
  %1402 = vmatpush1.bf16.msra.mxu0 0
  %1403 = vmatprep.subr.bf16.mxu0 0
  %1404 = vmatpush1.bf16.msra.mxu0 0
  %1405 = vmatprep.subr.bf16.mxu0 0
  %1406 = vmatpush1.bf16.msra.mxu0 0
  %1407 = vmatprep.mubr.bf16.mxu0 0
  %1408 = vmatmul.mubr.bf16.gmra.mrb[0].mxu0 %v1373
  %v1409 = vpop.f32.mrb[0].mxu0
  %v1410 = vadd.f32 0.0, %v1409
  %v1411 = vpop.f32.mrb[0].mxu0
  %v1412 = vpop.f32.mrb[0].mxu0
  %v1413 = vpop.f32.mrb[0].mxu0
  %1414 = vdwg.mxu0
  %v1415 = vadd.f32 %v1361, %v1410
  %v1416 = vpack.c.bf16 %v766, %v766
  %s1417 = scalar_lea.vmem %s3, 96
  %v1418 = vld [vmem:[%s1417] sm:$0xf]
  %v1419 = vld [vmem:[%s1417 + $0x4] sm:$0xf]
  %v1422 = vunpack.c.l.b16 %v1418
  %v1423 = vunpack.c.l.b16 %v1419
  %v1424 = vpack.c.b16 %v1423, %v1422
  %v1427 = vsel %vm783, %v1416, 0
  %1429 = vmatprep.subr.bf16.mxu0 0
  %1430 = vmatpush1.bf16.msra.mxu0 %v1424
  %1431 = vmatprep.subr.bf16.mxu0 0
  %1432 = vmatpush1.bf16.msra.mxu0 0
  %1433 = vmatprep.subr.bf16.mxu0 0
  %1434 = vmatpush1.bf16.msra.mxu0 0
  %1435 = vmatprep.subr.bf16.mxu0 0
  %1436 = vmatpush1.bf16.msra.mxu0 0
  %1437 = vmatprep.subr.bf16.mxu0 0
  %1438 = vmatpush1.bf16.msra.mxu0 0
  %1439 = vmatprep.subr.bf16.mxu0 0
  %1440 = vmatpush1.bf16.msra.mxu0 0
  %1441 = vmatprep.subr.bf16.mxu0 0
  %1442 = vmatpush1.bf16.msra.mxu0 0
  %1443 = vmatprep.subr.bf16.mxu0 0
  %1444 = vmatpush1.bf16.msra.mxu0 0
  %1445 = vmatprep.subr.bf16.mxu0 0
  %1446 = vmatpush1.bf16.msra.mxu0 0
  %1447 = vmatprep.subr.bf16.mxu0 0
  %1448 = vmatpush1.bf16.msra.mxu0 0
  %1449 = vmatprep.subr.bf16.mxu0 0
  %1450 = vmatpush1.bf16.msra.mxu0 0
  %1451 = vmatprep.subr.bf16.mxu0 0
  %1452 = vmatpush1.bf16.msra.mxu0 0
  %1453 = vmatprep.subr.bf16.mxu0 0
  %1454 = vmatpush1.bf16.msra.mxu0 0
  %1455 = vmatprep.subr.bf16.mxu0 0
  %1456 = vmatpush1.bf16.msra.mxu0 0
  %1457 = vmatprep.subr.bf16.mxu0 0
  %1458 = vmatpush1.bf16.msra.mxu0 0
  %1459 = vmatprep.subr.bf16.mxu0 0
  %1460 = vmatpush1.bf16.msra.mxu0 0
  %1461 = vmatprep.mubr.bf16.mxu0 0
  %1462 = vmatmul.mubr.bf16.gmra.mrb[0].mxu0 %v1427
  %v1463 = vpop.f32.mrb[0].mxu0
  %v1464 = vadd.f32 0.0, %v1463
  %v1465 = vpop.f32.mrb[0].mxu0
  %v1466 = vpop.f32.mrb[0].mxu0
  %v1467 = vpop.f32.mrb[0].mxu0
  %1468 = vdwg.mxu0
  %v1469 = vadd.f32 %v1415, %v1464
  %v1470 = vpack.c.bf16 %v767, %v767
  %s1471 = scalar_lea.vmem %s3, 104
  %v1472 = vld [vmem:[%s1471] sm:$0xf]
  %v1473 = vld [vmem:[%s1471 + $0x4] sm:$0xf]
  %v1476 = vunpack.c.l.b16 %v1472
  %v1477 = vunpack.c.l.b16 %v1473
  %v1478 = vpack.c.b16 %v1477, %v1476
  %v1481 = vsel %vm783, %v1470, 0
  %1483 = vmatprep.subr.bf16.mxu0 0
  %1484 = vmatpush1.bf16.msra.mxu0 %v1478
  %1485 = vmatprep.subr.bf16.mxu0 0
  %1486 = vmatpush1.bf16.msra.mxu0 0
  %1487 = vmatprep.subr.bf16.mxu0 0
  %1488 = vmatpush1.bf16.msra.mxu0 0
  %1489 = vmatprep.subr.bf16.mxu0 0
  %1490 = vmatpush1.bf16.msra.mxu0 0
  %1491 = vmatprep.subr.bf16.mxu0 0
  %1492 = vmatpush1.bf16.msra.mxu0 0
  %1493 = vmatprep.subr.bf16.mxu0 0
  %1494 = vmatpush1.bf16.msra.mxu0 0
  %1495 = vmatprep.subr.bf16.mxu0 0
  %1496 = vmatpush1.bf16.msra.mxu0 0
  %1497 = vmatprep.subr.bf16.mxu0 0
  %1498 = vmatpush1.bf16.msra.mxu0 0
  %1499 = vmatprep.subr.bf16.mxu0 0
  %1500 = vmatpush1.bf16.msra.mxu0 0
  %1501 = vmatprep.subr.bf16.mxu0 0
  %1502 = vmatpush1.bf16.msra.mxu0 0
  %1503 = vmatprep.subr.bf16.mxu0 0
  %1504 = vmatpush1.bf16.msra.mxu0 0
  %1505 = vmatprep.subr.bf16.mxu0 0
  %1506 = vmatpush1.bf16.msra.mxu0 0
  %1507 = vmatprep.subr.bf16.mxu0 0
  %1508 = vmatpush1.bf16.msra.mxu0 0
  %1509 = vmatprep.subr.bf16.mxu0 0
  %1510 = vmatpush1.bf16.msra.mxu0 0
  %1511 = vmatprep.subr.bf16.mxu0 0
  %1512 = vmatpush1.bf16.msra.mxu0 0
  %1513 = vmatprep.subr.bf16.mxu0 0
  %1514 = vmatpush1.bf16.msra.mxu0 0
  %1515 = vmatprep.mubr.bf16.mxu0 0
  %1516 = vmatmul.mubr.bf16.gmra.mrb[0].mxu0 %v1481
  %v1517 = vpop.f32.mrb[0].mxu0
  %v1518 = vadd.f32 0.0, %v1517
  %v1519 = vpop.f32.mrb[0].mxu0
  %v1520 = vpop.f32.mrb[0].mxu0
  %v1521 = vpop.f32.mrb[0].mxu0
  %1522 = vdwg.mxu0
  %v1523 = vadd.f32 %v1469, %v1518
  %v1524 = vpack.c.bf16 %v768, %v768
  %s1525 = scalar_lea.vmem %s3, 112
  %v1526 = vld [vmem:[%s1525] sm:$0xf]
  %v1527 = vld [vmem:[%s1525 + $0x4] sm:$0xf]
  %v1530 = vunpack.c.l.b16 %v1526
  %v1531 = vunpack.c.l.b16 %v1527
  %v1532 = vpack.c.b16 %v1531, %v1530
  %v1535 = vsel %vm783, %v1524, 0
  %1537 = vmatprep.subr.bf16.mxu0 0
  %1538 = vmatpush1.bf16.msra.mxu0 %v1532
  %1539 = vmatprep.subr.bf16.mxu0 0
  %1540 = vmatpush1.bf16.msra.mxu0 0
  %1541 = vmatprep.subr.bf16.mxu0 0
  %1542 = vmatpush1.bf16.msra.mxu0 0
  %1543 = vmatprep.subr.bf16.mxu0 0
  %1544 = vmatpush1.bf16.msra.mxu0 0
  %1545 = vmatprep.subr.bf16.mxu0 0
  %1546 = vmatpush1.bf16.msra.mxu0 0
  %1547 = vmatprep.subr.bf16.mxu0 0
  %1548 = vmatpush1.bf16.msra.mxu0 0
  %1549 = vmatprep.subr.bf16.mxu0 0
  %1550 = vmatpush1.bf16.msra.mxu0 0
  %1551 = vmatprep.subr.bf16.mxu0 0
  %1552 = vmatpush1.bf16.msra.mxu0 0
  %1553 = vmatprep.subr.bf16.mxu0 0
  %1554 = vmatpush1.bf16.msra.mxu0 0
  %1555 = vmatprep.subr.bf16.mxu0 0
  %1556 = vmatpush1.bf16.msra.mxu0 0
  %1557 = vmatprep.subr.bf16.mxu0 0
  %1558 = vmatpush1.bf16.msra.mxu0 0
  %1559 = vmatprep.subr.bf16.mxu0 0
  %1560 = vmatpush1.bf16.msra.mxu0 0
  %1561 = vmatprep.subr.bf16.mxu0 0
  %1562 = vmatpush1.bf16.msra.mxu0 0
  %1563 = vmatprep.subr.bf16.mxu0 0
  %1564 = vmatpush1.bf16.msra.mxu0 0
  %1565 = vmatprep.subr.bf16.mxu0 0
  %1566 = vmatpush1.bf16.msra.mxu0 0
  %1567 = vmatprep.subr.bf16.mxu0 0
  %1568 = vmatpush1.bf16.msra.mxu0 0
  %1569 = vmatprep.mubr.bf16.mxu0 0
  %1570 = vmatmul.mubr.bf16.gmra.mrb[0].mxu0 %v1535
  %v1571 = vpop.f32.mrb[0].mxu0
  %v1572 = vadd.f32 0.0, %v1571
  %v1573 = vpop.f32.mrb[0].mxu0
  %v1574 = vpop.f32.mrb[0].mxu0
  %v1575 = vpop.f32.mrb[0].mxu0
  %1576 = vdwg.mxu0
  %v1577 = vadd.f32 %v1523, %v1572
  %v1578 = vpack.c.bf16 %v769, %v769
  %s1579 = scalar_lea.vmem %s3, 120
  %v1580 = vld [vmem:[%s1579] sm:$0xf]
  %v1581 = vld [vmem:[%s1579 + $0x4] sm:$0xf]
  %v1584 = vunpack.c.l.b16 %v1580
  %v1585 = vunpack.c.l.b16 %v1581
  %v1586 = vpack.c.b16 %v1585, %v1584
  %v1589 = vsel %vm783, %v1578, 0
  %1591 = vmatprep.subr.bf16.mxu0 0
  %1592 = vmatpush1.bf16.msra.mxu0 %v1586
  %1593 = vmatprep.subr.bf16.mxu0 0
  %1594 = vmatpush1.bf16.msra.mxu0 0
  %1595 = vmatprep.subr.bf16.mxu0 0
  %1596 = vmatpush1.bf16.msra.mxu0 0
  %1597 = vmatprep.subr.bf16.mxu0 0
  %1598 = vmatpush1.bf16.msra.mxu0 0
  %1599 = vmatprep.subr.bf16.mxu0 0
  %1600 = vmatpush1.bf16.msra.mxu0 0
  %1601 = vmatprep.subr.bf16.mxu0 0
  %1602 = vmatpush1.bf16.msra.mxu0 0
  %1603 = vmatprep.subr.bf16.mxu0 0
  %1604 = vmatpush1.bf16.msra.mxu0 0
  %1605 = vmatprep.subr.bf16.mxu0 0
  %1606 = vmatpush1.bf16.msra.mxu0 0
  %1607 = vmatprep.subr.bf16.mxu0 0
  %1608 = vmatpush1.bf16.msra.mxu0 0
  %1609 = vmatprep.subr.bf16.mxu0 0
  %1610 = vmatpush1.bf16.msra.mxu0 0
  %1611 = vmatprep.subr.bf16.mxu0 0
  %1612 = vmatpush1.bf16.msra.mxu0 0
  %1613 = vmatprep.subr.bf16.mxu0 0
  %1614 = vmatpush1.bf16.msra.mxu0 0
  %1615 = vmatprep.subr.bf16.mxu0 0
  %1616 = vmatpush1.bf16.msra.mxu0 0
  %1617 = vmatprep.subr.bf16.mxu0 0
  %1618 = vmatpush1.bf16.msra.mxu0 0
  %1619 = vmatprep.subr.bf16.mxu0 0
  %1620 = vmatpush1.bf16.msra.mxu0 0
  %1621 = vmatprep.subr.bf16.mxu0 0
  %1622 = vmatpush1.bf16.msra.mxu0 0
  %1623 = vmatprep.mubr.bf16.mxu0 0
  %1624 = vmatmul.mubr.bf16.gmra.mrb[0].mxu0 %v1589
  %v1625 = vpop.f32.mrb[0].mxu0
  %v1626 = vadd.f32 0.0, %v1625
  %v1627 = vpop.f32.mrb[0].mxu0
  %v1628 = vpop.f32.mrb[0].mxu0
  %v1629 = vpop.f32.mrb[0].mxu0
  %1630 = vdwg.mxu0
  %v1631 = vadd.f32 %v1577, %v1626
  %v1632 = vld [vmem:[%s4] sm:$0x1]
  %v1634 = vlaneseq
  %v1635 = vshrl.u32 %v1634, 7
  %v1636 = vsub.s32 0, %v1635
  %v1637 = vrot.slane %v1632, %v1636
  %v1639 = vadd.f32 %v1631, %v1637
  %v1640 = vmax.f32 %v1639, 0.0
  %v1641 = vpack.c.bf16 %v1640, %v1640
  %v1642 = vld [vmem:[%s5] sm:$0xf]
  %v1643 = vld [vmem:[%s5 + $0x4] sm:$0xf]
  %v1644 = vld [vmem:[%s5 + $0x8] sm:$0xf]
  %v1645 = vld [vmem:[%s5 + $0xc] sm:$0xf]
  %v1646 = vld [vmem:[%s5 + $0x10] sm:$0xf]
  %v1647 = vld [vmem:[%s5 + $0x14] sm:$0xf]
  %v1648 = vld [vmem:[%s5 + $0x18] sm:$0xf]
  %v1649 = vld [vmem:[%s5 + $0x1c] sm:$0xf]
  %v1650 = vld [vmem:[%s6] sm:$0x1]
  %v1652 = vlaneseq
  %v1653 = vshrl.u32 %v1652, 7
  %v1654 = vsub.s32 0, %v1653
  %v1655 = vrot.slane %v1650, %v1654
  %v1665 = vunpack.c.l.b16 %v1642
  %v1666 = vunpack.c.l.b16 %v1643
  %v1667 = vunpack.c.l.b16 %v1644
  %v1668 = vunpack.c.l.b16 %v1645
  %v1669 = vunpack.c.l.b16 %v1646
  %v1670 = vunpack.c.l.b16 %v1647
  %v1671 = vunpack.c.l.b16 %v1648
  %v1672 = vunpack.c.l.b16 %v1649
  %v1673 = vpack.c.b16 %v1666, %v1665
  %v1674 = vpack.c.b16 %v1668, %v1667
  %v1675 = vpack.c.b16 %v1670, %v1669
  %v1676 = vpack.c.b16 %v1672, %v1671
  %vm1681 = vcmask 523264
  %v1683 = vsel %vm1681, %v1641, 0
  %1685 = vmatprep.subr.bf16.mxu0 0
  %1686 = vmatpush1.bf16.msra.mxu0 %v1673
  %1687 = vmatprep.subr.bf16.mxu0 0
  %1688 = vmatpush1.bf16.msra.mxu0 %v1674
  %1689 = vmatprep.subr.bf16.mxu0 0
  %1690 = vmatpush1.bf16.msra.mxu0 %v1675
  %1691 = vmatprep.subr.bf16.mxu0 0
  %1692 = vmatpush1.bf16.msra.mxu0 %v1676
  %1693 = vmatprep.subr.bf16.mxu0 0
  %1694 = vmatpush1.bf16.msra.mxu0 0
  %1695 = vmatprep.subr.bf16.mxu0 0
  %1696 = vmatpush1.bf16.msra.mxu0 0
  %1697 = vmatprep.subr.bf16.mxu0 0
  %1698 = vmatpush1.bf16.msra.mxu0 0
  %1699 = vmatprep.subr.bf16.mxu0 0
  %1700 = vmatpush1.bf16.msra.mxu0 0
  %1701 = vmatprep.subr.bf16.mxu0 0
  %1702 = vmatpush1.bf16.msra.mxu0 0
  %1703 = vmatprep.subr.bf16.mxu0 0
  %1704 = vmatpush1.bf16.msra.mxu0 0
  %1705 = vmatprep.subr.bf16.mxu0 0
  %1706 = vmatpush1.bf16.msra.mxu0 0
  %1707 = vmatprep.subr.bf16.mxu0 0
  %1708 = vmatpush1.bf16.msra.mxu0 0
  %1709 = vmatprep.subr.bf16.mxu0 0
  %1710 = vmatpush1.bf16.msra.mxu0 0
  %1711 = vmatprep.subr.bf16.mxu0 0
  %1712 = vmatpush1.bf16.msra.mxu0 0
  %1713 = vmatprep.subr.bf16.mxu0 0
  %1714 = vmatpush1.bf16.msra.mxu0 0
  %1715 = vmatprep.subr.bf16.mxu0 0
  %1716 = vmatpush1.bf16.msra.mxu0 0
  %1717 = vmatprep.mubr.bf16.mxu0 0
  %1718 = vmatmul.mubr.bf16.gmra.mrb[0].mxu0 %v1683
  %v1719 = vpop.f32.mrb[0].mxu0
  %v1720 = vadd.f32 %v1655, %v1719
  %v1721 = vpop.f32.mrb[0].mxu0
  %v1722 = vpop.f32.mrb[0].mxu0
  %v1723 = vpop.f32.mrb[0].mxu0
  %1724 = vdwg.mxu0
  %v1725 = vmax.f32 %v1720, 0.0
  %v1726 = vmul.f32 %v1725, %v1725
  %v1727 = vsel %vm1681, %v1726, 0.0
  %1728 = vadd.xlane.f32.xlu0 %v1727
  %v1729 = vpop.xlane.xlu0 %1728
  %v1730 = vadd.f32 %v1729, 1e-12
  %v1731 = vrsqrt.pop %v1730
  %v1732 = vmul.f32 %v1725, %v1731
  %v1733 = vpack.c.bf16 %v1732, %v1732
  %v1734 = vld [vmem:[%s7] sm:$0xf]
  %v1735 = vld [vmem:[%s7 + $0x4] sm:$0xf]
  %v1736 = vld [vmem:[%s7 + $0x8] sm:$0xf]
  %v1737 = vld [vmem:[%s7 + $0xc] sm:$0xf]
  %v1738 = vld [vmem:[%s7 + $0x10] sm:$0xf]
  %v1739 = vld [vmem:[%s7 + $0x14] sm:$0xf]
  %v1740 = vld [vmem:[%s7 + $0x18] sm:$0xf]
  %v1741 = vld [vmem:[%s7 + $0x1c] sm:$0xf]
  %v1742 = vld [vmem:[%s8] sm:$0x1]
  %v1744 = vlaneseq
  %v1745 = vshrl.u32 %v1744, 7
  %v1746 = vsub.s32 0, %v1745
  %v1747 = vrot.slane %v1742, %v1746
  %v1757 = vunpack.c.l.b16 %v1734
  %v1758 = vunpack.c.l.b16 %v1735
  %v1759 = vunpack.c.l.b16 %v1736
  %v1760 = vunpack.c.l.b16 %v1737
  %v1761 = vunpack.c.l.b16 %v1738
  %v1762 = vunpack.c.l.b16 %v1739
  %v1763 = vunpack.c.l.b16 %v1740
  %v1764 = vunpack.c.l.b16 %v1741
  %v1765 = vpack.c.b16 %v1758, %v1757
  %v1766 = vpack.c.b16 %v1760, %v1759
  %v1767 = vpack.c.b16 %v1762, %v1761
  %v1768 = vpack.c.b16 %v1764, %v1763
  %v1774 = vsel %vm1681, %v1733, 0
  %1776 = vmatprep.subr.bf16.mxu0 0
  %1777 = vmatpush1.bf16.msra.mxu0 %v1765
  %1778 = vmatprep.subr.bf16.mxu0 0
  %1779 = vmatpush1.bf16.msra.mxu0 %v1766
  %1780 = vmatprep.subr.bf16.mxu0 0
  %1781 = vmatpush1.bf16.msra.mxu0 %v1767
  %1782 = vmatprep.subr.bf16.mxu0 0
  %1783 = vmatpush1.bf16.msra.mxu0 %v1768
  %1784 = vmatprep.subr.bf16.mxu0 0
  %1785 = vmatpush1.bf16.msra.mxu0 0
  %1786 = vmatprep.subr.bf16.mxu0 0
  %1787 = vmatpush1.bf16.msra.mxu0 0
  %1788 = vmatprep.subr.bf16.mxu0 0
  %1789 = vmatpush1.bf16.msra.mxu0 0
  %1790 = vmatprep.subr.bf16.mxu0 0
  %1791 = vmatpush1.bf16.msra.mxu0 0
  %1792 = vmatprep.subr.bf16.mxu0 0
  %1793 = vmatpush1.bf16.msra.mxu0 0
  %1794 = vmatprep.subr.bf16.mxu0 0
  %1795 = vmatpush1.bf16.msra.mxu0 0
  %1796 = vmatprep.subr.bf16.mxu0 0
  %1797 = vmatpush1.bf16.msra.mxu0 0
  %1798 = vmatprep.subr.bf16.mxu0 0
  %1799 = vmatpush1.bf16.msra.mxu0 0
  %1800 = vmatprep.subr.bf16.mxu0 0
  %1801 = vmatpush1.bf16.msra.mxu0 0
  %1802 = vmatprep.subr.bf16.mxu0 0
  %1803 = vmatpush1.bf16.msra.mxu0 0
  %1804 = vmatprep.subr.bf16.mxu0 0
  %1805 = vmatpush1.bf16.msra.mxu0 0
  %1806 = vmatprep.subr.bf16.mxu0 0
  %1807 = vmatpush1.bf16.msra.mxu0 0
  %1808 = vmatprep.mubr.bf16.mxu0 0
  %1809 = vmatmul.mubr.bf16.gmra.mrb[0].mxu0 %v1774
  %v1810 = vpop.f32.mrb[0].mxu0
  %v1811 = vadd.f32 %v1747, %v1810
  %v1812 = vpop.f32.mrb[0].mxu0
  %v1813 = vpop.f32.mrb[0].mxu0
  %v1814 = vpop.f32.mrb[0].mxu0
  %1815 = vdwg.mxu0
  %v1816 = vmul.f32 %v1811, %v1811
  %1817 = vadd.xlane.f32.xlu0 %v1816
  %v1818 = vpop.xlane.xlu0 %1817
  %v1819 = vadd.f32 %v1818, 1e-12
  %v1820 = vrsqrt.pop %v1819
  %v1821 = vmul.f32 %v1811, %v1820
  %1822 = vst [vmem:[%s9] sm:$0xff] %v1821
  // Predicated region
  $region38: #{encoder_image_full_forward.3} parent=0 // pred_check
    _
  $region39: #{encoder_image_full_forward.3} parent=0 // pred_check_branch
    %1824 = sbr.rel (0) target = $region41
  $region40: #{encoder_image_full_forward.3} parent=0 // pred_region
    _
  $region41: #{encoder_image_full_forward.3} parent=0 // pred_fallthru
    _
  // Predicated region
  $region42: #{encoder_image_full_forward.3} parent=0 // pred_check
    _
  $region43: #{encoder_image_full_forward.3} parent=0 // pred_check_branch
    %1826 = sbr.rel (0) target = $region45
  $region44: #{encoder_image_full_forward.3} parent=0 // pred_region
    _
  $region45: #{encoder_image_full_forward.3} parent=0 // pred_fallthru
    _

</llo_original>
